<compile_context>
chip_gen: v6e
topology: v6e:2x2x1
jax: 0.10.0
libtpu: 0.0.40
codegen_flags: <defaults>
</compile_context>

<pallas_src>
import functools

import jax
import jax.numpy as jnp
from jax import lax
from jax.experimental import pallas as pl
from jax.experimental.pallas import tpu as pltpu


# ----------------------------------------------------------------------------- kernel
def _splat_kernel(radix, channels, H, W, KH, KW, Bb, cdt,
                  x_ref, mask_l_ref, mask_r_ref, wconv_ref, bconv_ref,
                  w1_ref, b1_ref, w2_ref, b2_ref, o_ref):
    HW = H * W
    C = channels
    Cr = C * radix

    mask_l = mask_l_ref[...]                                   # (1, HW), compute dtype
    mask_r = mask_r_ref[...]

    for b in range(Bb):
        xb = x_ref[b, :, :]                                    # (Cin, Lpad), compute dtype

        # -- 1) the 9 shifted/masked tap slabs (lane shifts + tiny VPU masks) ---------
        slabs = []
        for kh in range(KH):
            for kw in range(KW):
                s = kh * W + kw                                # shift in the flat layout
                xs = xb[:, s:s + HW]                           # (Cin, HW)
                if kw == 0:                                    # tap reaches w-1: mask w==0
                    xs = xs * mask_l
                elif kw == KW - 1:                             # tap reaches w+1: mask w==W-1
                    xs = xs * mask_r
                slabs.append(xs)

        # -- 2) grouped 3x3 conv: uninterrupted MXU acc-chain, f32 accumulation -------
        acc = jnp.dot(wconv_ref[0], slabs[0], preferred_element_type=jnp.float32)
        for t in range(1, KH * KW):
            acc = acc + jnp.dot(wconv_ref[t], slabs[t],
                                preferred_element_type=jnp.float32)
        y = jnp.maximum(acc + bconv_ref[...], 0.0)             # + folded BN bias + ReLU
        # y: (Cr, HW) f32, lane-dense

        # -- 3) radix-summed global average pool -> (C, 1) ----------------------------
        yred = jnp.mean(y, axis=1, keepdims=True)              # (Cr, 1), XLU lane reduce
        g = yred[0:C]
        for r in range(1, radix):
            g = g + yred[r * C:(r + 1) * C]

        # -- 4) fc1 (+ folded bn1) -> relu -> fc2 (channels stay in sublanes) ---------
        h = jnp.dot(w1_ref[...], g.astype(cdt), preferred_element_type=jnp.float32)
        h = jnp.maximum(h + b1_ref[...], 0.0)                  # (inter, 1)
        logits = jnp.dot(w2_ref[...], h.astype(cdt),
                         preferred_element_type=jnp.float32) + b2_ref[...]   # (Cr, 1)
        # w2/b2 rows were permuted so logits come out radix-major -> rSoftMax works on
        # contiguous C-row blocks that line up with y's channel order.

        # -- 5) rSoftMax over radix (matches reference even for radix == 1) -----------
        lg = [logits[r * C:(r + 1) * C] for r in range(radix)]
        m = lg[0]
        for r in range(1, radix):
            m = jnp.maximum(m, lg[r])
        e = [jnp.exp(v - m) for v in lg]
        den = e[0]
        for r in range(1, radix):
            den = den + e[r]
        inv = pl.reciprocal(den, approx=True)                  # EUP slot, ~free

        # -- 6) attention-weighted combine -> one dense lane-major store --------------
        out = (e[0] * inv) * y[0:C, :]
        for r in range(1, radix):
            out = out + (e[r] * inv) * y[r * C:(r + 1) * C, :]
        o_ref[b, :, :] = out.astype(o_ref.dtype)               # (C, HW), lane-dense vst


# ----------------------------------------------------------------------------- wrapper
def splat_conv2d(x_nchw, p, *, radix, cardinality, channels, kernel_size=3,
                 block_b=2, compute_dtype=jnp.bfloat16):
    """SplAtConv2d forward (eval-mode BN folded).  x_nchw: (B, Cin, H, W) -> (B, C, H, W)."""
    B, Cin, H, W = x_nchw.shape
    assert kernel_size == 3, "only the module's default 3x3 / stride 1 / pad 1 config"
    KH = KW = kernel_size
    padH = padW = kernel_size // 2
    HW = H * W
    C = channels
    Cr = C * radix
    Cp = C // cardinality
    Bb = min(block_b, B)
    assert B % Bb == 0
    cdt = compute_dtype

    # ---- fold eval-mode BN into conv / fc1; transpose weights to the channels-in-
    # ---- sublanes layout; permute fc2 rows to radix-major order -------------------
    w = p['w_hwio'] * p['bn_s'].reshape(1, 1, 1, Cr)                      # (KH,KW,Cin,Cr)
    wconv = jnp.transpose(w.reshape(KH * KW, Cin, Cr), (0, 2, 1)).astype(cdt)   # (9,Cr,Cin)
    bconv = (p['b_conv'] * p['bn_s'] + p['bn_b']).reshape(Cr, 1)          # (Cr,1) f32
    w1T = (p['w1'] * p['bn1_s']).T.astype(cdt)                            # (inter, C)
    b1T = (p['b1'] * p['bn1_s'] + p['bn1_b']).reshape(-1, 1)              # (inter, 1) f32
    perm = jnp.arange(Cr).reshape(cardinality, radix, Cp).transpose(1, 0, 2).reshape(-1)
    w2T = p['w2'][:, perm].T.astype(cdt)                                  # (Cr, inter)
    b2T = p['b2'][:, perm].reshape(Cr, 1)                                 # (Cr, 1) f32

    # ---- NCHW stays NCHW: flatten spatial (free) and zero-pad the flat axis only
    # ---- (top pad row + 1-element left halo + tail up to a lane multiple) ----------
    lead = padH * W + padW
    Lpad = -(-(HW + 2 * padH * W + 2 * padW) // 128) * 128
    x = x_nchw.reshape(B, Cin, HW)
    x = jnp.pad(x, ((0, 0), (0, 0), (lead, Lpad - lead - HW))).astype(cdt)

    # ---- lane masks zeroing the horizontal taps that would wrap across rows --------
    col = jnp.arange(HW, dtype=jnp.int32) % W
    mask_l = (col >= padW).astype(cdt).reshape(1, HW)
    mask_r = (col <= W - 1 - padW).astype(cdt).reshape(1, HW)

    const_inputs = (mask_l, mask_r, wconv, bconv, w1T, b1T, w2T, b2T)

    # ---- per-generation VMEM budget from the actual buffers (no fixed 32 MiB) ------
    try:
        vmem_cap = int(pltpu.get_tpu_info().vmem_capacity_bytes)
    except Exception:
        vmem_cap = 64 * 1024 * 1024
    x_blk = Bb * Cin * Lpad * jnp.dtype(cdt).itemsize
    o_blk = Bb * C * HW * 4
    cbytes = sum(int(a.size) * a.dtype.itemsize for a in const_inputs)
    vmem_limit = 2 * x_blk + 2 * o_blk + 2 * cbytes + (8 << 20)
    vmem_limit = int(min(max(vmem_limit, 16 << 20), int(0.9 * vmem_cap)))

    kernel = functools.partial(_splat_kernel, radix, channels, H, W, KH, KW, Bb, cdt)

    def _call(single_buffer_consts):
        def const_spec(a):
            nd = a.ndim
            idx = lambda i, _nd=nd: (0,) * _nd
            if single_buffer_consts:     # grid-invariant: no double-buffering needed
                return pl.BlockSpec(a.shape, idx, pipeline_mode=pl.Buffered(1))
            return pl.BlockSpec(a.shape, idx)

        return pl.pallas_call(
            kernel,
            out_shape=jax.ShapeDtypeStruct((B, C, HW), jnp.float32),
            grid=(B // Bb,),
            in_specs=[pl.BlockSpec((Bb, Cin, Lpad), lambda i: (i, 0, 0))]
                     + [const_spec(a) for a in const_inputs],
            out_specs=pl.BlockSpec((Bb, C, HW), lambda i: (i, 0, 0)),
            compiler_params=pltpu.CompilerParams(
                dimension_semantics=("parallel",),
                vmem_limit_bytes=vmem_limit,
            ),
        )(x, *const_inputs)

    try:
        out = _call(True)
    except Exception:
        # pipeline_mode=pl.Buffered(1) rejected by this jax build; use default buffering.
        out = _call(False)

    return out.reshape(B, C, H, W)                              # reshape only, no transpose


# ----------------------------------------------------------------------------- params
def _block_diag_dense(key, cin, cout, groups, scale=0.1):
    """Dense (cin, cout) matrix equivalent to a grouped 1x1 conv."""
    cin_g, cout_g = cin // groups, cout // groups
    wg = scale * jax.random.normal(key, (groups, cin_g, cout_g), jnp.float32)
    w = jnp.zeros((cin, cout), jnp.float32)
    for g in range(groups):
        w = w.at[g * cin_g:(g + 1) * cin_g, g * cout_g:(g + 1) * cout_g].set(wg[g])
    return w


def init_params(key, in_channels, channels, radix, cardinality,
                reduction_factor=4, kernel_size=3):
    inter = max(in_channels * radix // reduction_factor, 32)
    Cr = channels * radix
    g_conv = cardinality * radix
    KH = KW = kernel_size
    ks = jax.random.split(key, 10)

    # grouped KxK conv -> dense block-diagonal HWIO weight
    cin_g, cout_g = in_channels // g_conv, Cr // g_conv
    wg = 0.1 * jax.random.normal(ks[0], (g_conv, KH, KW, cin_g, cout_g), jnp.float32)
    w_hwio = jnp.zeros((KH, KW, in_channels, Cr), jnp.float32)
    for g in range(g_conv):
        w_hwio = w_hwio.at[:, :, g * cin_g:(g + 1) * cin_g,
                           g * cout_g:(g + 1) * cout_g].set(wg[g])

    eps = 1e-5
    gamma = 1.0 + 0.1 * jax.random.normal(ks[1], (Cr,), jnp.float32)
    beta = 0.1 * jax.random.normal(ks[2], (Cr,), jnp.float32)
    gamma1 = 1.0 + 0.1 * jax.random.normal(ks[3], (inter,), jnp.float32)
    beta1 = 0.1 * jax.random.normal(ks[4], (inter,), jnp.float32)

    return {
        'w_hwio': w_hwio,
        'b_conv': 0.1 * jax.random.normal(ks[5], (1, Cr), jnp.float32),
        'bn_s': (gamma / jnp.sqrt(1.0 + eps)).reshape(1, Cr),      # running_var = 1
        'bn_b': beta.reshape(1, Cr),                               # running_mean = 0
        'w1': _block_diag_dense(ks[6], channels, inter, cardinality),
        'b1': 0.1 * jax.random.normal(ks[7], (1, inter), jnp.float32),
        'bn1_s': (gamma1 / jnp.sqrt(1.0 + eps)).reshape(1, inter),
        'bn1_b': beta1.reshape(1, inter),
        'w2': _block_diag_dense(ks[8], inter, Cr, cardinality),
        'b2': 0.1 * jax.random.normal(ks[9], (1, Cr), jnp.float32),
    }


# ----------------------------------------------------------------------------- reference
def reference(x_nchw, p, *, radix, cardinality, channels):
    y = lax.conv_general_dilated(x_nchw, p['w_hwio'], (1, 1), ((1, 1), (1, 1)),
                                 dimension_numbers=('NCHW', 'HWIO', 'NCHW'))
    y = y + p['b_conv'].reshape(1, -1, 1, 1)
    y = y * p['bn_s'].reshape(1, -1, 1, 1) + p['bn_b'].reshape(1, -1, 1, 1)
    y = jnp.maximum(y, 0.0)
    B = x_nchw.shape[0]
    C = channels
    splits = [y[:, r * C:(r + 1) * C] for r in range(radix)]
    gap = sum(splits)
    gap = jnp.mean(gap, axis=(2, 3))                               # (B, C)
    h = gap @ p['w1'] + p['b1']
    h = jnp.maximum(h * p['bn1_s'] + p['bn1_b'], 0.0)
    logits = h @ p['w2'] + p['b2']                                 # (B, C*radix)
    a = logits.reshape(B, cardinality, radix, -1).transpose(0, 2, 1, 3)
    a = jax.nn.softmax(a, axis=1).reshape(B, -1)
    attens = [a[:, r * C:(r + 1) * C] for r in range(radix)]
    return sum(att[:, :, None, None] * sp for att, sp in zip(attens, splits))


# ----------------------------------------------------------------------------- main
if __name__ == "__main__":
    B, Cin, H, W = 4, 4, 16, 16
    channels, radix, cardinality = 4, 2, 2

    key = jax.random.PRNGKey(0)
    kx, kp = jax.random.split(key)
    x = jax.random.normal(kx, (B, Cin, H, W), jnp.float32)
    params = init_params(kp, Cin, channels, radix, cardinality)

    ref = reference(x, params, radix=radix, cardinality=cardinality, channels=channels)

    # f32 storage/compute path (tight parity check)
    out = jax.block_until_ready(splat_conv2d(
        x, params, radix=radix, cardinality=cardinality, channels=channels,
        block_b=2, compute_dtype=jnp.float32))
    assert out.shape == (B, channels, H, W)
    assert jnp.allclose(out, ref, atol=5e-3, rtol=5e-3), "f32 kernel mismatch vs reference"

    # bf16 MXU-operand path (default; halves activation DMA, changes numerics slightly)
    out_bf16 = jax.block_until_ready(splat_conv2d(
        x, params, radix=radix, cardinality=cardinality, channels=channels,
        block_b=2, compute_dtype=jnp.bfloat16))
    assert jnp.allclose(out_bf16, ref, atol=2e-2, rtol=2e-2), "bf16 kernel mismatch vs reference"

    print("KERNEL_OK")
</pallas_src>

<mosaic_0001>
module attributes {stable_mosaic.version = 11 : i64} {
  func.func @_splat_kernel(%arg0: i32, %arg1: memref<2x4x384xf32, #tpu.memory_space<vmem>>, %arg2: memref<1x256xf32, #tpu.memory_space<vmem>>, %arg3: memref<1x256xf32, #tpu.memory_space<vmem>>, %arg4: memref<9x8x4xf32, #tpu.memory_space<vmem>>, %arg5: memref<8x1xf32, #tpu.memory_space<vmem>>, %arg6: memref<32x4xf32, #tpu.memory_space<vmem>>, %arg7: memref<32x1xf32, #tpu.memory_space<vmem>>, %arg8: memref<8x32xf32, #tpu.memory_space<vmem>>, %arg9: memref<8x1xf32, #tpu.memory_space<vmem>>, %arg10: memref<2x4x256xf32, #tpu.memory_space<vmem>>) attributes {dimension_semantics = [#tpu.dimension_semantics<parallel>], iteration_bounds = array<i64: 2>, scalar_prefetch = 0 : i64, scratch_operands = 0 : i64, tpu.core_type = #tpu.core_type<tc>, window_params = [{transform_indices = @transform_0, window_bounds = array<i64: 2, 4, 384>}, {pipeline_mode = #tpu.pipeline_mode<synchronous>, transform_indices = @transform_1, window_bounds = array<i64: 1, 256>}, {pipeline_mode = #tpu.pipeline_mode<synchronous>, transform_indices = @transform_2, window_bounds = array<i64: 1, 256>}, {pipeline_mode = #tpu.pipeline_mode<synchronous>, transform_indices = @transform_3, window_bounds = array<i64: 9, 8, 4>}, {pipeline_mode = #tpu.pipeline_mode<synchronous>, transform_indices = @transform_4, window_bounds = array<i64: 8, 1>}, {pipeline_mode = #tpu.pipeline_mode<synchronous>, transform_indices = @transform_5, window_bounds = array<i64: 32, 4>}, {pipeline_mode = #tpu.pipeline_mode<synchronous>, transform_indices = @transform_6, window_bounds = array<i64: 32, 1>}, {pipeline_mode = #tpu.pipeline_mode<synchronous>, transform_indices = @transform_7, window_bounds = array<i64: 8, 32>}, {pipeline_mode = #tpu.pipeline_mode<synchronous>, transform_indices = @transform_8, window_bounds = array<i64: 8, 1>}, {transform_indices = @transform_9, window_bounds = array<i64: 2, 4, 256>}]} {
    %c0 = arith.constant 0 : index
    %c0_0 = arith.constant 0 : index
    %0 = vector.load %arg2[%c0, %c0_0] : memref<1x256xf32, #tpu.memory_space<vmem>>, vector<1x256xf32>
    %c0_1 = arith.constant 0 : index
    %c0_2 = arith.constant 0 : index
    %1 = vector.load %arg3[%c0_1, %c0_2] : memref<1x256xf32, #tpu.memory_space<vmem>>, vector<1x256xf32>
    %c0_3 = arith.constant 0 : index
    %c0_4 = arith.constant 0 : index
    %c0_5 = arith.constant 0 : index
    %2 = vector.load %arg1[%c0_3, %c0_4, %c0_5] : memref<2x4x384xf32, #tpu.memory_space<vmem>>, vector<1x4x384xf32>
    %3 = vector.shape_cast %2 : vector<1x4x384xf32> to vector<4x384xf32>
    %4 = vector.extract_strided_slice %3 {offsets = [0, 0], sizes = [4, 256], strides = [1, 1]} : vector<4x384xf32> to vector<4x256xf32>
    %5 = vector.broadcast %0 : vector<1x256xf32> to vector<4x256xf32>
    %6 = arith.mulf %4, %5 : vector<4x256xf32>
    %7 = vector.extract_strided_slice %3 {offsets = [0, 1], sizes = [4, 256], strides = [1, 1]} : vector<4x384xf32> to vector<4x256xf32>
    %8 = vector.extract_strided_slice %3 {offsets = [0, 2], sizes = [4, 256], strides = [1, 1]} : vector<4x384xf32> to vector<4x256xf32>
    %9 = vector.broadcast %1 : vector<1x256xf32> to vector<4x256xf32>
    %10 = arith.mulf %8, %9 : vector<4x256xf32>
    %11 = vector.extract_strided_slice %3 {offsets = [0, 16], sizes = [4, 256], strides = [1, 1]} : vector<4x384xf32> to vector<4x256xf32>
    %12 = vector.broadcast %0 : vector<1x256xf32> to vector<4x256xf32>
    %13 = arith.mulf %11, %12 : vector<4x256xf32>
    %14 = vector.extract_strided_slice %3 {offsets = [0, 17], sizes = [4, 256], strides = [1, 1]} : vector<4x384xf32> to vector<4x256xf32>
    %15 = vector.extract_strided_slice %3 {offsets = [0, 18], sizes = [4, 256], strides = [1, 1]} : vector<4x384xf32> to vector<4x256xf32>
    %16 = vector.broadcast %1 : vector<1x256xf32> to vector<4x256xf32>
    %17 = arith.mulf %15, %16 : vector<4x256xf32>
    %18 = vector.extract_strided_slice %3 {offsets = [0, 32], sizes = [4, 256], strides = [1, 1]} : vector<4x384xf32> to vector<4x256xf32>
    %19 = vector.broadcast %0 : vector<1x256xf32> to vector<4x256xf32>
    %20 = arith.mulf %18, %19 : vector<4x256xf32>
    %21 = vector.extract_strided_slice %3 {offsets = [0, 33], sizes = [4, 256], strides = [1, 1]} : vector<4x384xf32> to vector<4x256xf32>
    %22 = vector.extract_strided_slice %3 {offsets = [0, 34], sizes = [4, 256], strides = [1, 1]} : vector<4x384xf32> to vector<4x256xf32>
    %23 = vector.broadcast %1 : vector<1x256xf32> to vector<4x256xf32>
    %24 = arith.mulf %22, %23 : vector<4x256xf32>
    %c0_6 = arith.constant 0 : index
    %c0_7 = arith.constant 0 : index
    %c0_8 = arith.constant 0 : index
    %25 = vector.load %arg4[%c0_6, %c0_7, %c0_8] : memref<9x8x4xf32, #tpu.memory_space<vmem>>, vector<1x8x4xf32>
    %26 = vector.shape_cast %25 : vector<1x8x4xf32> to vector<8x4xf32>
    %cst = arith.constant dense<0.000000e+00> : vector<8x256xf32>
    %27 = tpu.matmul %26, %6, %cst {dimension_numbers = #tpu.dot_dimension_numbers<[1], [0], [0], [1], [0, 0, 1, 1], [], []>} : vector<8x4xf32>, vector<4x256xf32>, vector<8x256xf32> -> vector<8x256xf32>
    %c1 = arith.constant 1 : index
    %c0_9 = arith.constant 0 : index
    %c0_10 = arith.constant 0 : index
    %28 = vector.load %arg4[%c1, %c0_9, %c0_10] : memref<9x8x4xf32, #tpu.memory_space<vmem>>, vector<1x8x4xf32>
    %29 = vector.shape_cast %28 : vector<1x8x4xf32> to vector<8x4xf32>
    %cst_11 = arith.constant dense<0.000000e+00> : vector<8x256xf32>
    %30 = tpu.matmul %29, %7, %cst_11 {dimension_numbers = #tpu.dot_dimension_numbers<[1], [0], [0], [1], [0, 0, 1, 1], [], []>} : vector<8x4xf32>, vector<4x256xf32>, vector<8x256xf32> -> vector<8x256xf32>
    %31 = arith.addf %27, %30 : vector<8x256xf32>
    %c2 = arith.constant 2 : index
    %c0_12 = arith.constant 0 : index
    %c0_13 = arith.constant 0 : index
    %32 = vector.load %arg4[%c2, %c0_12, %c0_13] : memref<9x8x4xf32, #tpu.memory_space<vmem>>, vector<1x8x4xf32>
    %33 = vector.shape_cast %32 : vector<1x8x4xf32> to vector<8x4xf32>
    %cst_14 = arith.constant dense<0.000000e+00> : vector<8x256xf32>
    %34 = tpu.matmul %33, %10, %cst_14 {dimension_numbers = #tpu.dot_dimension_numbers<[1], [0], [0], [1], [0, 0, 1, 1], [], []>} : vector<8x4xf32>, vector<4x256xf32>, vector<8x256xf32> -> vector<8x256xf32>
    %35 = arith.addf %31, %34 : vector<8x256xf32>
    %c3 = arith.constant 3 : index
    %c0_15 = arith.constant 0 : index
    %c0_16 = arith.constant 0 : index
    %36 = vector.load %arg4[%c3, %c0_15, %c0_16] : memref<9x8x4xf32, #tpu.memory_space<vmem>>, vector<1x8x4xf32>
    %37 = vector.shape_cast %36 : vector<1x8x4xf32> to vector<8x4xf32>
    %cst_17 = arith.constant dense<0.000000e+00> : vector<8x256xf32>
    %38 = tpu.matmul %37, %13, %cst_17 {dimension_numbers = #tpu.dot_dimension_numbers<[1], [0], [0], [1], [0, 0, 1, 1], [], []>} : vector<8x4xf32>, vector<4x256xf32>, vector<8x256xf32> -> vector<8x256xf32>
    %39 = arith.addf %35, %38 : vector<8x256xf32>
    %c4 = arith.constant 4 : index
    %c0_18 = arith.constant 0 : index
    %c0_19 = arith.constant 0 : index
    %40 = vector.load %arg4[%c4, %c0_18, %c0_19] : memref<9x8x4xf32, #tpu.memory_space<vmem>>, vector<1x8x4xf32>
    %41 = vector.shape_cast %40 : vector<1x8x4xf32> to vector<8x4xf32>
    %cst_20 = arith.constant dense<0.000000e+00> : vector<8x256xf32>
    %42 = tpu.matmul %41, %14, %cst_20 {dimension_numbers = #tpu.dot_dimension_numbers<[1], [0], [0], [1], [0, 0, 1, 1], [], []>} : vector<8x4xf32>, vector<4x256xf32>, vector<8x256xf32> -> vector<8x256xf32>
    %43 = arith.addf %39, %42 : vector<8x256xf32>
    %c5 = arith.constant 5 : index
    %c0_21 = arith.constant 0 : index
    %c0_22 = arith.constant 0 : index
    %44 = vector.load %arg4[%c5, %c0_21, %c0_22] : memref<9x8x4xf32, #tpu.memory_space<vmem>>, vector<1x8x4xf32>
    %45 = vector.shape_cast %44 : vector<1x8x4xf32> to vector<8x4xf32>
    %cst_23 = arith.constant dense<0.000000e+00> : vector<8x256xf32>
    %46 = tpu.matmul %45, %17, %cst_23 {dimension_numbers = #tpu.dot_dimension_numbers<[1], [0], [0], [1], [0, 0, 1, 1], [], []>} : vector<8x4xf32>, vector<4x256xf32>, vector<8x256xf32> -> vector<8x256xf32>
    %47 = arith.addf %43, %46 : vector<8x256xf32>
    %c6 = arith.constant 6 : index
    %c0_24 = arith.constant 0 : index
    %c0_25 = arith.constant 0 : index
    %48 = vector.load %arg4[%c6, %c0_24, %c0_25] : memref<9x8x4xf32, #tpu.memory_space<vmem>>, vector<1x8x4xf32>
    %49 = vector.shape_cast %48 : vector<1x8x4xf32> to vector<8x4xf32>
    %cst_26 = arith.constant dense<0.000000e+00> : vector<8x256xf32>
    %50 = tpu.matmul %49, %20, %cst_26 {dimension_numbers = #tpu.dot_dimension_numbers<[1], [0], [0], [1], [0, 0, 1, 1], [], []>} : vector<8x4xf32>, vector<4x256xf32>, vector<8x256xf32> -> vector<8x256xf32>
    %51 = arith.addf %47, %50 : vector<8x256xf32>
    %c7 = arith.constant 7 : index
    %c0_27 = arith.constant 0 : index
    %c0_28 = arith.constant 0 : index
    %52 = vector.load %arg4[%c7, %c0_27, %c0_28] : memref<9x8x4xf32, #tpu.memory_space<vmem>>, vector<1x8x4xf32>
    %53 = vector.shape_cast %52 : vector<1x8x4xf32> to vector<8x4xf32>
    %cst_29 = arith.constant dense<0.000000e+00> : vector<8x256xf32>
    %54 = tpu.matmul %53, %21, %cst_29 {dimension_numbers = #tpu.dot_dimension_numbers<[1], [0], [0], [1], [0, 0, 1, 1], [], []>} : vector<8x4xf32>, vector<4x256xf32>, vector<8x256xf32> -> vector<8x256xf32>
    %55 = arith.addf %51, %54 : vector<8x256xf32>
    %c8 = arith.constant 8 : index
    %c0_30 = arith.constant 0 : index
    %c0_31 = arith.constant 0 : index
    %56 = vector.load %arg4[%c8, %c0_30, %c0_31] : memref<9x8x4xf32, #tpu.memory_space<vmem>>, vector<1x8x4xf32>
    %57 = vector.shape_cast %56 : vector<1x8x4xf32> to vector<8x4xf32>
    %cst_32 = arith.constant dense<0.000000e+00> : vector<8x256xf32>
    %58 = tpu.matmul %57, %24, %cst_32 {dimension_numbers = #tpu.dot_dimension_numbers<[1], [0], [0], [1], [0, 0, 1, 1], [], []>} : vector<8x4xf32>, vector<4x256xf32>, vector<8x256xf32> -> vector<8x256xf32>
    %59 = arith.addf %55, %58 : vector<8x256xf32>
    %c0_33 = arith.constant 0 : index
    %c0_34 = arith.constant 0 : index
    %60 = vector.load %arg5[%c0_33, %c0_34] : memref<8x1xf32, #tpu.memory_space<vmem>>, vector<8x1xf32>
    %61 = vector.broadcast %60 : vector<8x1xf32> to vector<8x256xf32>
    %62 = arith.addf %59, %61 : vector<8x256xf32>
    %cst_35 = arith.constant 0.000000e+00 : f32
    %63 = vector.broadcast %cst_35 : f32 to vector<8x256xf32>
    %64 = arith.maximumf %62, %63 : vector<8x256xf32>
    %cst_36 = arith.constant dense<0.000000e+00> : vector<8xf32>
    %65 = vector.multi_reduction <add>, %64, %cst_36 [1] : vector<8x256xf32> to vector<8xf32>
    %66 = vector.shape_cast %65 : vector<8xf32> to vector<8x1xf32>
    %cst_37 = arith.constant 2.560000e+02 : f32
    %67 = vector.broadcast %cst_37 : f32 to vector<8x1xf32>
    %68 = arith.divf %66, %67 : vector<8x1xf32>
    %69 = vector.extract_strided_slice %68 {offsets = [0, 0], sizes = [4, 1], strides = [1, 1]} : vector<8x1xf32> to vector<4x1xf32>
    %70 = vector.extract_strided_slice %68 {offsets = [4, 0], sizes = [4, 1], strides = [1, 1]} : vector<8x1xf32> to vector<4x1xf32>
    %71 = arith.addf %69, %70 : vector<4x1xf32>
    %c0_38 = arith.constant 0 : index
    %c0_39 = arith.constant 0 : index
    %72 = vector.load %arg6[%c0_38, %c0_39] : memref<32x4xf32, #tpu.memory_space<vmem>>, vector<32x4xf32>
    %cst_40 = arith.constant dense<0.000000e+00> : vector<32x1xf32>
    %73 = tpu.matmul %72, %71, %cst_40 {dimension_numbers = #tpu.dot_dimension_numbers<[1], [0], [0], [1], [0, 0, 1, 1], [], []>} : vector<32x4xf32>, vector<4x1xf32>, vector<32x1xf32> -> vector<32x1xf32>
    %c0_41 = arith.constant 0 : index
    %c0_42 = arith.constant 0 : index
    %74 = vector.load %arg7[%c0_41, %c0_42] : memref<32x1xf32, #tpu.memory_space<vmem>>, vector<32x1xf32>
    %75 = arith.addf %73, %74 : vector<32x1xf32>
    %cst_43 = arith.constant 0.000000e+00 : f32
    %76 = vector.broadcast %cst_43 : f32 to vector<32x1xf32>
    %77 = arith.maximumf %75, %76 : vector<32x1xf32>
    %c0_44 = arith.constant 0 : index
    %c0_45 = arith.constant 0 : index
    %78 = vector.load %arg8[%c0_44, %c0_45] : memref<8x32xf32, #tpu.memory_space<vmem>>, vector<8x32xf32>
    %cst_46 = arith.constant dense<0.000000e+00> : vector<8x1xf32>
    %79 = tpu.matmul %78, %77, %cst_46 {dimension_numbers = #tpu.dot_dimension_numbers<[1], [0], [0], [1], [0, 0, 1, 1], [], []>} : vector<8x32xf32>, vector<32x1xf32>, vector<8x1xf32> -> vector<8x1xf32>
    %c0_47 = arith.constant 0 : index
    %c0_48 = arith.constant 0 : index
    %80 = vector.load %arg9[%c0_47, %c0_48] : memref<8x1xf32, #tpu.memory_space<vmem>>, vector<8x1xf32>
    %81 = arith.addf %79, %80 : vector<8x1xf32>
    %82 = vector.extract_strided_slice %81 {offsets = [0, 0], sizes = [4, 1], strides = [1, 1]} : vector<8x1xf32> to vector<4x1xf32>
    %83 = vector.extract_strided_slice %81 {offsets = [4, 0], sizes = [4, 1], strides = [1, 1]} : vector<8x1xf32> to vector<4x1xf32>
    %84 = arith.maximumf %82, %83 : vector<4x1xf32>
    %85 = arith.subf %82, %84 : vector<4x1xf32>
    %86 = math.exp %85 : vector<4x1xf32>
    %87 = arith.subf %83, %84 : vector<4x1xf32>
    %88 = math.exp %87 : vector<4x1xf32>
    %89 = arith.addf %86, %88 : vector<4x1xf32>
    %90 = tpu.reciprocal %89 {approx = true} : vector<4x1xf32> -> vector<4x1xf32>
    %91 = arith.mulf %86, %90 : vector<4x1xf32>
    %92 = vector.extract_strided_slice %64 {offsets = [0, 0], sizes = [4, 256], strides = [1, 1]} : vector<8x256xf32> to vector<4x256xf32>
    %93 = vector.broadcast %91 : vector<4x1xf32> to vector<4x256xf32>
    %94 = arith.mulf %93, %92 : vector<4x256xf32>
    %95 = arith.mulf %88, %90 : vector<4x1xf32>
    %96 = vector.extract_strided_slice %64 {offsets = [4, 0], sizes = [4, 256], strides = [1, 1]} : vector<8x256xf32> to vector<4x256xf32>
    %97 = vector.broadcast %95 : vector<4x1xf32> to vector<4x256xf32>
    %98 = arith.mulf %97, %96 : vector<4x256xf32>
    %99 = arith.addf %94, %98 : vector<4x256xf32>
    %c0_49 = arith.constant 0 : index
    %c0_50 = arith.constant 0 : index
    %c0_51 = arith.constant 0 : index
    %100 = vector.load %arg10[%c0_49, %c0_50, %c0_51] : memref<2x4x256xf32, #tpu.memory_space<vmem>>, vector<1x4x256xf32>
    %101 = vector.shape_cast %100 : vector<1x4x256xf32> to vector<4x256xf32>
    %102 = vector.shape_cast %99 : vector<4x256xf32> to vector<1x4x256xf32>
    tpu.vector_store %arg10[%c0_49, %c0_50, %c0_51], %102 {strides = array<i32>} : memref<2x4x256xf32, #tpu.memory_space<vmem>>, vector<1x4x256xf32>,
    %c1_52 = arith.constant 1 : index
    %c0_53 = arith.constant 0 : index
    %c0_54 = arith.constant 0 : index
    %103 = vector.load %arg1[%c1_52, %c0_53, %c0_54] : memref<2x4x384xf32, #tpu.memory_space<vmem>>, vector<1x4x384xf32>
    %104 = vector.shape_cast %103 : vector<1x4x384xf32> to vector<4x384xf32>
    %105 = vector.extract_strided_slice %104 {offsets = [0, 0], sizes = [4, 256], strides = [1, 1]} : vector<4x384xf32> to vector<4x256xf32>
    %106 = vector.broadcast %0 : vector<1x256xf32> to vector<4x256xf32>
    %107 = arith.mulf %105, %106 : vector<4x256xf32>
    %108 = vector.extract_strided_slice %104 {offsets = [0, 1], sizes = [4, 256], strides = [1, 1]} : vector<4x384xf32> to vector<4x256xf32>
    %109 = vector.extract_strided_slice %104 {offsets = [0, 2], sizes = [4, 256], strides = [1, 1]} : vector<4x384xf32> to vector<4x256xf32>
    %110 = vector.broadcast %1 : vector<1x256xf32> to vector<4x256xf32>
    %111 = arith.mulf %109, %110 : vector<4x256xf32>
    %112 = vector.extract_strided_slice %104 {offsets = [0, 16], sizes = [4, 256], strides = [1, 1]} : vector<4x384xf32> to vector<4x256xf32>
    %113 = vector.broadcast %0 : vector<1x256xf32> to vector<4x256xf32>
    %114 = arith.mulf %112, %113 : vector<4x256xf32>
    %115 = vector.extract_strided_slice %104 {offsets = [0, 17], sizes = [4, 256], strides = [1, 1]} : vector<4x384xf32> to vector<4x256xf32>
    %116 = vector.extract_strided_slice %104 {offsets = [0, 18], sizes = [4, 256], strides = [1, 1]} : vector<4x384xf32> to vector<4x256xf32>
    %117 = vector.broadcast %1 : vector<1x256xf32> to vector<4x256xf32>
    %118 = arith.mulf %116, %117 : vector<4x256xf32>
    %119 = vector.extract_strided_slice %104 {offsets = [0, 32], sizes = [4, 256], strides = [1, 1]} : vector<4x384xf32> to vector<4x256xf32>
    %120 = vector.broadcast %0 : vector<1x256xf32> to vector<4x256xf32>
    %121 = arith.mulf %119, %120 : vector<4x256xf32>
    %122 = vector.extract_strided_slice %104 {offsets = [0, 33], sizes = [4, 256], strides = [1, 1]} : vector<4x384xf32> to vector<4x256xf32>
    %123 = vector.extract_strided_slice %104 {offsets = [0, 34], sizes = [4, 256], strides = [1, 1]} : vector<4x384xf32> to vector<4x256xf32>
    %124 = vector.broadcast %1 : vector<1x256xf32> to vector<4x256xf32>
    %125 = arith.mulf %123, %124 : vector<4x256xf32>
    %c0_55 = arith.constant 0 : index
    %c0_56 = arith.constant 0 : index
    %c0_57 = arith.constant 0 : index
    %126 = vector.load %arg4[%c0_55, %c0_56, %c0_57] : memref<9x8x4xf32, #tpu.memory_space<vmem>>, vector<1x8x4xf32>
    %127 = vector.shape_cast %126 : vector<1x8x4xf32> to vector<8x4xf32>
    %cst_58 = arith.constant dense<0.000000e+00> : vector<8x256xf32>
    %128 = tpu.matmul %127, %107, %cst_58 {dimension_numbers = #tpu.dot_dimension_numbers<[1], [0], [0], [1], [0, 0, 1, 1], [], []>} : vector<8x4xf32>, vector<4x256xf32>, vector<8x256xf32> -> vector<8x256xf32>
    %c1_59 = arith.constant 1 : index
    %c0_60 = arith.constant 0 : index
    %c0_61 = arith.constant 0 : index
    %129 = vector.load %arg4[%c1_59, %c0_60, %c0_61] : memref<9x8x4xf32, #tpu.memory_space<vmem>>, vector<1x8x4xf32>
    %130 = vector.shape_cast %129 : vector<1x8x4xf32> to vector<8x4xf32>
    %cst_62 = arith.constant dense<0.000000e+00> : vector<8x256xf32>
    %131 = tpu.matmul %130, %108, %cst_62 {dimension_numbers = #tpu.dot_dimension_numbers<[1], [0], [0], [1], [0, 0, 1, 1], [], []>} : vector<8x4xf32>, vector<4x256xf32>, vector<8x256xf32> -> vector<8x256xf32>
    %132 = arith.addf %128, %131 : vector<8x256xf32>
    %c2_63 = arith.constant 2 : index
    %c0_64 = arith.constant 0 : index
    %c0_65 = arith.constant 0 : index
    %133 = vector.load %arg4[%c2_63, %c0_64, %c0_65] : memref<9x8x4xf32, #tpu.memory_space<vmem>>, vector<1x8x4xf32>
    %134 = vector.shape_cast %133 : vector<1x8x4xf32> to vector<8x4xf32>
    %cst_66 = arith.constant dense<0.000000e+00> : vector<8x256xf32>
    %135 = tpu.matmul %134, %111, %cst_66 {dimension_numbers = #tpu.dot_dimension_numbers<[1], [0], [0], [1], [0, 0, 1, 1], [], []>} : vector<8x4xf32>, vector<4x256xf32>, vector<8x256xf32> -> vector<8x256xf32>
    %136 = arith.addf %132, %135 : vector<8x256xf32>
    %c3_67 = arith.constant 3 : index
    %c0_68 = arith.constant 0 : index
    %c0_69 = arith.constant 0 : index
    %137 = vector.load %arg4[%c3_67, %c0_68, %c0_69] : memref<9x8x4xf32, #tpu.memory_space<vmem>>, vector<1x8x4xf32>
    %138 = vector.shape_cast %137 : vector<1x8x4xf32> to vector<8x4xf32>
    %cst_70 = arith.constant dense<0.000000e+00> : vector<8x256xf32>
    %139 = tpu.matmul %138, %114, %cst_70 {dimension_numbers = #tpu.dot_dimension_numbers<[1], [0], [0], [1], [0, 0, 1, 1], [], []>} : vector<8x4xf32>, vector<4x256xf32>, vector<8x256xf32> -> vector<8x256xf32>
    %140 = arith.addf %136, %139 : vector<8x256xf32>
    %c4_71 = arith.constant 4 : index
    %c0_72 = arith.constant 0 : index
    %c0_73 = arith.constant 0 : index
    %141 = vector.load %arg4[%c4_71, %c0_72, %c0_73] : memref<9x8x4xf32, #tpu.memory_space<vmem>>, vector<1x8x4xf32>
    %142 = vector.shape_cast %141 : vector<1x8x4xf32> to vector<8x4xf32>
    %cst_74 = arith.constant dense<0.000000e+00> : vector<8x256xf32>
    %143 = tpu.matmul %142, %115, %cst_74 {dimension_numbers = #tpu.dot_dimension_numbers<[1], [0], [0], [1], [0, 0, 1, 1], [], []>} : vector<8x4xf32>, vector<4x256xf32>, vector<8x256xf32> -> vector<8x256xf32>
    %144 = arith.addf %140, %143 : vector<8x256xf32>
    %c5_75 = arith.constant 5 : index
    %c0_76 = arith.constant 0 : index
    %c0_77 = arith.constant 0 : index
    %145 = vector.load %arg4[%c5_75, %c0_76, %c0_77] : memref<9x8x4xf32, #tpu.memory_space<vmem>>, vector<1x8x4xf32>
    %146 = vector.shape_cast %145 : vector<1x8x4xf32> to vector<8x4xf32>
    %cst_78 = arith.constant dense<0.000000e+00> : vector<8x256xf32>
    %147 = tpu.matmul %146, %118, %cst_78 {dimension_numbers = #tpu.dot_dimension_numbers<[1], [0], [0], [1], [0, 0, 1, 1], [], []>} : vector<8x4xf32>, vector<4x256xf32>, vector<8x256xf32> -> vector<8x256xf32>
    %148 = arith.addf %144, %147 : vector<8x256xf32>
    %c6_79 = arith.constant 6 : index
    %c0_80 = arith.constant 0 : index
    %c0_81 = arith.constant 0 : index
    %149 = vector.load %arg4[%c6_79, %c0_80, %c0_81] : memref<9x8x4xf32, #tpu.memory_space<vmem>>, vector<1x8x4xf32>
    %150 = vector.shape_cast %149 : vector<1x8x4xf32> to vector<8x4xf32>
    %cst_82 = arith.constant dense<0.000000e+00> : vector<8x256xf32>
    %151 = tpu.matmul %150, %121, %cst_82 {dimension_numbers = #tpu.dot_dimension_numbers<[1], [0], [0], [1], [0, 0, 1, 1], [], []>} : vector<8x4xf32>, vector<4x256xf32>, vector<8x256xf32> -> vector<8x256xf32>
    %152 = arith.addf %148, %151 : vector<8x256xf32>
    %c7_83 = arith.constant 7 : index
    %c0_84 = arith.constant 0 : index
    %c0_85 = arith.constant 0 : index
    %153 = vector.load %arg4[%c7_83, %c0_84, %c0_85] : memref<9x8x4xf32, #tpu.memory_space<vmem>>, vector<1x8x4xf32>
    %154 = vector.shape_cast %153 : vector<1x8x4xf32> to vector<8x4xf32>
    %cst_86 = arith.constant dense<0.000000e+00> : vector<8x256xf32>
    %155 = tpu.matmul %154, %122, %cst_86 {dimension_numbers = #tpu.dot_dimension_numbers<[1], [0], [0], [1], [0, 0, 1, 1], [], []>} : vector<8x4xf32>, vector<4x256xf32>, vector<8x256xf32> -> vector<8x256xf32>
    %156 = arith.addf %152, %155 : vector<8x256xf32>
    %c8_87 = arith.constant 8 : index
    %c0_88 = arith.constant 0 : index
    %c0_89 = arith.constant 0 : index
    %157 = vector.load %arg4[%c8_87, %c0_88, %c0_89] : memref<9x8x4xf32, #tpu.memory_space<vmem>>, vector<1x8x4xf32>
    %158 = vector.shape_cast %157 : vector<1x8x4xf32> to vector<8x4xf32>
    %cst_90 = arith.constant dense<0.000000e+00> : vector<8x256xf32>
    %159 = tpu.matmul %158, %125, %cst_90 {dimension_numbers = #tpu.dot_dimension_numbers<[1], [0], [0], [1], [0, 0, 1, 1], [], []>} : vector<8x4xf32>, vector<4x256xf32>, vector<8x256xf32> -> vector<8x256xf32>
    %160 = arith.addf %156, %159 : vector<8x256xf32>
    %c0_91 = arith.constant 0 : index
    %c0_92 = arith.constant 0 : index
    %161 = vector.load %arg5[%c0_91, %c0_92] : memref<8x1xf32, #tpu.memory_space<vmem>>, vector<8x1xf32>
    %162 = vector.broadcast %161 : vector<8x1xf32> to vector<8x256xf32>
    %163 = arith.addf %160, %162 : vector<8x256xf32>
    %cst_93 = arith.constant 0.000000e+00 : f32
    %164 = vector.broadcast %cst_93 : f32 to vector<8x256xf32>
    %165 = arith.maximumf %163, %164 : vector<8x256xf32>
    %cst_94 = arith.constant dense<0.000000e+00> : vector<8xf32>
    %166 = vector.multi_reduction <add>, %165, %cst_94 [1] : vector<8x256xf32> to vector<8xf32>
    %167 = vector.shape_cast %166 : vector<8xf32> to vector<8x1xf32>
    %cst_95 = arith.constant 2.560000e+02 : f32
    %168 = vector.broadcast %cst_95 : f32 to vector<8x1xf32>
    %169 = arith.divf %167, %168 : vector<8x1xf32>
    %170 = vector.extract_strided_slice %169 {offsets = [0, 0], sizes = [4, 1], strides = [1, 1]} : vector<8x1xf32> to vector<4x1xf32>
    %171 = vector.extract_strided_slice %169 {offsets = [4, 0], sizes = [4, 1], strides = [1, 1]} : vector<8x1xf32> to vector<4x1xf32>
    %172 = arith.addf %170, %171 : vector<4x1xf32>
    %c0_96 = arith.constant 0 : index
    %c0_97 = arith.constant 0 : index
    %173 = vector.load %arg6[%c0_96, %c0_97] : memref<32x4xf32, #tpu.memory_space<vmem>>, vector<32x4xf32>
    %cst_98 = arith.constant dense<0.000000e+00> : vector<32x1xf32>
    %174 = tpu.matmul %173, %172, %cst_98 {dimension_numbers = #tpu.dot_dimension_numbers<[1], [0], [0], [1], [0, 0, 1, 1], [], []>} : vector<32x4xf32>, vector<4x1xf32>, vector<32x1xf32> -> vector<32x1xf32>
    %c0_99 = arith.constant 0 : index
    %c0_100 = arith.constant 0 : index
    %175 = vector.load %arg7[%c0_99, %c0_100] : memref<32x1xf32, #tpu.memory_space<vmem>>, vector<32x1xf32>
    %176 = arith.addf %174, %175 : vector<32x1xf32>
    %cst_101 = arith.constant 0.000000e+00 : f32
    %177 = vector.broadcast %cst_101 : f32 to vector<32x1xf32>
    %178 = arith.maximumf %176, %177 : vector<32x1xf32>
    %c0_102 = arith.constant 0 : index
    %c0_103 = arith.constant 0 : index
    %179 = vector.load %arg8[%c0_102, %c0_103] : memref<8x32xf32, #tpu.memory_space<vmem>>, vector<8x32xf32>
    %cst_104 = arith.constant dense<0.000000e+00> : vector<8x1xf32>
    %180 = tpu.matmul %179, %178, %cst_104 {dimension_numbers = #tpu.dot_dimension_numbers<[1], [0], [0], [1], [0, 0, 1, 1], [], []>} : vector<8x32xf32>, vector<32x1xf32>, vector<8x1xf32> -> vector<8x1xf32>
    %c0_105 = arith.constant 0 : index
    %c0_106 = arith.constant 0 : index
    %181 = vector.load %arg9[%c0_105, %c0_106] : memref<8x1xf32, #tpu.memory_space<vmem>>, vector<8x1xf32>
    %182 = arith.addf %180, %181 : vector<8x1xf32>
    %183 = vector.extract_strided_slice %182 {offsets = [0, 0], sizes = [4, 1], strides = [1, 1]} : vector<8x1xf32> to vector<4x1xf32>
    %184 = vector.extract_strided_slice %182 {offsets = [4, 0], sizes = [4, 1], strides = [1, 1]} : vector<8x1xf32> to vector<4x1xf32>
    %185 = arith.maximumf %183, %184 : vector<4x1xf32>
    %186 = arith.subf %183, %185 : vector<4x1xf32>
    %187 = math.exp %186 : vector<4x1xf32>
    %188 = arith.subf %184, %185 : vector<4x1xf32>
    %189 = math.exp %188 : vector<4x1xf32>
    %190 = arith.addf %187, %189 : vector<4x1xf32>
    %191 = tpu.reciprocal %190 {approx = true} : vector<4x1xf32> -> vector<4x1xf32>
    %192 = arith.mulf %187, %191 : vector<4x1xf32>
    %193 = vector.extract_strided_slice %165 {offsets = [0, 0], sizes = [4, 256], strides = [1, 1]} : vector<8x256xf32> to vector<4x256xf32>
    %194 = vector.broadcast %192 : vector<4x1xf32> to vector<4x256xf32>
    %195 = arith.mulf %194, %193 : vector<4x256xf32>
    %196 = arith.mulf %189, %191 : vector<4x1xf32>
    %197 = vector.extract_strided_slice %165 {offsets = [4, 0], sizes = [4, 256], strides = [1, 1]} : vector<8x256xf32> to vector<4x256xf32>
    %198 = vector.broadcast %196 : vector<4x1xf32> to vector<4x256xf32>
    %199 = arith.mulf %198, %197 : vector<4x256xf32>
    %200 = arith.addf %195, %199 : vector<4x256xf32>
    %c1_107 = arith.constant 1 : index
    %c0_108 = arith.constant 0 : index
    %c0_109 = arith.constant 0 : index
    %201 = vector.load %arg10[%c1_107, %c0_108, %c0_109] : memref<2x4x256xf32, #tpu.memory_space<vmem>>, vector<1x4x256xf32>
    %202 = vector.shape_cast %201 : vector<1x4x256xf32> to vector<4x256xf32>
    %203 = vector.shape_cast %200 : vector<4x256xf32> to vector<1x4x256xf32>
    tpu.vector_store %arg10[%c1_107, %c0_108, %c0_109], %203 {strides = array<i32>} : memref<2x4x256xf32, #tpu.memory_space<vmem>>, vector<1x4x256xf32>,
    return
  }
  func.func @transform_0(%arg0: i32) -> (i32, i32, i32) {
    %c0_i32 = arith.constant 0 : i32
    %c0_i32_0 = arith.constant 0 : i32
    %c0_i32_1 = arith.constant 0 : i32
    return %arg0, %c0_i32, %c0_i32_0 : i32, i32, i32
  }
  func.func @transform_1(%arg0: i32) -> (i32, i32) {
    %c0_i32 = arith.constant 0 : i32
    %c0_i32_0 = arith.constant 0 : i32
    %c0_i32_1 = arith.constant 0 : i32
    return %c0_i32, %c0_i32_0 : i32, i32
  }
  func.func @transform_2(%arg0: i32) -> (i32, i32) {
    %c0_i32 = arith.constant 0 : i32
    %c0_i32_0 = arith.constant 0 : i32
    %c0_i32_1 = arith.constant 0 : i32
    return %c0_i32, %c0_i32_0 : i32, i32
  }
  func.func @transform_3(%arg0: i32) -> (i32, i32, i32) {
    %c0_i32 = arith.constant 0 : i32
    %c0_i32_0 = arith.constant 0 : i32
    %c0_i32_1 = arith.constant 0 : i32
    %c0_i32_2 = arith.constant 0 : i32
    return %c0_i32, %c0_i32_0, %c0_i32_1 : i32, i32, i32
  }
  func.func @transform_4(%arg0: i32) -> (i32, i32) {
    %c0_i32 = arith.constant 0 : i32
    %c0_i32_0 = arith.constant 0 : i32
    %c0_i32_1 = arith.constant 0 : i32
    return %c0_i32, %c0_i32_0 : i32, i32
  }
  func.func @transform_5(%arg0: i32) -> (i32, i32) {
    %c0_i32 = arith.constant 0 : i32
    %c0_i32_0 = arith.constant 0 : i32
    %c0_i32_1 = arith.constant 0 : i32
    return %c0_i32, %c0_i32_0 : i32, i32
  }
  func.func @transform_6(%arg0: i32) -> (i32, i32) {
    %c0_i32 = arith.constant 0 : i32
    %c0_i32_0 = arith.constant 0 : i32
    %c0_i32_1 = arith.constant 0 : i32
    return %c0_i32, %c0_i32_0 : i32, i32
  }
  func.func @transform_7(%arg0: i32) -> (i32, i32) {
    %c0_i32 = arith.constant 0 : i32
    %c0_i32_0 = arith.constant 0 : i32
    %c0_i32_1 = arith.constant 0 : i32
    return %c0_i32, %c0_i32_0 : i32, i32
  }
  func.func @transform_8(%arg0: i32) -> (i32, i32) {
    %c0_i32 = arith.constant 0 : i32
    %c0_i32_0 = arith.constant 0 : i32
    %c0_i32_1 = arith.constant 0 : i32
    return %c0_i32, %c0_i32_0 : i32, i32
  }
  func.func @transform_9(%arg0: i32) -> (i32, i32, i32) {
    %c0_i32 = arith.constant 0 : i32
    %c0_i32_0 = arith.constant 0 : i32
    %c0_i32_1 = arith.constant 0 : i32
    return %arg0, %c0_i32, %c0_i32_0 : i32, i32, i32
  }
}

module attributes {stable_mosaic.version = 11 : i64} {
  func.func @_splat_kernel(%arg0: i32, %arg1: memref<2x4x384xf32, #tpu.memory_space<vmem>>, %arg2: memref<1x256xf32, #tpu.memory_space<vmem>>, %arg3: memref<1x256xf32, #tpu.memory_space<vmem>>, %arg4: memref<9x8x4xf32, #tpu.memory_space<vmem>>, %arg5: memref<8x1xf32, #tpu.memory_space<vmem>>, %arg6: memref<32x4xf32, #tpu.memory_space<vmem>>, %arg7: memref<32x1xf32, #tpu.memory_space<vmem>>, %arg8: memref<8x32xf32, #tpu.memory_space<vmem>>, %arg9: memref<8x1xf32, #tpu.memory_space<vmem>>, %arg10: memref<2x4x256xf32, #tpu.memory_space<vmem>>) attributes {dimension_semantics = [#tpu.dimension_semantics<parallel>], iteration_bounds = array<i64: 2>, scalar_prefetch = 0 : i64, scratch_operands = 0 : i64, tpu.core_type = #tpu.core_type<tc>, window_params = [{transform_indices = @transform_0, window_bounds = array<i64: 2, 4, 384>}, {pipeline_mode = #tpu.pipeline_mode<synchronous>, transform_indices = @transform_1, window_bounds = array<i64: 1, 256>}, {pipeline_mode = #tpu.pipeline_mode<synchronous>, transform_indices = @transform_2, window_bounds = array<i64: 1, 256>}, {pipeline_mode = #tpu.pipeline_mode<synchronous>, transform_indices = @transform_3, window_bounds = array<i64: 9, 8, 4>}, {pipeline_mode = #tpu.pipeline_mode<synchronous>, transform_indices = @transform_4, window_bounds = array<i64: 8, 1>}, {pipeline_mode = #tpu.pipeline_mode<synchronous>, transform_indices = @transform_5, window_bounds = array<i64: 32, 4>}, {pipeline_mode = #tpu.pipeline_mode<synchronous>, transform_indices = @transform_6, window_bounds = array<i64: 32, 1>}, {pipeline_mode = #tpu.pipeline_mode<synchronous>, transform_indices = @transform_7, window_bounds = array<i64: 8, 32>}, {pipeline_mode = #tpu.pipeline_mode<synchronous>, transform_indices = @transform_8, window_bounds = array<i64: 8, 1>}, {transform_indices = @transform_9, window_bounds = array<i64: 2, 4, 256>}]} {
    %c0 = arith.constant 0 : index
    %c0_0 = arith.constant 0 : index
    %0 = vector.load %arg2[%c0, %c0_0] : memref<1x256xf32, #tpu.memory_space<vmem>>, vector<1x256xf32>
    %c0_1 = arith.constant 0 : index
    %c0_2 = arith.constant 0 : index
    %1 = vector.load %arg3[%c0_1, %c0_2] : memref<1x256xf32, #tpu.memory_space<vmem>>, vector<1x256xf32>
    %c0_3 = arith.constant 0 : index
    %c0_4 = arith.constant 0 : index
    %c0_5 = arith.constant 0 : index
    %2 = vector.load %arg1[%c0_3, %c0_4, %c0_5] : memref<2x4x384xf32, #tpu.memory_space<vmem>>, vector<1x4x384xf32>
    %3 = vector.shape_cast %2 : vector<1x4x384xf32> to vector<4x384xf32>
    %4 = vector.extract_strided_slice %3 {offsets = [0, 0], sizes = [4, 256], strides = [1, 1]} : vector<4x384xf32> to vector<4x256xf32>
    %5 = vector.broadcast %0 : vector<1x256xf32> to vector<4x256xf32>
    %6 = arith.mulf %4, %5 : vector<4x256xf32>
    %7 = vector.extract_strided_slice %3 {offsets = [0, 1], sizes = [4, 256], strides = [1, 1]} : vector<4x384xf32> to vector<4x256xf32>
    %8 = vector.extract_strided_slice %3 {offsets = [0, 2], sizes = [4, 256], strides = [1, 1]} : vector<4x384xf32> to vector<4x256xf32>
    %9 = vector.broadcast %1 : vector<1x256xf32> to vector<4x256xf32>
    %10 = arith.mulf %8, %9 : vector<4x256xf32>
    %11 = vector.extract_strided_slice %3 {offsets = [0, 16], sizes = [4, 256], strides = [1, 1]} : vector<4x384xf32> to vector<4x256xf32>
    %12 = vector.broadcast %0 : vector<1x256xf32> to vector<4x256xf32>
    %13 = arith.mulf %11, %12 : vector<4x256xf32>
    %14 = vector.extract_strided_slice %3 {offsets = [0, 17], sizes = [4, 256], strides = [1, 1]} : vector<4x384xf32> to vector<4x256xf32>
    %15 = vector.extract_strided_slice %3 {offsets = [0, 18], sizes = [4, 256], strides = [1, 1]} : vector<4x384xf32> to vector<4x256xf32>
    %16 = vector.broadcast %1 : vector<1x256xf32> to vector<4x256xf32>
    %17 = arith.mulf %15, %16 : vector<4x256xf32>
    %18 = vector.extract_strided_slice %3 {offsets = [0, 32], sizes = [4, 256], strides = [1, 1]} : vector<4x384xf32> to vector<4x256xf32>
    %19 = vector.broadcast %0 : vector<1x256xf32> to vector<4x256xf32>
    %20 = arith.mulf %18, %19 : vector<4x256xf32>
    %21 = vector.extract_strided_slice %3 {offsets = [0, 33], sizes = [4, 256], strides = [1, 1]} : vector<4x384xf32> to vector<4x256xf32>
    %22 = vector.extract_strided_slice %3 {offsets = [0, 34], sizes = [4, 256], strides = [1, 1]} : vector<4x384xf32> to vector<4x256xf32>
    %23 = vector.broadcast %1 : vector<1x256xf32> to vector<4x256xf32>
    %24 = arith.mulf %22, %23 : vector<4x256xf32>
    %c0_6 = arith.constant 0 : index
    %c0_7 = arith.constant 0 : index
    %c0_8 = arith.constant 0 : index
    %25 = vector.load %arg4[%c0_6, %c0_7, %c0_8] : memref<9x8x4xf32, #tpu.memory_space<vmem>>, vector<1x8x4xf32>
    %26 = vector.shape_cast %25 : vector<1x8x4xf32> to vector<8x4xf32>
    %cst = arith.constant dense<0.000000e+00> : vector<8x256xf32>
    %27 = tpu.matmul %26, %6, %cst {dimension_numbers = #tpu.dot_dimension_numbers<[1], [0], [0], [1], [0, 0, 1, 1], [], []>} : vector<8x4xf32>, vector<4x256xf32>, vector<8x256xf32> -> vector<8x256xf32>
    %c1 = arith.constant 1 : index
    %c0_9 = arith.constant 0 : index
    %c0_10 = arith.constant 0 : index
    %28 = vector.load %arg4[%c1, %c0_9, %c0_10] : memref<9x8x4xf32, #tpu.memory_space<vmem>>, vector<1x8x4xf32>
    %29 = vector.shape_cast %28 : vector<1x8x4xf32> to vector<8x4xf32>
    %cst_11 = arith.constant dense<0.000000e+00> : vector<8x256xf32>
    %30 = tpu.matmul %29, %7, %cst_11 {dimension_numbers = #tpu.dot_dimension_numbers<[1], [0], [0], [1], [0, 0, 1, 1], [], []>} : vector<8x4xf32>, vector<4x256xf32>, vector<8x256xf32> -> vector<8x256xf32>
    %31 = arith.addf %27, %30 : vector<8x256xf32>
    %c2 = arith.constant 2 : index
    %c0_12 = arith.constant 0 : index
    %c0_13 = arith.constant 0 : index
    %32 = vector.load %arg4[%c2, %c0_12, %c0_13] : memref<9x8x4xf32, #tpu.memory_space<vmem>>, vector<1x8x4xf32>
    %33 = vector.shape_cast %32 : vector<1x8x4xf32> to vector<8x4xf32>
    %cst_14 = arith.constant dense<0.000000e+00> : vector<8x256xf32>
    %34 = tpu.matmul %33, %10, %cst_14 {dimension_numbers = #tpu.dot_dimension_numbers<[1], [0], [0], [1], [0, 0, 1, 1], [], []>} : vector<8x4xf32>, vector<4x256xf32>, vector<8x256xf32> -> vector<8x256xf32>
    %35 = arith.addf %31, %34 : vector<8x256xf32>
    %c3 = arith.constant 3 : index
    %c0_15 = arith.constant 0 : index
    %c0_16 = arith.constant 0 : index
    %36 = vector.load %arg4[%c3, %c0_15, %c0_16] : memref<9x8x4xf32, #tpu.memory_space<vmem>>, vector<1x8x4xf32>
    %37 = vector.shape_cast %36 : vector<1x8x4xf32> to vector<8x4xf32>
    %cst_17 = arith.constant dense<0.000000e+00> : vector<8x256xf32>
    %38 = tpu.matmul %37, %13, %cst_17 {dimension_numbers = #tpu.dot_dimension_numbers<[1], [0], [0], [1], [0, 0, 1, 1], [], []>} : vector<8x4xf32>, vector<4x256xf32>, vector<8x256xf32> -> vector<8x256xf32>
    %39 = arith.addf %35, %38 : vector<8x256xf32>
    %c4 = arith.constant 4 : index
    %c0_18 = arith.constant 0 : index
    %c0_19 = arith.constant 0 : index
    %40 = vector.load %arg4[%c4, %c0_18, %c0_19] : memref<9x8x4xf32, #tpu.memory_space<vmem>>, vector<1x8x4xf32>
    %41 = vector.shape_cast %40 : vector<1x8x4xf32> to vector<8x4xf32>
    %cst_20 = arith.constant dense<0.000000e+00> : vector<8x256xf32>
    %42 = tpu.matmul %41, %14, %cst_20 {dimension_numbers = #tpu.dot_dimension_numbers<[1], [0], [0], [1], [0, 0, 1, 1], [], []>} : vector<8x4xf32>, vector<4x256xf32>, vector<8x256xf32> -> vector<8x256xf32>
    %43 = arith.addf %39, %42 : vector<8x256xf32>
    %c5 = arith.constant 5 : index
    %c0_21 = arith.constant 0 : index
    %c0_22 = arith.constant 0 : index
    %44 = vector.load %arg4[%c5, %c0_21, %c0_22] : memref<9x8x4xf32, #tpu.memory_space<vmem>>, vector<1x8x4xf32>
    %45 = vector.shape_cast %44 : vector<1x8x4xf32> to vector<8x4xf32>
    %cst_23 = arith.constant dense<0.000000e+00> : vector<8x256xf32>
    %46 = tpu.matmul %45, %17, %cst_23 {dimension_numbers = #tpu.dot_dimension_numbers<[1], [0], [0], [1], [0, 0, 1, 1], [], []>} : vector<8x4xf32>, vector<4x256xf32>, vector<8x256xf32> -> vector<8x256xf32>
    %47 = arith.addf %43, %46 : vector<8x256xf32>
    %c6 = arith.constant 6 : index
    %c0_24 = arith.constant 0 : index
    %c0_25 = arith.constant 0 : index
    %48 = vector.load %arg4[%c6, %c0_24, %c0_25] : memref<9x8x4xf32, #tpu.memory_space<vmem>>, vector<1x8x4xf32>
    %49 = vector.shape_cast %48 : vector<1x8x4xf32> to vector<8x4xf32>
    %cst_26 = arith.constant dense<0.000000e+00> : vector<8x256xf32>
    %50 = tpu.matmul %49, %20, %cst_26 {dimension_numbers = #tpu.dot_dimension_numbers<[1], [0], [0], [1], [0, 0, 1, 1], [], []>} : vector<8x4xf32>, vector<4x256xf32>, vector<8x256xf32> -> vector<8x256xf32>
    %51 = arith.addf %47, %50 : vector<8x256xf32>
    %c7 = arith.constant 7 : index
    %c0_27 = arith.constant 0 : index
    %c0_28 = arith.constant 0 : index
    %52 = vector.load %arg4[%c7, %c0_27, %c0_28] : memref<9x8x4xf32, #tpu.memory_space<vmem>>, vector<1x8x4xf32>
    %53 = vector.shape_cast %52 : vector<1x8x4xf32> to vector<8x4xf32>
    %cst_29 = arith.constant dense<0.000000e+00> : vector<8x256xf32>
    %54 = tpu.matmul %53, %21, %cst_29 {dimension_numbers = #tpu.dot_dimension_numbers<[1], [0], [0], [1], [0, 0, 1, 1], [], []>} : vector<8x4xf32>, vector<4x256xf32>, vector<8x256xf32> -> vector<8x256xf32>
    %55 = arith.addf %51, %54 : vector<8x256xf32>
    %c8 = arith.constant 8 : index
    %c0_30 = arith.constant 0 : index
    %c0_31 = arith.constant 0 : index
    %56 = vector.load %arg4[%c8, %c0_30, %c0_31] : memref<9x8x4xf32, #tpu.memory_space<vmem>>, vector<1x8x4xf32>
    %57 = vector.shape_cast %56 : vector<1x8x4xf32> to vector<8x4xf32>
    %cst_32 = arith.constant dense<0.000000e+00> : vector<8x256xf32>
    %58 = tpu.matmul %57, %24, %cst_32 {dimension_numbers = #tpu.dot_dimension_numbers<[1], [0], [0], [1], [0, 0, 1, 1], [], []>} : vector<8x4xf32>, vector<4x256xf32>, vector<8x256xf32> -> vector<8x256xf32>
    %59 = arith.addf %55, %58 : vector<8x256xf32>
    %c0_33 = arith.constant 0 : index
    %c0_34 = arith.constant 0 : index
    %60 = vector.load %arg5[%c0_33, %c0_34] : memref<8x1xf32, #tpu.memory_space<vmem>>, vector<8x1xf32>
    %61 = vector.broadcast %60 : vector<8x1xf32> to vector<8x256xf32>
    %62 = arith.addf %59, %61 : vector<8x256xf32>
    %cst_35 = arith.constant 0.000000e+00 : f32
    %63 = vector.broadcast %cst_35 : f32 to vector<8x256xf32>
    %64 = arith.maximumf %62, %63 : vector<8x256xf32>
    %cst_36 = arith.constant dense<0.000000e+00> : vector<8xf32>
    %65 = vector.multi_reduction <add>, %64, %cst_36 [1] : vector<8x256xf32> to vector<8xf32>
    %66 = vector.shape_cast %65 : vector<8xf32> to vector<8x1xf32>
    %cst_37 = arith.constant 2.560000e+02 : f32
    %67 = vector.broadcast %cst_37 : f32 to vector<8x1xf32>
    %68 = arith.divf %66, %67 : vector<8x1xf32>
    %69 = vector.extract_strided_slice %68 {offsets = [0, 0], sizes = [4, 1], strides = [1, 1]} : vector<8x1xf32> to vector<4x1xf32>
    %70 = vector.extract_strided_slice %68 {offsets = [4, 0], sizes = [4, 1], strides = [1, 1]} : vector<8x1xf32> to vector<4x1xf32>
    %71 = arith.addf %69, %70 : vector<4x1xf32>
    %c0_38 = arith.constant 0 : index
    %c0_39 = arith.constant 0 : index
    %72 = vector.load %arg6[%c0_38, %c0_39] : memref<32x4xf32, #tpu.memory_space<vmem>>, vector<32x4xf32>
    %cst_40 = arith.constant dense<0.000000e+00> : vector<32x1xf32>
    %73 = tpu.matmul %72, %71, %cst_40 {dimension_numbers = #tpu.dot_dimension_numbers<[1], [0], [0], [1], [0, 0, 1, 1], [], []>} : vector<32x4xf32>, vector<4x1xf32>, vector<32x1xf32> -> vector<32x1xf32>
    %c0_41 = arith.constant 0 : index
    %c0_42 = arith.constant 0 : index
    %74 = vector.load %arg7[%c0_41, %c0_42] : memref<32x1xf32, #tpu.memory_space<vmem>>, vector<32x1xf32>
    %75 = arith.addf %73, %74 : vector<32x1xf32>
    %cst_43 = arith.constant 0.000000e+00 : f32
    %76 = vector.broadcast %cst_43 : f32 to vector<32x1xf32>
    %77 = arith.maximumf %75, %76 : vector<32x1xf32>
    %c0_44 = arith.constant 0 : index
    %c0_45 = arith.constant 0 : index
    %78 = vector.load %arg8[%c0_44, %c0_45] : memref<8x32xf32, #tpu.memory_space<vmem>>, vector<8x32xf32>
    %cst_46 = arith.constant dense<0.000000e+00> : vector<8x1xf32>
    %79 = tpu.matmul %78, %77, %cst_46 {dimension_numbers = #tpu.dot_dimension_numbers<[1], [0], [0], [1], [0, 0, 1, 1], [], []>} : vector<8x32xf32>, vector<32x1xf32>, vector<8x1xf32> -> vector<8x1xf32>
    %c0_47 = arith.constant 0 : index
    %c0_48 = arith.constant 0 : index
    %80 = vector.load %arg9[%c0_47, %c0_48] : memref<8x1xf32, #tpu.memory_space<vmem>>, vector<8x1xf32>
    %81 = arith.addf %79, %80 : vector<8x1xf32>
    %82 = vector.extract_strided_slice %81 {offsets = [0, 0], sizes = [4, 1], strides = [1, 1]} : vector<8x1xf32> to vector<4x1xf32>
    %83 = vector.extract_strided_slice %81 {offsets = [4, 0], sizes = [4, 1], strides = [1, 1]} : vector<8x1xf32> to vector<4x1xf32>
    %84 = arith.maximumf %82, %83 : vector<4x1xf32>
    %85 = arith.subf %82, %84 : vector<4x1xf32>
    %86 = math.exp %85 : vector<4x1xf32>
    %87 = arith.subf %83, %84 : vector<4x1xf32>
    %88 = math.exp %87 : vector<4x1xf32>
    %89 = arith.addf %86, %88 : vector<4x1xf32>
    %90 = tpu.reciprocal %89 {approx = true} : vector<4x1xf32> -> vector<4x1xf32>
    %91 = arith.mulf %86, %90 : vector<4x1xf32>
    %92 = vector.extract_strided_slice %64 {offsets = [0, 0], sizes = [4, 256], strides = [1, 1]} : vector<8x256xf32> to vector<4x256xf32>
    %93 = vector.broadcast %91 : vector<4x1xf32> to vector<4x256xf32>
    %94 = arith.mulf %93, %92 : vector<4x256xf32>
    %95 = arith.mulf %88, %90 : vector<4x1xf32>
    %96 = vector.extract_strided_slice %64 {offsets = [4, 0], sizes = [4, 256], strides = [1, 1]} : vector<8x256xf32> to vector<4x256xf32>
    %97 = vector.broadcast %95 : vector<4x1xf32> to vector<4x256xf32>
    %98 = arith.mulf %97, %96 : vector<4x256xf32>
    %99 = arith.addf %94, %98 : vector<4x256xf32>
    %c0_49 = arith.constant 0 : index
    %c0_50 = arith.constant 0 : index
    %c0_51 = arith.constant 0 : index
    %100 = vector.load %arg10[%c0_49, %c0_50, %c0_51] : memref<2x4x256xf32, #tpu.memory_space<vmem>>, vector<1x4x256xf32>
    %101 = vector.shape_cast %100 : vector<1x4x256xf32> to vector<4x256xf32>
    %102 = vector.shape_cast %99 : vector<4x256xf32> to vector<1x4x256xf32>
    tpu.vector_store %arg10[%c0_49, %c0_50, %c0_51], %102 {strides = array<i32>} : memref<2x4x256xf32, #tpu.memory_space<vmem>>, vector<1x4x256xf32>,
    %c1_52 = arith.constant 1 : index
    %c0_53 = arith.constant 0 : index
    %c0_54 = arith.constant 0 : index
    %103 = vector.load %arg1[%c1_52, %c0_53, %c0_54] : memref<2x4x384xf32, #tpu.memory_space<vmem>>, vector<1x4x384xf32>
    %104 = vector.shape_cast %103 : vector<1x4x384xf32> to vector<4x384xf32>
    %105 = vector.extract_strided_slice %104 {offsets = [0, 0], sizes = [4, 256], strides = [1, 1]} : vector<4x384xf32> to vector<4x256xf32>
    %106 = vector.broadcast %0 : vector<1x256xf32> to vector<4x256xf32>
    %107 = arith.mulf %105, %106 : vector<4x256xf32>
    %108 = vector.extract_strided_slice %104 {offsets = [0, 1], sizes = [4, 256], strides = [1, 1]} : vector<4x384xf32> to vector<4x256xf32>
    %109 = vector.extract_strided_slice %104 {offsets = [0, 2], sizes = [4, 256], strides = [1, 1]} : vector<4x384xf32> to vector<4x256xf32>
    %110 = vector.broadcast %1 : vector<1x256xf32> to vector<4x256xf32>
    %111 = arith.mulf %109, %110 : vector<4x256xf32>
    %112 = vector.extract_strided_slice %104 {offsets = [0, 16], sizes = [4, 256], strides = [1, 1]} : vector<4x384xf32> to vector<4x256xf32>
    %113 = vector.broadcast %0 : vector<1x256xf32> to vector<4x256xf32>
    %114 = arith.mulf %112, %113 : vector<4x256xf32>
    %115 = vector.extract_strided_slice %104 {offsets = [0, 17], sizes = [4, 256], strides = [1, 1]} : vector<4x384xf32> to vector<4x256xf32>
    %116 = vector.extract_strided_slice %104 {offsets = [0, 18], sizes = [4, 256], strides = [1, 1]} : vector<4x384xf32> to vector<4x256xf32>
    %117 = vector.broadcast %1 : vector<1x256xf32> to vector<4x256xf32>
    %118 = arith.mulf %116, %117 : vector<4x256xf32>
    %119 = vector.extract_strided_slice %104 {offsets = [0, 32], sizes = [4, 256], strides = [1, 1]} : vector<4x384xf32> to vector<4x256xf32>
    %120 = vector.broadcast %0 : vector<1x256xf32> to vector<4x256xf32>
    %121 = arith.mulf %119, %120 : vector<4x256xf32>
    %122 = vector.extract_strided_slice %104 {offsets = [0, 33], sizes = [4, 256], strides = [1, 1]} : vector<4x384xf32> to vector<4x256xf32>
    %123 = vector.extract_strided_slice %104 {offsets = [0, 34], sizes = [4, 256], strides = [1, 1]} : vector<4x384xf32> to vector<4x256xf32>
    %124 = vector.broadcast %1 : vector<1x256xf32> to vector<4x256xf32>
    %125 = arith.mulf %123, %124 : vector<4x256xf32>
    %c0_55 = arith.constant 0 : index
    %c0_56 = arith.constant 0 : index
    %c0_57 = arith.constant 0 : index
    %126 = vector.load %arg4[%c0_55, %c0_56, %c0_57] : memref<9x8x4xf32, #tpu.memory_space<vmem>>, vector<1x8x4xf32>
    %127 = vector.shape_cast %126 : vector<1x8x4xf32> to vector<8x4xf32>
    %cst_58 = arith.constant dense<0.000000e+00> : vector<8x256xf32>
    %128 = tpu.matmul %127, %107, %cst_58 {dimension_numbers = #tpu.dot_dimension_numbers<[1], [0], [0], [1], [0, 0, 1, 1], [], []>} : vector<8x4xf32>, vector<4x256xf32>, vector<8x256xf32> -> vector<8x256xf32>
    %c1_59 = arith.constant 1 : index
    %c0_60 = arith.constant 0 : index
    %c0_61 = arith.constant 0 : index
    %129 = vector.load %arg4[%c1_59, %c0_60, %c0_61] : memref<9x8x4xf32, #tpu.memory_space<vmem>>, vector<1x8x4xf32>
    %130 = vector.shape_cast %129 : vector<1x8x4xf32> to vector<8x4xf32>
    %cst_62 = arith.constant dense<0.000000e+00> : vector<8x256xf32>
    %131 = tpu.matmul %130, %108, %cst_62 {dimension_numbers = #tpu.dot_dimension_numbers<[1], [0], [0], [1], [0, 0, 1, 1], [], []>} : vector<8x4xf32>, vector<4x256xf32>, vector<8x256xf32> -> vector<8x256xf32>
    %132 = arith.addf %128, %131 : vector<8x256xf32>
    %c2_63 = arith.constant 2 : index
    %c0_64 = arith.constant 0 : index
    %c0_65 = arith.constant 0 : index
    %133 = vector.load %arg4[%c2_63, %c0_64, %c0_65] : memref<9x8x4xf32, #tpu.memory_space<vmem>>, vector<1x8x4xf32>
    %134 = vector.shape_cast %133 : vector<1x8x4xf32> to vector<8x4xf32>
    %cst_66 = arith.constant dense<0.000000e+00> : vector<8x256xf32>
    %135 = tpu.matmul %134, %111, %cst_66 {dimension_numbers = #tpu.dot_dimension_numbers<[1], [0], [0], [1], [0, 0, 1, 1], [], []>} : vector<8x4xf32>, vector<4x256xf32>, vector<8x256xf32> -> vector<8x256xf32>
    %136 = arith.addf %132, %135 : vector<8x256xf32>
    %c3_67 = arith.constant 3 : index
    %c0_68 = arith.constant 0 : index
    %c0_69 = arith.constant 0 : index
    %137 = vector.load %arg4[%c3_67, %c0_68, %c0_69] : memref<9x8x4xf32, #tpu.memory_space<vmem>>, vector<1x8x4xf32>
    %138 = vector.shape_cast %137 : vector<1x8x4xf32> to vector<8x4xf32>
    %cst_70 = arith.constant dense<0.000000e+00> : vector<8x256xf32>
    %139 = tpu.matmul %138, %114, %cst_70 {dimension_numbers = #tpu.dot_dimension_numbers<[1], [0], [0], [1], [0, 0, 1, 1], [], []>} : vector<8x4xf32>, vector<4x256xf32>, vector<8x256xf32> -> vector<8x256xf32>
    %140 = arith.addf %136, %139 : vector<8x256xf32>
    %c4_71 = arith.constant 4 : index
    %c0_72 = arith.constant 0 : index
    %c0_73 = arith.constant 0 : index
    %141 = vector.load %arg4[%c4_71, %c0_72, %c0_73] : memref<9x8x4xf32, #tpu.memory_space<vmem>>, vector<1x8x4xf32>
    %142 = vector.shape_cast %141 : vector<1x8x4xf32> to vector<8x4xf32>
    %cst_74 = arith.constant dense<0.000000e+00> : vector<8x256xf32>
    %143 = tpu.matmul %142, %115, %cst_74 {dimension_numbers = #tpu.dot_dimension_numbers<[1], [0], [0], [1], [0, 0, 1, 1], [], []>} : vector<8x4xf32>, vector<4x256xf32>, vector<8x256xf32> -> vector<8x256xf32>
    %144 = arith.addf %140, %143 : vector<8x256xf32>
    %c5_75 = arith.constant 5 : index
    %c0_76 = arith.constant 0 : index
    %c0_77 = arith.constant 0 : index
    %145 = vector.load %arg4[%c5_75, %c0_76, %c0_77] : memref<9x8x4xf32, #tpu.memory_space<vmem>>, vector<1x8x4xf32>
    %146 = vector.shape_cast %145 : vector<1x8x4xf32> to vector<8x4xf32>
    %cst_78 = arith.constant dense<0.000000e+00> : vector<8x256xf32>
    %147 = tpu.matmul %146, %118, %cst_78 {dimension_numbers = #tpu.dot_dimension_numbers<[1], [0], [0], [1], [0, 0, 1, 1], [], []>} : vector<8x4xf32>, vector<4x256xf32>, vector<8x256xf32> -> vector<8x256xf32>
    %148 = arith.addf %144, %147 : vector<8x256xf32>
    %c6_79 = arith.constant 6 : index
    %c0_80 = arith.constant 0 : index
    %c0_81 = arith.constant 0 : index
    %149 = vector.load %arg4[%c6_79, %c0_80, %c0_81] : memref<9x8x4xf32, #tpu.memory_space<vmem>>, vector<1x8x4xf32>
    %150 = vector.shape_cast %149 : vector<1x8x4xf32> to vector<8x4xf32>
    %cst_82 = arith.constant dense<0.000000e+00> : vector<8x256xf32>
    %151 = tpu.matmul %150, %121, %cst_82 {dimension_numbers = #tpu.dot_dimension_numbers<[1], [0], [0], [1], [0, 0, 1, 1], [], []>} : vector<8x4xf32>, vector<4x256xf32>, vector<8x256xf32> -> vector<8x256xf32>
    %152 = arith.addf %148, %151 : vector<8x256xf32>
    %c7_83 = arith.constant 7 : index
    %c0_84 = arith.constant 0 : index
    %c0_85 = arith.constant 0 : index
    %153 = vector.load %arg4[%c7_83, %c0_84, %c0_85] : memref<9x8x4xf32, #tpu.memory_space<vmem>>, vector<1x8x4xf32>
    %154 = vector.shape_cast %153 : vector<1x8x4xf32> to vector<8x4xf32>
    %cst_86 = arith.constant dense<0.000000e+00> : vector<8x256xf32>
    %155 = tpu.matmul %154, %122, %cst_86 {dimension_numbers = #tpu.dot_dimension_numbers<[1], [0], [0], [1], [0, 0, 1, 1], [], []>} : vector<8x4xf32>, vector<4x256xf32>, vector<8x256xf32> -> vector<8x256xf32>
    %156 = arith.addf %152, %155 : vector<8x256xf32>
    %c8_87 = arith.constant 8 : index
    %c0_88 = arith.constant 0 : index
    %c0_89 = arith.constant 0 : index
    %157 = vector.load %arg4[%c8_87, %c0_88, %c0_89] : memref<9x8x4xf32, #tpu.memory_space<vmem>>, vector<1x8x4xf32>
    %158 = vector.shape_cast %157 : vector<1x8x4xf32> to vector<8x4xf32>
    %cst_90 = arith.constant dense<0.000000e+00> : vector<8x256xf32>
    %159 = tpu.matmul %158, %125, %cst_90 {dimension_numbers = #tpu.dot_dimension_numbers<[1], [0], [0], [1], [0, 0, 1, 1], [], []>} : vector<8x4xf32>, vector<4x256xf32>, vector<8x256xf32> -> vector<8x256xf32>
    %160 = arith.addf %156, %159 : vector<8x256xf32>
    %c0_91 = arith.constant 0 : index
    %c0_92 = arith.constant 0 : index
    %161 = vector.load %arg5[%c0_91, %c0_92] : memref<8x1xf32, #tpu.memory_space<vmem>>, vector<8x1xf32>
    %162 = vector.broadcast %161 : vector<8x1xf32> to vector<8x256xf32>
    %163 = arith.addf %160, %162 : vector<8x256xf32>
    %cst_93 = arith.constant 0.000000e+00 : f32
    %164 = vector.broadcast %cst_93 : f32 to vector<8x256xf32>
    %165 = arith.maximumf %163, %164 : vector<8x256xf32>
    %cst_94 = arith.constant dense<0.000000e+00> : vector<8xf32>
    %166 = vector.multi_reduction <add>, %165, %cst_94 [1] : vector<8x256xf32> to vector<8xf32>
    %167 = vector.shape_cast %166 : vector<8xf32> to vector<8x1xf32>
    %cst_95 = arith.constant 2.560000e+02 : f32
    %168 = vector.broadcast %cst_95 : f32 to vector<8x1xf32>
    %169 = arith.divf %167, %168 : vector<8x1xf32>
    %170 = vector.extract_strided_slice %169 {offsets = [0, 0], sizes = [4, 1], strides = [1, 1]} : vector<8x1xf32> to vector<4x1xf32>
    %171 = vector.extract_strided_slice %169 {offsets = [4, 0], sizes = [4, 1], strides = [1, 1]} : vector<8x1xf32> to vector<4x1xf32>
    %172 = arith.addf %170, %171 : vector<4x1xf32>
    %c0_96 = arith.constant 0 : index
    %c0_97 = arith.constant 0 : index
    %173 = vector.load %arg6[%c0_96, %c0_97] : memref<32x4xf32, #tpu.memory_space<vmem>>, vector<32x4xf32>
    %cst_98 = arith.constant dense<0.000000e+00> : vector<32x1xf32>
    %174 = tpu.matmul %173, %172, %cst_98 {dimension_numbers = #tpu.dot_dimension_numbers<[1], [0], [0], [1], [0, 0, 1, 1], [], []>} : vector<32x4xf32>, vector<4x1xf32>, vector<32x1xf32> -> vector<32x1xf32>
    %c0_99 = arith.constant 0 : index
    %c0_100 = arith.constant 0 : index
    %175 = vector.load %arg7[%c0_99, %c0_100] : memref<32x1xf32, #tpu.memory_space<vmem>>, vector<32x1xf32>
    %176 = arith.addf %174, %175 : vector<32x1xf32>
    %cst_101 = arith.constant 0.000000e+00 : f32
    %177 = vector.broadcast %cst_101 : f32 to vector<32x1xf32>
    %178 = arith.maximumf %176, %177 : vector<32x1xf32>
    %c0_102 = arith.constant 0 : index
    %c0_103 = arith.constant 0 : index
    %179 = vector.load %arg8[%c0_102, %c0_103] : memref<8x32xf32, #tpu.memory_space<vmem>>, vector<8x32xf32>
    %cst_104 = arith.constant dense<0.000000e+00> : vector<8x1xf32>
    %180 = tpu.matmul %179, %178, %cst_104 {dimension_numbers = #tpu.dot_dimension_numbers<[1], [0], [0], [1], [0, 0, 1, 1], [], []>} : vector<8x32xf32>, vector<32x1xf32>, vector<8x1xf32> -> vector<8x1xf32>
    %c0_105 = arith.constant 0 : index
    %c0_106 = arith.constant 0 : index
    %181 = vector.load %arg9[%c0_105, %c0_106] : memref<8x1xf32, #tpu.memory_space<vmem>>, vector<8x1xf32>
    %182 = arith.addf %180, %181 : vector<8x1xf32>
    %183 = vector.extract_strided_slice %182 {offsets = [0, 0], sizes = [4, 1], strides = [1, 1]} : vector<8x1xf32> to vector<4x1xf32>
    %184 = vector.extract_strided_slice %182 {offsets = [4, 0], sizes = [4, 1], strides = [1, 1]} : vector<8x1xf32> to vector<4x1xf32>
    %185 = arith.maximumf %183, %184 : vector<4x1xf32>
    %186 = arith.subf %183, %185 : vector<4x1xf32>
    %187 = math.exp %186 : vector<4x1xf32>
    %188 = arith.subf %184, %185 : vector<4x1xf32>
    %189 = math.exp %188 : vector<4x1xf32>
    %190 = arith.addf %187, %189 : vector<4x1xf32>
    %191 = tpu.reciprocal %190 {approx = true} : vector<4x1xf32> -> vector<4x1xf32>
    %192 = arith.mulf %187, %191 : vector<4x1xf32>
    %193 = vector.extract_strided_slice %165 {offsets = [0, 0], sizes = [4, 256], strides = [1, 1]} : vector<8x256xf32> to vector<4x256xf32>
    %194 = vector.broadcast %192 : vector<4x1xf32> to vector<4x256xf32>
    %195 = arith.mulf %194, %193 : vector<4x256xf32>
    %196 = arith.mulf %189, %191 : vector<4x1xf32>
    %197 = vector.extract_strided_slice %165 {offsets = [4, 0], sizes = [4, 256], strides = [1, 1]} : vector<8x256xf32> to vector<4x256xf32>
    %198 = vector.broadcast %196 : vector<4x1xf32> to vector<4x256xf32>
    %199 = arith.mulf %198, %197 : vector<4x256xf32>
    %200 = arith.addf %195, %199 : vector<4x256xf32>
    %c1_107 = arith.constant 1 : index
    %c0_108 = arith.constant 0 : index
    %c0_109 = arith.constant 0 : index
    %201 = vector.load %arg10[%c1_107, %c0_108, %c0_109] : memref<2x4x256xf32, #tpu.memory_space<vmem>>, vector<1x4x256xf32>
    %202 = vector.shape_cast %201 : vector<1x4x256xf32> to vector<4x256xf32>
    %203 = vector.shape_cast %200 : vector<4x256xf32> to vector<1x4x256xf32>
    tpu.vector_store %arg10[%c1_107, %c0_108, %c0_109], %203 {strides = array<i32>} : memref<2x4x256xf32, #tpu.memory_space<vmem>>, vector<1x4x256xf32>,
    return
  }
  func.func @transform_0(%arg0: i32) -> (i32, i32, i32) {
    %c0_i32 = arith.constant 0 : i32
    %c0_i32_0 = arith.constant 0 : i32
    %c0_i32_1 = arith.constant 0 : i32
    return %arg0, %c0_i32, %c0_i32_0 : i32, i32, i32
  }
  func.func @transform_1(%arg0: i32) -> (i32, i32) {
    %c0_i32 = arith.constant 0 : i32
    %c0_i32_0 = arith.constant 0 : i32
    %c0_i32_1 = arith.constant 0 : i32
    return %c0_i32, %c0_i32_0 : i32, i32
  }
  func.func @transform_2(%arg0: i32) -> (i32, i32) {
    %c0_i32 = arith.constant 0 : i32
    %c0_i32_0 = arith.constant 0 : i32
    %c0_i32_1 = arith.constant 0 : i32
    return %c0_i32, %c0_i32_0 : i32, i32
  }
  func.func @transform_3(%arg0: i32) -> (i32, i32, i32) {
    %c0_i32 = arith.constant 0 : i32
    %c0_i32_0 = arith.constant 0 : i32
    %c0_i32_1 = arith.constant 0 : i32
    %c0_i32_2 = arith.constant 0 : i32
    return %c0_i32, %c0_i32_0, %c0_i32_1 : i32, i32, i32
  }
  func.func @transform_4(%arg0: i32) -> (i32, i32) {
    %c0_i32 = arith.constant 0 : i32
    %c0_i32_0 = arith.constant 0 : i32
    %c0_i32_1 = arith.constant 0 : i32
    return %c0_i32, %c0_i32_0 : i32, i32
  }
  func.func @transform_5(%arg0: i32) -> (i32, i32) {
    %c0_i32 = arith.constant 0 : i32
    %c0_i32_0 = arith.constant 0 : i32
    %c0_i32_1 = arith.constant 0 : i32
    return %c0_i32, %c0_i32_0 : i32, i32
  }
  func.func @transform_6(%arg0: i32) -> (i32, i32) {
    %c0_i32 = arith.constant 0 : i32
    %c0_i32_0 = arith.constant 0 : i32
    %c0_i32_1 = arith.constant 0 : i32
    return %c0_i32, %c0_i32_0 : i32, i32
  }
  func.func @transform_7(%arg0: i32) -> (i32, i32) {
    %c0_i32 = arith.constant 0 : i32
    %c0_i32_0 = arith.constant 0 : i32
    %c0_i32_1 = arith.constant 0 : i32
    return %c0_i32, %c0_i32_0 : i32, i32
  }
  func.func @transform_8(%arg0: i32) -> (i32, i32) {
    %c0_i32 = arith.constant 0 : i32
    %c0_i32_0 = arith.constant 0 : i32
    %c0_i32_1 = arith.constant 0 : i32
    return %c0_i32, %c0_i32_0 : i32, i32
  }
  func.func @transform_9(%arg0: i32) -> (i32, i32, i32) {
    %c0_i32 = arith.constant 0 : i32
    %c0_i32_0 = arith.constant 0 : i32
    %c0_i32_1 = arith.constant 0 : i32
    return %arg0, %c0_i32, %c0_i32_0 : i32, i32, i32
  }
}

</mosaic_0001>

<llo_original>
// kernel: tpu_custom_call.1
$region0: #{tpu_custom_call.1}
  #allocation0 [shape = 'u32[]', space=smem, size = 0x4, offset = 0x4, fixed_abs, tag = 'smem constant byte address 0x4 - core index']
  #allocation1 [shape = 'u32[144,128]{1,0:T(1,128)}', space=vmem, size = 0x12000, scoped, tag = 'internal scratch']
  %s0 = inlined_call_operand.vmem [shape: f32[4,4,384], index: 0, kind: input, shape index: {}]
  %s1 = inlined_call_operand.vmem [shape: f32[1,256], index: 1, kind: input, shape index: {}]
  %s2 = inlined_call_operand.vmem [shape: f32[1,256], index: 2, kind: input, shape index: {}]
  %s3 = inlined_call_operand.vmem [shape: f32[9,8,4], index: 3, kind: input, shape index: {}]
  %s4 = inlined_call_operand.vmem [shape: f32[8,1], index: 4, kind: input, shape index: {}]
  %s5 = inlined_call_operand.vmem [shape: f32[32,4], index: 5, kind: input, shape index: {}]
  %s6 = inlined_call_operand.vmem [shape: f32[32,1], index: 6, kind: input, shape index: {}]
  %s7 = inlined_call_operand.vmem [shape: f32[8,32], index: 7, kind: input, shape index: {}]
  %s8 = inlined_call_operand.vmem [shape: f32[8,1], index: 8, kind: input, shape index: {}]
  %s9 = inlined_call_operand.hbm [shape: f32[4,4,256], index: 9, kind: output, shape index: {}]
  %s10 = sld [smem:[#allocation0]]
  $region69: #{tpu_custom_call.1} parent=0
    _
  %s12 = ssub.s32 1, %s10
  %s13 = scalar_select 0, %s12, %s10
  $region1: #{tpu_custom_call.1} parent=0
    #allocation2 [shape = 'u8[16384]{0}', space=vmem, size = 0x4000, scoped, tag = 'output window, operand 0']
    #allocation3 [shape = 's32[2]{0}', space=sflag, size = 0x8, scoped, tag = 'scoped memory for tpu_custom_call.1']
    %14 = vsyncpa [#allocation3], 0
    %s15 = scalar_lea.sflag [#allocation3], 1
    %16 = vsyncpa %s15, 0
    loop: start=0, step=1, limit=4
    $region2: #{tpu_custom_call.1} parent=1 // loop_pre_header
      _
    $region3: #{tpu_custom_call.1} parent=1 // loop_header
      %s18 = sphi 0, %s22
      %p19 = scmp.ge.s32.totalorder %s18, 4
      %s28 = sphi 0, %s30
      %s31 = sphi 0, %s28
      %s32 = sphi 0, %s31
      %s48 = sphi 0, %s32
      %s52 = sphi 0, %s52
      %s54 = sphi 0, %s52
      %s55 = sphi 0, %s54
      %s69 = sphi 0, %s55
      %s73 = sphi 0, %s73
      %s75 = sphi 0, %s73
      %s76 = sphi 0, %s75
      %s90 = sphi 0, %s76
      %s94 = sphi 0, %s94
      %s96 = sphi 0, %s94
      %s97 = sphi 0, %s96
      %s111 = sphi 0, %s97
      %s115 = sphi 0, %s115
      %s117 = sphi 0, %s115
      %s118 = sphi 0, %s117
      %s132 = sphi 0, %s118
      %s136 = sphi 0, %s136
      %s138 = sphi 0, %s136
      %s139 = sphi 0, %s138
      %s153 = sphi 0, %s139
      %s157 = sphi 0, %s157
      %s159 = sphi 0, %s157
      %s160 = sphi 0, %s159
      %s174 = sphi 0, %s160
      %s178 = sphi 0, %s178
      %s180 = sphi 0, %s178
      %s181 = sphi 0, %s180
      %s195 = sphi 0, %s181
      %s199 = sphi 0, %s199
      %s201 = sphi 0, %s199
      %s202 = sphi 0, %s201
      %s216 = sphi 0, %s202
      %s222 = sphi 0, %s224
      %s225 = sphi 0, %s222
      %s226 = sphi 0, %s225
      %s242 = sphi 0, %s226
    $region4: #{tpu_custom_call.1} parent=1 // loop_header_branch
      %21 = sbr.rel (%p19) target = $region8
    $region5: #{tpu_custom_call.1} parent=1 // loop_body
      %s23 = ssub.s32 %s18, 1
      %s24 = ssub.s32 %s18, 2
      %s25 = sadd.s32 %s18, 1
      %s26 = ssub.s32 %s18, %s25
      %p27 = scmp.eq.s32.totalorder %s26, 0
      %s29 = sadd.s32 %s28, 1
      %s30 = scalar_select %p27, %s28, %s29
      %p33 = pneg %p27
      %p34 = scmp.eq.s32.totalorder %s18, 1
      %p35 = por %p33, %p34
      %p36 = scmp.ne.s32.totalorder %s28, %s31
      %p37 = scmp.eq.s32.totalorder %s18, 0
      %p38 = por %p36, %p37
      %p39 = scmp.ne.s32.totalorder %s28, %s31
      %p40 = scmp.eq.s32.totalorder %s23, 1
      %p41 = por %p39, %p40
      %p42 = scmp.ne.s32.totalorder %s31, %s32
      %p43 = scmp.eq.s32.totalorder %s23, 0
      %p44 = por %p42, %p43
      %p45 = scmp.ne.s32.totalorder %s31, %s32
      %p46 = scmp.eq.s32.totalorder %s24, 1
      %p47 = por %p45, %p46
      %p49 = scmp.ne.s32.totalorder %s32, %s48
      %p50 = scmp.eq.s32.totalorder %s24, 0
      %p51 = por %p49, %p50
      %s53 = sadd.s32 %s52, 1
      %p56 = scmp.eq.s32.totalorder %s18, 1
      %p57 = scmp.ne.s32.totalorder %s52, %s54
      %p58 = scmp.eq.s32.totalorder %s18, 0
      %p59 = por %p57, %p58
      %p60 = scmp.ne.s32.totalorder %s52, %s54
      %p61 = scmp.eq.s32.totalorder %s23, 1
      %p62 = por %p60, %p61
      %p63 = scmp.ne.s32.totalorder %s54, %s55
      %p64 = scmp.eq.s32.totalorder %s23, 0
      %p65 = por %p63, %p64
      %p66 = scmp.ne.s32.totalorder %s54, %s55
      %p67 = scmp.eq.s32.totalorder %s24, 1
      %p68 = por %p66, %p67
      %p70 = scmp.ne.s32.totalorder %s55, %s69
      %p71 = scmp.eq.s32.totalorder %s24, 0
      %p72 = por %p70, %p71
      %s74 = sadd.s32 %s73, 1
      %p77 = scmp.eq.s32.totalorder %s18, 1
      %p78 = scmp.ne.s32.totalorder %s73, %s75
      %p79 = scmp.eq.s32.totalorder %s18, 0
      %p80 = por %p78, %p79
      %p81 = scmp.ne.s32.totalorder %s73, %s75
      %p82 = scmp.eq.s32.totalorder %s23, 1
      %p83 = por %p81, %p82
      %p84 = scmp.ne.s32.totalorder %s75, %s76
      %p85 = scmp.eq.s32.totalorder %s23, 0
      %p86 = por %p84, %p85
      %p87 = scmp.ne.s32.totalorder %s75, %s76
      %p88 = scmp.eq.s32.totalorder %s24, 1
      %p89 = por %p87, %p88
      %p91 = scmp.ne.s32.totalorder %s76, %s90
      %p92 = scmp.eq.s32.totalorder %s24, 0
      %p93 = por %p91, %p92
      %s95 = sadd.s32 %s94, 1
      %p98 = scmp.eq.s32.totalorder %s18, 1
      %p99 = scmp.ne.s32.totalorder %s94, %s96
      %p100 = scmp.eq.s32.totalorder %s18, 0
      %p101 = por %p99, %p100
      %p102 = scmp.ne.s32.totalorder %s94, %s96
      %p103 = scmp.eq.s32.totalorder %s23, 1
      %p104 = por %p102, %p103
      %p105 = scmp.ne.s32.totalorder %s96, %s97
      %p106 = scmp.eq.s32.totalorder %s23, 0
      %p107 = por %p105, %p106
      %p108 = scmp.ne.s32.totalorder %s96, %s97
      %p109 = scmp.eq.s32.totalorder %s24, 1
      %p110 = por %p108, %p109
      %p112 = scmp.ne.s32.totalorder %s97, %s111
      %p113 = scmp.eq.s32.totalorder %s24, 0
      %p114 = por %p112, %p113
      %s116 = sadd.s32 %s115, 1
      %p119 = scmp.eq.s32.totalorder %s18, 1
      %p120 = scmp.ne.s32.totalorder %s115, %s117
      %p121 = scmp.eq.s32.totalorder %s18, 0
      %p122 = por %p120, %p121
      %p123 = scmp.ne.s32.totalorder %s115, %s117
      %p124 = scmp.eq.s32.totalorder %s23, 1
      %p125 = por %p123, %p124
      %p126 = scmp.ne.s32.totalorder %s117, %s118
      %p127 = scmp.eq.s32.totalorder %s23, 0
      %p128 = por %p126, %p127
      %p129 = scmp.ne.s32.totalorder %s117, %s118
      %p130 = scmp.eq.s32.totalorder %s24, 1
      %p131 = por %p129, %p130
      %p133 = scmp.ne.s32.totalorder %s118, %s132
      %p134 = scmp.eq.s32.totalorder %s24, 0
      %p135 = por %p133, %p134
      %s137 = sadd.s32 %s136, 1
      %p140 = scmp.eq.s32.totalorder %s18, 1
      %p141 = scmp.ne.s32.totalorder %s136, %s138
      %p142 = scmp.eq.s32.totalorder %s18, 0
      %p143 = por %p141, %p142
      %p144 = scmp.ne.s32.totalorder %s136, %s138
      %p145 = scmp.eq.s32.totalorder %s23, 1
      %p146 = por %p144, %p145
      %p147 = scmp.ne.s32.totalorder %s138, %s139
      %p148 = scmp.eq.s32.totalorder %s23, 0
      %p149 = por %p147, %p148
      %p150 = scmp.ne.s32.totalorder %s138, %s139
      %p151 = scmp.eq.s32.totalorder %s24, 1
      %p152 = por %p150, %p151
      %p154 = scmp.ne.s32.totalorder %s139, %s153
      %p155 = scmp.eq.s32.totalorder %s24, 0
      %p156 = por %p154, %p155
      %s158 = sadd.s32 %s157, 1
      %p161 = scmp.eq.s32.totalorder %s18, 1
      %p162 = scmp.ne.s32.totalorder %s157, %s159
      %p163 = scmp.eq.s32.totalorder %s18, 0
      %p164 = por %p162, %p163
      %p165 = scmp.ne.s32.totalorder %s157, %s159
      %p166 = scmp.eq.s32.totalorder %s23, 1
      %p167 = por %p165, %p166
      %p168 = scmp.ne.s32.totalorder %s159, %s160
      %p169 = scmp.eq.s32.totalorder %s23, 0
      %p170 = por %p168, %p169
      %p171 = scmp.ne.s32.totalorder %s159, %s160
      %p172 = scmp.eq.s32.totalorder %s24, 1
      %p173 = por %p171, %p172
      %p175 = scmp.ne.s32.totalorder %s160, %s174
      %p176 = scmp.eq.s32.totalorder %s24, 0
      %p177 = por %p175, %p176
      %s179 = sadd.s32 %s178, 1
      %p182 = scmp.eq.s32.totalorder %s18, 1
      %p183 = scmp.ne.s32.totalorder %s178, %s180
      %p184 = scmp.eq.s32.totalorder %s18, 0
      %p185 = por %p183, %p184
      %p186 = scmp.ne.s32.totalorder %s178, %s180
      %p187 = scmp.eq.s32.totalorder %s23, 1
      %p188 = por %p186, %p187
      %p189 = scmp.ne.s32.totalorder %s180, %s181
      %p190 = scmp.eq.s32.totalorder %s23, 0
      %p191 = por %p189, %p190
      %p192 = scmp.ne.s32.totalorder %s180, %s181
      %p193 = scmp.eq.s32.totalorder %s24, 1
      %p194 = por %p192, %p193
      %p196 = scmp.ne.s32.totalorder %s181, %s195
      %p197 = scmp.eq.s32.totalorder %s24, 0
      %p198 = por %p196, %p197
      %s200 = sadd.s32 %s199, 1
      %p203 = scmp.eq.s32.totalorder %s18, 1
      %p204 = scmp.ne.s32.totalorder %s199, %s201
      %p205 = scmp.eq.s32.totalorder %s18, 0
      %p206 = por %p204, %p205
      %p207 = scmp.ne.s32.totalorder %s199, %s201
      %p208 = scmp.eq.s32.totalorder %s23, 1
      %p209 = por %p207, %p208
      %p210 = scmp.ne.s32.totalorder %s201, %s202
      %p211 = scmp.eq.s32.totalorder %s23, 0
      %p212 = por %p210, %p211
      %p213 = scmp.ne.s32.totalorder %s201, %s202
      %p214 = scmp.eq.s32.totalorder %s24, 1
      %p215 = por %p213, %p214
      %p217 = scmp.ne.s32.totalorder %s202, %s216
      %p218 = scmp.eq.s32.totalorder %s24, 0
      %p219 = por %p217, %p218
      %s220 = ssub.s32 %s18, %s25
      %p221 = scmp.eq.s32.totalorder %s220, 0
      %s223 = sadd.s32 %s222, 1
      %s224 = scalar_select %p221, %s222, %s223
      %p227 = pneg %p221
      %p228 = scmp.eq.s32.totalorder %s18, 1
      %p229 = por %p227, %p228
      %p230 = scmp.ne.s32.totalorder %s222, %s225
      %p231 = scmp.eq.s32.totalorder %s18, 0
      %p232 = por %p230, %p231
      %p233 = scmp.ne.s32.totalorder %s222, %s225
      %p234 = scmp.eq.s32.totalorder %s23, 1
      %p235 = por %p233, %p234
      %p236 = scmp.ne.s32.totalorder %s225, %s226
      %p237 = scmp.eq.s32.totalorder %s23, 0
      %p238 = por %p236, %p237
      %p239 = scmp.ne.s32.totalorder %s225, %s226
      %p240 = scmp.eq.s32.totalorder %s24, 1
      %p241 = por %p239, %p240
      %p243 = scmp.ne.s32.totalorder %s226, %s242
      %p244 = scmp.eq.s32.totalorder %s24, 0
      %p245 = por %p243, %p244
      %p246 = scmp.le.s32.totalorder 1, %s18
      %p247 = scmp.lt.s32.totalorder %s18, 3
      %p248 = pnand %p246, %p247
      %p249 = pneg %p248
      // Predicated region
      $region9: #{tpu_custom_call.1} parent=5 // pred_check
        _
      $region10: #{tpu_custom_call.1} parent=5 // pred_check_branch
        %251 = sbr.rel (%p248) target = $region12
      $region11: #{tpu_custom_call.1} parent=5 // pred_region
        %s252 = ssub.s32 %s18, 1
        // Predicated region
        $region13: #{tpu_custom_call.1} parent=11 // pred_check
          %p253 = pneg %p65
        $region14: #{tpu_custom_call.1} parent=11 // pred_check_branch
          %255 = sbr.rel (%p253) target = $region16
        $region15: #{tpu_custom_call.1} parent=11 // pred_region
          _
        $region16: #{tpu_custom_call.1} parent=11 // pred_fallthru
          _
        // Predicated region
        $region17: #{tpu_custom_call.1} parent=11 // pred_check
          %p256 = pneg %p86
        $region18: #{tpu_custom_call.1} parent=11 // pred_check_branch
          %258 = sbr.rel (%p256) target = $region20
        $region19: #{tpu_custom_call.1} parent=11 // pred_region
          _
        $region20: #{tpu_custom_call.1} parent=11 // pred_fallthru
          _
        // Predicated region
        $region21: #{tpu_custom_call.1} parent=11 // pred_check
          %p259 = pneg %p107
        $region22: #{tpu_custom_call.1} parent=11 // pred_check_branch
          %261 = sbr.rel (%p259) target = $region24
        $region23: #{tpu_custom_call.1} parent=11 // pred_region
          _
        $region24: #{tpu_custom_call.1} parent=11 // pred_fallthru
          _
        // Predicated region
        $region25: #{tpu_custom_call.1} parent=11 // pred_check
          %p262 = pneg %p128
        $region26: #{tpu_custom_call.1} parent=11 // pred_check_branch
          %264 = sbr.rel (%p262) target = $region28
        $region27: #{tpu_custom_call.1} parent=11 // pred_region
          _
        $region28: #{tpu_custom_call.1} parent=11 // pred_fallthru
          _
        // Predicated region
        $region29: #{tpu_custom_call.1} parent=11 // pred_check
          %p265 = pneg %p149
        $region30: #{tpu_custom_call.1} parent=11 // pred_check_branch
          %267 = sbr.rel (%p265) target = $region32
        $region31: #{tpu_custom_call.1} parent=11 // pred_region
          _
        $region32: #{tpu_custom_call.1} parent=11 // pred_fallthru
          _
        // Predicated region
        $region33: #{tpu_custom_call.1} parent=11 // pred_check
          %p268 = pneg %p170
        $region34: #{tpu_custom_call.1} parent=11 // pred_check_branch
          %270 = sbr.rel (%p268) target = $region36
        $region35: #{tpu_custom_call.1} parent=11 // pred_region
          _
        $region36: #{tpu_custom_call.1} parent=11 // pred_fallthru
          _
        // Predicated region
        $region37: #{tpu_custom_call.1} parent=11 // pred_check
          %p271 = pneg %p191
        $region38: #{tpu_custom_call.1} parent=11 // pred_check_branch
          %273 = sbr.rel (%p271) target = $region40
        $region39: #{tpu_custom_call.1} parent=11 // pred_region
          _
        $region40: #{tpu_custom_call.1} parent=11 // pred_fallthru
          _
        // Predicated region
        $region41: #{tpu_custom_call.1} parent=11 // pred_check
          %p274 = pneg %p212
        $region42: #{tpu_custom_call.1} parent=11 // pred_check_branch
          %276 = sbr.rel (%p274) target = $region44
        $region43: #{tpu_custom_call.1} parent=11 // pred_region
          _
        $region44: #{tpu_custom_call.1} parent=11 // pred_fallthru
          _
      $region12: #{tpu_custom_call.1} parent=5 // pred_fallthru
        _
      %p277 = scmp.lt.s32.totalorder %s18, 2
      // Predicated region
      $region45: #{tpu_custom_call.1} parent=5 // pred_check
        %p278 = pneg %p277
      $region46: #{tpu_custom_call.1} parent=5 // pred_check_branch
        %280 = sbr.rel (%p278) target = $region48
      $region47: #{tpu_custom_call.1} parent=5 // pred_region
        // Predicated region
        $region49: #{tpu_custom_call.1} parent=47 // pred_check
          %p281 = pneg %p38
        $region50: #{tpu_custom_call.1} parent=47 // pred_check_branch
          %283 = sbr.rel (%p281) target = $region52
        $region51: #{tpu_custom_call.1} parent=47 // pred_region
          %s284 = smul.u32 2, %s18
          %p285 = scmp.lt.s32.totalorder %s284, 3
          %s286 = scalar_select %p285, %s284, 3
          %s287 = smul.addr %s286, 3
          %s288 = smul.addr %s287, 4
          %s289 = scalar_lea.vmem %s0, %s288
          %s290 = smul.u32 2, %s18
        $region52: #{tpu_custom_call.1} parent=47 // pred_fallthru
          _
      $region48: #{tpu_custom_call.1} parent=5 // pred_fallthru
        _
      %p291 = scmp.le.s32.totalorder 1, %s18
      %p292 = scmp.lt.s32.totalorder %s18, 3
      %p293 = pnand %p291, %p292
      %p294 = pneg %p293
      // Predicated region
      $region53: #{tpu_custom_call.1} parent=5 // pred_check
        _
      $region54: #{tpu_custom_call.1} parent=5 // pred_check_branch
        %296 = sbr.rel (%p293) target = $region56
      $region55: #{tpu_custom_call.1} parent=5 // pred_region
        %s297 = ssub.s32 %s18, 1
        %s298 = smul.u32 2, %s23
        %p299 = scmp.lt.s32.totalorder %s298, 3
        %s300 = scalar_select %p299, %s298, 3
        %s301 = smul.addr %s300, 3
        %s302 = smul.addr %s301, 4
        %s303 = scalar_lea.vmem %s0, %s302
        %p304 = pneg %p44
        %p305 = pneg %p41
        %p306 = pneg %p65
        %p307 = pneg %p62
        %p308 = pneg %p86
        %p309 = pneg %p83
        %p310 = pneg %p107
        %p311 = pneg %p104
        %p312 = pneg %p128
        %p313 = pneg %p125
        %p314 = pneg %p149
        %p315 = pneg %p146
        %p316 = pneg %p170
        %p317 = pneg %p167
        %p318 = pneg %p191
        %p319 = pneg %p188
        %p320 = pneg %p212
        %p321 = pneg %p209
        %p322 = pneg %p238
        %p323 = pneg %p235
        %s324 = sand.u32 %s225, 1
        %s325 = scalar_lea.sflag [#allocation3], %s324
        %s326 = sand.u32 %s225, 1
        %s327 = smul.addr %s326, 16
        %s328 = scalar_lea.vmem [#allocation2], %s327
        %s329 = smul.u32 2, %s23
        %p330 = scmp.lt.s32.totalorder %s329, 3
        %s331 = scalar_select %p330, %s329, 3
        %s332 = smul.addr %s331, 3
        %s333 = smul.addr %s332, 4
        %s334 = scalar_lea.vmem %s0, %s333
        %s335 = smul.u32 2, %s23
        %s336 = smul.u32 2, %s23
        %v337 = vld [vmem:[%s1] sm:$0x3]
        %v338 = vld [vmem:[%s2] sm:$0x3]
        %v339 = vld [vmem:[%s334] sm:$0xff]
        %v340 = vld [vmem:[%s334 + $0x8] sm:$0xf]
        %v342 = vlaneseq
        %v343 = vshrl.u32 %v342, 7
        %v344 = vsub.s32 0, %v343
        %v345 = vrot.slane %v337, %v344
        %v346 = vlaneseq
        %v347 = vshrl.u32 %v346, 7
        %v348 = vsub.s32 1, %v347
        %v349 = vrot.slane %v337, %v348
        %v350 = vcombine.low %v345, %v349
        %v352 = vmul.f32 %v339, %v350
        %v354 = vlaneseq
        %v355 = vshrl.u32 %v354, 7
        %v356 = vsub.s32 0, %v355
        %v357 = vrot.slane %v338, %v356
        %v358 = vlaneseq
        %v359 = vshrl.u32 %v358, 7
        %v360 = vsub.s32 1, %v359
        %v361 = vrot.slane %v338, %v360
        %v362 = vcombine.low %v357, %v361
        %363 = vrot.lane.b32.xlu0 %v362, 2
        %v364 = vpop.permute.xlu0 %363
        %v365 = vrot.slane %v364, 4
        %vm366 = vcmask 15360
        %v367 = vsel %vm366, %v365, %v364
        %v370 = vmul.f32 %v339, %v367
        %v371 = vmul.f32 %v340, %v365
        %372 = vrot.lane.b32.xlu0 %v350, 16
        %v373 = vpop.permute.xlu0 %372
        %v374 = vrot.slane %v373, 4
        %vm375 = vcmask 130048
        %v376 = vsel %vm375, %v374, %v373
        %v379 = vmul.f32 %v339, %v376
        %v380 = vmul.f32 %v340, %v374
        %381 = vrot.lane.b32.xlu0 %v362, 18
        %v382 = vpop.permute.xlu0 %381
        %v383 = vrot.slane %v382, 4
        %vm384 = vcmask 146432
        %v385 = vsel %vm384, %v383, %v382
        %v388 = vmul.f32 %v339, %v385
        %v389 = vmul.f32 %v340, %v383
        %390 = vrot.lane.b32.xlu0 %v350, 32
        %v391 = vpop.permute.xlu0 %390
        %v392 = vrot.slane %v391, 4
        %vm393 = vcmask 261120
        %v394 = vsel %vm393, %v392, %v391
        %v397 = vmul.f32 %v339, %v394
        %v398 = vmul.f32 %v340, %v392
        %399 = vrot.lane.b32.xlu0 %v362, 34
        %v400 = vpop.permute.xlu0 %399
        %v401 = vrot.slane %v400, 4
        %vm402 = vcmask 277504
        %v403 = vsel %vm402, %v401, %v400
        %v406 = vmul.f32 %v339, %v403
        %v407 = vmul.f32 %v340, %v401
        %v408 = vld [vmem:[%s3] sm:$0xff]
        %s409 = scalar_lea.vmem %s3, 8
        %v410 = vld [vmem:[%s409] sm:$0xff]
        %v413 = vcombine.high %v339, %v339
        %414 = vrot.lane.b32.xlu0 %v339, 127
        %v415 = vpop.permute.xlu0 %414
        %416 = vrot.lane.b32.xlu0 %v413, 127
        %v417 = vpop.permute.xlu0 %416
        %418 = vrot.lane.b32.xlu0 %v340, 127
        %v419 = vpop.permute.xlu0 %418
        %vm420 = vcmask 1039360
        %v421 = vsel %vm420, %v415, %v417
        %v422 = vsel %vm420, %v417, %v419
        %vm423 = vcmask 31744
        %v425 = vsel %vm423, %v410, 0
        %vm427 = vcmask 1043456
        %v428 = vsel %vm427, %v421, 0
        %v430 = vsel %vm427, %v422, 0
        %432 = vmatprep.subr.mxu0 0.0
        %433 = vmatpush1.msra.mxu0 0.0
        %434 = vmatprep.subr.mxu0 0.0
        %435 = vmatpush1.msra.mxu0 0.0
        %436 = vmatprep.subr.mxu0 0.0
        %437 = vmatpush1.msra.mxu0 0.0
        %438 = vmatprep.subr.mxu0 0.0
        %439 = vmatpush1.msra.mxu0 0.0
        %440 = vmatprep.subr.mxu0 0.0
        %441 = vmatpush1.msra.mxu0 0.0
        %442 = vmatprep.subr.mxu0 0.0
        %443 = vmatpush1.msra.mxu0 0.0
        %444 = vmatprep.subr.mxu0 0.0
        %445 = vmatpush1.msra.mxu0 0.0
        %446 = vmatprep.subr.mxu0 0.0
        %447 = vmatpush1.msra.mxu0 0.0
        %448 = vmatprep.subr.mxu0 0.0
        %449 = vmatpush1.msra.mxu0 0.0
        %450 = vmatprep.subr.mxu0 0.0
        %451 = vmatpush1.msra.mxu0 0.0
        %452 = vmatprep.subr.mxu0 0.0
        %453 = vmatpush1.msra.mxu0 0.0
        %454 = vmatprep.subr.mxu0 0.0
        %455 = vmatpush1.msra.mxu0 0.0
        %456 = vmatprep.subr.mxu0 0.0
        %457 = vmatpush1.msra.mxu0 0.0
        %458 = vmatprep.subr.mxu0 0.0
        %459 = vmatpush1.msra.mxu0 0.0
        %460 = vmatprep.subr.mxu0 0.0
        %461 = vmatpush1.msra.mxu0 0.0
        %462 = vmatprep.subr.mxu0 %v430
        %463 = vmatpush1.msra.mxu0 %v428
        %464 = vmatprep.subr.mxu0 0.0
        %465 = vmatpush2.msra.mxu0 0.0
        %466 = vmatprep.subr.mxu0 0.0
        %467 = vmatpush2.msra.mxu0 0.0
        %468 = vmatprep.subr.mxu0 0.0
        %469 = vmatpush2.msra.mxu0 0.0
        %470 = vmatprep.subr.mxu0 0.0
        %471 = vmatpush2.msra.mxu0 0.0
        %472 = vmatprep.subr.mxu0 0.0
        %473 = vmatpush2.msra.mxu0 0.0
        %474 = vmatprep.subr.mxu0 0.0
        %475 = vmatpush2.msra.mxu0 0.0
        %476 = vmatprep.subr.mxu0 0.0
        %477 = vmatpush2.msra.mxu0 0.0
        %478 = vmatprep.subr.mxu0 0.0
        %479 = vmatpush2.msra.mxu0 0.0
        %480 = vmatprep.subr.mxu0 0.0
        %481 = vmatpush2.msra.mxu0 0.0
        %482 = vmatprep.subr.mxu0 0.0
        %483 = vmatpush2.msra.mxu0 0.0
        %484 = vmatprep.subr.mxu0 0.0
        %485 = vmatpush2.msra.mxu0 0.0
        %486 = vmatprep.subr.mxu0 0.0
        %487 = vmatpush2.msra.mxu0 0.0
        %488 = vmatprep.subr.mxu0 0.0
        %489 = vmatpush2.msra.mxu0 0.0
        %490 = vmatprep.subr.mxu0 0.0
        %491 = vmatpush2.msra.mxu0 0.0
        %492 = vmatprep.subr.mxu0 0.0
        %493 = vmatpush2.msra.mxu0 0.0
        %494 = vmatprep.subr.mxu0 0.0
        %495 = vmatpush2.msra.mxu0 0.0
        %496 = vmatprep.mubr.f32.mxu0 0.0
        %497 = vmatmul.mubr.f32.gmra.mxu0 %v425
        %v498 = vpop.f32.mrf.mxu0
        %v499 = vadd.f32 0.0, %v498
        %v500 = vpop.f32.mrf.mxu0
        %v501 = vadd.f32 0.0, %v500
        %502 = vdwg.mxu0
        %v504 = vcombine.high %v352, %v352
        %v506 = vsel %vm423, %v408, 0
        %v508 = vsel %vm427, %v352, 0
        %v510 = vsel %vm427, %v504, 0
        %512 = vmatprep.subr.mxu0 0.0
        %513 = vmatpush1.msra.mxu0 0.0
        %514 = vmatprep.subr.mxu0 0.0
        %515 = vmatpush1.msra.mxu0 0.0
        %516 = vmatprep.subr.mxu0 0.0
        %517 = vmatpush1.msra.mxu0 0.0
        %518 = vmatprep.subr.mxu0 0.0
        %519 = vmatpush1.msra.mxu0 0.0
        %520 = vmatprep.subr.mxu0 0.0
        %521 = vmatpush1.msra.mxu0 0.0
        %522 = vmatprep.subr.mxu0 0.0
        %523 = vmatpush1.msra.mxu0 0.0
        %524 = vmatprep.subr.mxu0 0.0
        %525 = vmatpush1.msra.mxu0 0.0
        %526 = vmatprep.subr.mxu0 0.0
        %527 = vmatpush1.msra.mxu0 0.0
        %528 = vmatprep.subr.mxu0 0.0
        %529 = vmatpush1.msra.mxu0 0.0
        %530 = vmatprep.subr.mxu0 0.0
        %531 = vmatpush1.msra.mxu0 0.0
        %532 = vmatprep.subr.mxu0 0.0
        %533 = vmatpush1.msra.mxu0 0.0
        %534 = vmatprep.subr.mxu0 0.0
        %535 = vmatpush1.msra.mxu0 0.0
        %536 = vmatprep.subr.mxu0 0.0
        %537 = vmatpush1.msra.mxu0 0.0
        %538 = vmatprep.subr.mxu0 0.0
        %539 = vmatpush1.msra.mxu0 0.0
        %540 = vmatprep.subr.mxu0 0.0
        %541 = vmatpush1.msra.mxu0 0.0
        %542 = vmatprep.subr.mxu0 %v510
        %543 = vmatpush1.msra.mxu0 %v508
        %544 = vmatprep.subr.mxu0 0.0
        %545 = vmatpush2.msra.mxu0 0.0
        %546 = vmatprep.subr.mxu0 0.0
        %547 = vmatpush2.msra.mxu0 0.0
        %548 = vmatprep.subr.mxu0 0.0
        %549 = vmatpush2.msra.mxu0 0.0
        %550 = vmatprep.subr.mxu0 0.0
        %551 = vmatpush2.msra.mxu0 0.0
        %552 = vmatprep.subr.mxu0 0.0
        %553 = vmatpush2.msra.mxu0 0.0
        %554 = vmatprep.subr.mxu0 0.0
        %555 = vmatpush2.msra.mxu0 0.0
        %556 = vmatprep.subr.mxu0 0.0
        %557 = vmatpush2.msra.mxu0 0.0
        %558 = vmatprep.subr.mxu0 0.0
        %559 = vmatpush2.msra.mxu0 0.0
        %560 = vmatprep.subr.mxu0 0.0
        %561 = vmatpush2.msra.mxu0 0.0
        %562 = vmatprep.subr.mxu0 0.0
        %563 = vmatpush2.msra.mxu0 0.0
        %564 = vmatprep.subr.mxu0 0.0
        %565 = vmatpush2.msra.mxu0 0.0
        %566 = vmatprep.subr.mxu0 0.0
        %567 = vmatpush2.msra.mxu0 0.0
        %568 = vmatprep.subr.mxu0 0.0
        %569 = vmatpush2.msra.mxu0 0.0
        %570 = vmatprep.subr.mxu0 0.0
        %571 = vmatpush2.msra.mxu0 0.0
        %572 = vmatprep.subr.mxu0 0.0
        %573 = vmatpush2.msra.mxu0 0.0
        %574 = vmatprep.subr.mxu0 0.0
        %575 = vmatpush2.msra.mxu0 0.0
        %576 = vmatprep.mubr.f32.mxu0 0.0
        %577 = vmatmul.mubr.f32.gmra.mxu0 %v506
        %v578 = vpop.f32.mrf.mxu0
        %v579 = vadd.f32 %v499, %v578
        %v580 = vpop.f32.mrf.mxu0
        %v581 = vadd.f32 %v501, %v580
        %582 = vdwg.mxu0
        %s583 = scalar_lea.vmem %s3, 16
        %v584 = vld [vmem:[%s583] sm:$0xff]
        %v587 = vcombine.high %v370, %v370
        %588 = vrot.lane.b32.xlu0 %v370, 126
        %v589 = vpop.permute.xlu0 %588
        %590 = vrot.lane.b32.xlu0 %v587, 126
        %v591 = vpop.permute.xlu0 %590
        %592 = vrot.lane.b32.xlu0 %v371, 126
        %v593 = vpop.permute.xlu0 %592
        %vm594 = vcmask 1031168
        %v595 = vsel %vm594, %v589, %v591
        %v596 = vsel %vm594, %v591, %v593
        %v598 = vsel %vm423, %v584, 0
        %v600 = vsel %vm427, %v595, 0
        %v602 = vsel %vm427, %v596, 0
        %604 = vmatprep.subr.mxu0 0.0
        %605 = vmatpush1.msra.mxu0 0.0
        %606 = vmatprep.subr.mxu0 0.0
        %607 = vmatpush1.msra.mxu0 0.0
        %608 = vmatprep.subr.mxu0 0.0
        %609 = vmatpush1.msra.mxu0 0.0
        %610 = vmatprep.subr.mxu0 0.0
        %611 = vmatpush1.msra.mxu0 0.0
        %612 = vmatprep.subr.mxu0 0.0
        %613 = vmatpush1.msra.mxu0 0.0
        %614 = vmatprep.subr.mxu0 0.0
        %615 = vmatpush1.msra.mxu0 0.0
        %616 = vmatprep.subr.mxu0 0.0
        %617 = vmatpush1.msra.mxu0 0.0
        %618 = vmatprep.subr.mxu0 0.0
        %619 = vmatpush1.msra.mxu0 0.0
        %620 = vmatprep.subr.mxu0 0.0
        %621 = vmatpush1.msra.mxu0 0.0
        %622 = vmatprep.subr.mxu0 0.0
        %623 = vmatpush1.msra.mxu0 0.0
        %624 = vmatprep.subr.mxu0 0.0
        %625 = vmatpush1.msra.mxu0 0.0
        %626 = vmatprep.subr.mxu0 0.0
        %627 = vmatpush1.msra.mxu0 0.0
        %628 = vmatprep.subr.mxu0 0.0
        %629 = vmatpush1.msra.mxu0 0.0
        %630 = vmatprep.subr.mxu0 0.0
        %631 = vmatpush1.msra.mxu0 0.0
        %632 = vmatprep.subr.mxu0 0.0
        %633 = vmatpush1.msra.mxu0 0.0
        %634 = vmatprep.subr.mxu0 %v602
        %635 = vmatpush1.msra.mxu0 %v600
        %636 = vmatprep.subr.mxu0 0.0
        %637 = vmatpush2.msra.mxu0 0.0
        %638 = vmatprep.subr.mxu0 0.0
        %639 = vmatpush2.msra.mxu0 0.0
        %640 = vmatprep.subr.mxu0 0.0
        %641 = vmatpush2.msra.mxu0 0.0
        %642 = vmatprep.subr.mxu0 0.0
        %643 = vmatpush2.msra.mxu0 0.0
        %644 = vmatprep.subr.mxu0 0.0
        %645 = vmatpush2.msra.mxu0 0.0
        %646 = vmatprep.subr.mxu0 0.0
        %647 = vmatpush2.msra.mxu0 0.0
        %648 = vmatprep.subr.mxu0 0.0
        %649 = vmatpush2.msra.mxu0 0.0
        %650 = vmatprep.subr.mxu0 0.0
        %651 = vmatpush2.msra.mxu0 0.0
        %652 = vmatprep.subr.mxu0 0.0
        %653 = vmatpush2.msra.mxu0 0.0
        %654 = vmatprep.subr.mxu0 0.0
        %655 = vmatpush2.msra.mxu0 0.0
        %656 = vmatprep.subr.mxu0 0.0
        %657 = vmatpush2.msra.mxu0 0.0
        %658 = vmatprep.subr.mxu0 0.0
        %659 = vmatpush2.msra.mxu0 0.0
        %660 = vmatprep.subr.mxu0 0.0
        %661 = vmatpush2.msra.mxu0 0.0
        %662 = vmatprep.subr.mxu0 0.0
        %663 = vmatpush2.msra.mxu0 0.0
        %664 = vmatprep.subr.mxu0 0.0
        %665 = vmatpush2.msra.mxu0 0.0
        %666 = vmatprep.subr.mxu0 0.0
        %667 = vmatpush2.msra.mxu0 0.0
        %668 = vmatprep.mubr.f32.mxu0 0.0
        %669 = vmatmul.mubr.f32.gmra.mxu0 %v598
        %v670 = vpop.f32.mrf.mxu0
        %v671 = vadd.f32 0.0, %v670
        %v672 = vpop.f32.mrf.mxu0
        %v673 = vadd.f32 0.0, %v672
        %674 = vdwg.mxu0
        %v675 = vadd.f32 %v579, %v671
        %v676 = vadd.f32 %v581, %v673
        %s677 = scalar_lea.vmem %s3, 24
        %v678 = vld [vmem:[%s677] sm:$0xff]
        %v681 = vcombine.high %v379, %v379
        %682 = vrot.lane.b32.xlu0 %v379, 112
        %v683 = vpop.permute.xlu0 %682
        %684 = vrot.lane.b32.xlu0 %v681, 112
        %v685 = vpop.permute.xlu0 %684
        %686 = vrot.lane.b32.xlu0 %v380, 112
        %v687 = vpop.permute.xlu0 %686
        %vm688 = vcmask 916480
        %v689 = vsel %vm688, %v683, %v685
        %v690 = vsel %vm688, %v685, %v687
        %v692 = vsel %vm423, %v678, 0
        %v694 = vsel %vm427, %v689, 0
        %v696 = vsel %vm427, %v690, 0
        %698 = vmatprep.subr.mxu0 0.0
        %699 = vmatpush1.msra.mxu0 0.0
        %700 = vmatprep.subr.mxu0 0.0
        %701 = vmatpush1.msra.mxu0 0.0
        %702 = vmatprep.subr.mxu0 0.0
        %703 = vmatpush1.msra.mxu0 0.0
        %704 = vmatprep.subr.mxu0 0.0
        %705 = vmatpush1.msra.mxu0 0.0
        %706 = vmatprep.subr.mxu0 0.0
        %707 = vmatpush1.msra.mxu0 0.0
        %708 = vmatprep.subr.mxu0 0.0
        %709 = vmatpush1.msra.mxu0 0.0
        %710 = vmatprep.subr.mxu0 0.0
        %711 = vmatpush1.msra.mxu0 0.0
        %712 = vmatprep.subr.mxu0 0.0
        %713 = vmatpush1.msra.mxu0 0.0
        %714 = vmatprep.subr.mxu0 0.0
        %715 = vmatpush1.msra.mxu0 0.0
        %716 = vmatprep.subr.mxu0 0.0
        %717 = vmatpush1.msra.mxu0 0.0
        %718 = vmatprep.subr.mxu0 0.0
        %719 = vmatpush1.msra.mxu0 0.0
        %720 = vmatprep.subr.mxu0 0.0
        %721 = vmatpush1.msra.mxu0 0.0
        %722 = vmatprep.subr.mxu0 0.0
        %723 = vmatpush1.msra.mxu0 0.0
        %724 = vmatprep.subr.mxu0 0.0
        %725 = vmatpush1.msra.mxu0 0.0
        %726 = vmatprep.subr.mxu0 0.0
        %727 = vmatpush1.msra.mxu0 0.0
        %728 = vmatprep.subr.mxu0 %v696
        %729 = vmatpush1.msra.mxu0 %v694
        %730 = vmatprep.subr.mxu0 0.0
        %731 = vmatpush2.msra.mxu0 0.0
        %732 = vmatprep.subr.mxu0 0.0
        %733 = vmatpush2.msra.mxu0 0.0
        %734 = vmatprep.subr.mxu0 0.0
        %735 = vmatpush2.msra.mxu0 0.0
        %736 = vmatprep.subr.mxu0 0.0
        %737 = vmatpush2.msra.mxu0 0.0
        %738 = vmatprep.subr.mxu0 0.0
        %739 = vmatpush2.msra.mxu0 0.0
        %740 = vmatprep.subr.mxu0 0.0
        %741 = vmatpush2.msra.mxu0 0.0
        %742 = vmatprep.subr.mxu0 0.0
        %743 = vmatpush2.msra.mxu0 0.0
        %744 = vmatprep.subr.mxu0 0.0
        %745 = vmatpush2.msra.mxu0 0.0
        %746 = vmatprep.subr.mxu0 0.0
        %747 = vmatpush2.msra.mxu0 0.0
        %748 = vmatprep.subr.mxu0 0.0
        %749 = vmatpush2.msra.mxu0 0.0
        %750 = vmatprep.subr.mxu0 0.0
        %751 = vmatpush2.msra.mxu0 0.0
        %752 = vmatprep.subr.mxu0 0.0
        %753 = vmatpush2.msra.mxu0 0.0
        %754 = vmatprep.subr.mxu0 0.0
        %755 = vmatpush2.msra.mxu0 0.0
        %756 = vmatprep.subr.mxu0 0.0
        %757 = vmatpush2.msra.mxu0 0.0
        %758 = vmatprep.subr.mxu0 0.0
        %759 = vmatpush2.msra.mxu0 0.0
        %760 = vmatprep.subr.mxu0 0.0
        %761 = vmatpush2.msra.mxu0 0.0
        %762 = vmatprep.mubr.f32.mxu0 0.0
        %763 = vmatmul.mubr.f32.gmra.mxu0 %v692
        %v764 = vpop.f32.mrf.mxu0
        %v765 = vadd.f32 0.0, %v764
        %v766 = vpop.f32.mrf.mxu0
        %v767 = vadd.f32 0.0, %v766
        %768 = vdwg.mxu0
        %v769 = vadd.f32 %v675, %v765
        %v770 = vadd.f32 %v676, %v767
        %s771 = scalar_lea.vmem %s3, 32
        %v772 = vld [vmem:[%s771] sm:$0xff]
        %773 = vrot.lane.b32.xlu0 %v339, 111
        %v774 = vpop.permute.xlu0 %773
        %775 = vrot.lane.b32.xlu0 %v413, 111
        %v776 = vpop.permute.xlu0 %775
        %777 = vrot.lane.b32.xlu0 %v340, 111
        %v778 = vpop.permute.xlu0 %777
        %vm779 = vcmask 908288
        %v780 = vsel %vm779, %v774, %v776
        %v781 = vsel %vm779, %v776, %v778
        %v783 = vsel %vm423, %v772, 0
        %v785 = vsel %vm427, %v780, 0
        %v787 = vsel %vm427, %v781, 0
        %789 = vmatprep.subr.mxu0 0.0
        %790 = vmatpush1.msra.mxu0 0.0
        %791 = vmatprep.subr.mxu0 0.0
        %792 = vmatpush1.msra.mxu0 0.0
        %793 = vmatprep.subr.mxu0 0.0
        %794 = vmatpush1.msra.mxu0 0.0
        %795 = vmatprep.subr.mxu0 0.0
        %796 = vmatpush1.msra.mxu0 0.0
        %797 = vmatprep.subr.mxu0 0.0
        %798 = vmatpush1.msra.mxu0 0.0
        %799 = vmatprep.subr.mxu0 0.0
        %800 = vmatpush1.msra.mxu0 0.0
        %801 = vmatprep.subr.mxu0 0.0
        %802 = vmatpush1.msra.mxu0 0.0
        %803 = vmatprep.subr.mxu0 0.0
        %804 = vmatpush1.msra.mxu0 0.0
        %805 = vmatprep.subr.mxu0 0.0
        %806 = vmatpush1.msra.mxu0 0.0
        %807 = vmatprep.subr.mxu0 0.0
        %808 = vmatpush1.msra.mxu0 0.0
        %809 = vmatprep.subr.mxu0 0.0
        %810 = vmatpush1.msra.mxu0 0.0
        %811 = vmatprep.subr.mxu0 0.0
        %812 = vmatpush1.msra.mxu0 0.0
        %813 = vmatprep.subr.mxu0 0.0
        %814 = vmatpush1.msra.mxu0 0.0
        %815 = vmatprep.subr.mxu0 0.0
        %816 = vmatpush1.msra.mxu0 0.0
        %817 = vmatprep.subr.mxu0 0.0
        %818 = vmatpush1.msra.mxu0 0.0
        %819 = vmatprep.subr.mxu0 %v787
        %820 = vmatpush1.msra.mxu0 %v785
        %821 = vmatprep.subr.mxu0 0.0
        %822 = vmatpush2.msra.mxu0 0.0
        %823 = vmatprep.subr.mxu0 0.0
        %824 = vmatpush2.msra.mxu0 0.0
        %825 = vmatprep.subr.mxu0 0.0
        %826 = vmatpush2.msra.mxu0 0.0
        %827 = vmatprep.subr.mxu0 0.0
        %828 = vmatpush2.msra.mxu0 0.0
        %829 = vmatprep.subr.mxu0 0.0
        %830 = vmatpush2.msra.mxu0 0.0
        %831 = vmatprep.subr.mxu0 0.0
        %832 = vmatpush2.msra.mxu0 0.0
        %833 = vmatprep.subr.mxu0 0.0
        %834 = vmatpush2.msra.mxu0 0.0
        %835 = vmatprep.subr.mxu0 0.0
        %836 = vmatpush2.msra.mxu0 0.0
        %837 = vmatprep.subr.mxu0 0.0
        %838 = vmatpush2.msra.mxu0 0.0
        %839 = vmatprep.subr.mxu0 0.0
        %840 = vmatpush2.msra.mxu0 0.0
        %841 = vmatprep.subr.mxu0 0.0
        %842 = vmatpush2.msra.mxu0 0.0
        %843 = vmatprep.subr.mxu0 0.0
        %844 = vmatpush2.msra.mxu0 0.0
        %845 = vmatprep.subr.mxu0 0.0
        %846 = vmatpush2.msra.mxu0 0.0
        %847 = vmatprep.subr.mxu0 0.0
        %848 = vmatpush2.msra.mxu0 0.0
        %849 = vmatprep.subr.mxu0 0.0
        %850 = vmatpush2.msra.mxu0 0.0
        %851 = vmatprep.subr.mxu0 0.0
        %852 = vmatpush2.msra.mxu0 0.0
        %853 = vmatprep.mubr.f32.mxu0 0.0
        %854 = vmatmul.mubr.f32.gmra.mxu0 %v783
        %v855 = vpop.f32.mrf.mxu0
        %v856 = vadd.f32 0.0, %v855
        %v857 = vpop.f32.mrf.mxu0
        %v858 = vadd.f32 0.0, %v857
        %859 = vdwg.mxu0
        %v860 = vadd.f32 %v769, %v856
        %v861 = vadd.f32 %v770, %v858
        %s862 = scalar_lea.vmem %s3, 40
        %v863 = vld [vmem:[%s862] sm:$0xff]
        %v866 = vcombine.high %v388, %v388
        %867 = vrot.lane.b32.xlu0 %v388, 110
        %v868 = vpop.permute.xlu0 %867
        %869 = vrot.lane.b32.xlu0 %v866, 110
        %v870 = vpop.permute.xlu0 %869
        %871 = vrot.lane.b32.xlu0 %v389, 110
        %v872 = vpop.permute.xlu0 %871
        %vm873 = vcmask 900096
        %v874 = vsel %vm873, %v868, %v870
        %v875 = vsel %vm873, %v870, %v872
        %v877 = vsel %vm423, %v863, 0
        %v879 = vsel %vm427, %v874, 0
        %v881 = vsel %vm427, %v875, 0
        %883 = vmatprep.subr.mxu0 0.0
        %884 = vmatpush1.msra.mxu0 0.0
        %885 = vmatprep.subr.mxu0 0.0
        %886 = vmatpush1.msra.mxu0 0.0
        %887 = vmatprep.subr.mxu0 0.0
        %888 = vmatpush1.msra.mxu0 0.0
        %889 = vmatprep.subr.mxu0 0.0
        %890 = vmatpush1.msra.mxu0 0.0
        %891 = vmatprep.subr.mxu0 0.0
        %892 = vmatpush1.msra.mxu0 0.0
        %893 = vmatprep.subr.mxu0 0.0
        %894 = vmatpush1.msra.mxu0 0.0
        %895 = vmatprep.subr.mxu0 0.0
        %896 = vmatpush1.msra.mxu0 0.0
        %897 = vmatprep.subr.mxu0 0.0
        %898 = vmatpush1.msra.mxu0 0.0
        %899 = vmatprep.subr.mxu0 0.0
        %900 = vmatpush1.msra.mxu0 0.0
        %901 = vmatprep.subr.mxu0 0.0
        %902 = vmatpush1.msra.mxu0 0.0
        %903 = vmatprep.subr.mxu0 0.0
        %904 = vmatpush1.msra.mxu0 0.0
        %905 = vmatprep.subr.mxu0 0.0
        %906 = vmatpush1.msra.mxu0 0.0
        %907 = vmatprep.subr.mxu0 0.0
        %908 = vmatpush1.msra.mxu0 0.0
        %909 = vmatprep.subr.mxu0 0.0
        %910 = vmatpush1.msra.mxu0 0.0
        %911 = vmatprep.subr.mxu0 0.0
        %912 = vmatpush1.msra.mxu0 0.0
        %913 = vmatprep.subr.mxu0 %v881
        %914 = vmatpush1.msra.mxu0 %v879
        %915 = vmatprep.subr.mxu0 0.0
        %916 = vmatpush2.msra.mxu0 0.0
        %917 = vmatprep.subr.mxu0 0.0
        %918 = vmatpush2.msra.mxu0 0.0
        %919 = vmatprep.subr.mxu0 0.0
        %920 = vmatpush2.msra.mxu0 0.0
        %921 = vmatprep.subr.mxu0 0.0
        %922 = vmatpush2.msra.mxu0 0.0
        %923 = vmatprep.subr.mxu0 0.0
        %924 = vmatpush2.msra.mxu0 0.0
        %925 = vmatprep.subr.mxu0 0.0
        %926 = vmatpush2.msra.mxu0 0.0
        %927 = vmatprep.subr.mxu0 0.0
        %928 = vmatpush2.msra.mxu0 0.0
        %929 = vmatprep.subr.mxu0 0.0
        %930 = vmatpush2.msra.mxu0 0.0
        %931 = vmatprep.subr.mxu0 0.0
        %932 = vmatpush2.msra.mxu0 0.0
        %933 = vmatprep.subr.mxu0 0.0
        %934 = vmatpush2.msra.mxu0 0.0
        %935 = vmatprep.subr.mxu0 0.0
        %936 = vmatpush2.msra.mxu0 0.0
        %937 = vmatprep.subr.mxu0 0.0
        %938 = vmatpush2.msra.mxu0 0.0
        %939 = vmatprep.subr.mxu0 0.0
        %940 = vmatpush2.msra.mxu0 0.0
        %941 = vmatprep.subr.mxu0 0.0
        %942 = vmatpush2.msra.mxu0 0.0
        %943 = vmatprep.subr.mxu0 0.0
        %944 = vmatpush2.msra.mxu0 0.0
        %945 = vmatprep.subr.mxu0 0.0
        %946 = vmatpush2.msra.mxu0 0.0
        %947 = vmatprep.mubr.f32.mxu0 0.0
        %948 = vmatmul.mubr.f32.gmra.mxu0 %v877
        %v949 = vpop.f32.mrf.mxu0
        %v950 = vadd.f32 0.0, %v949
        %v951 = vpop.f32.mrf.mxu0
        %v952 = vadd.f32 0.0, %v951
        %953 = vdwg.mxu0
        %v954 = vadd.f32 %v860, %v950
        %v955 = vadd.f32 %v861, %v952
        %s956 = scalar_lea.vmem %s3, 48
        %v957 = vld [vmem:[%s956] sm:$0xff]
        %v960 = vcombine.high %v397, %v397
        %961 = vrot.lane.b32.xlu0 %v397, 96
        %v962 = vpop.permute.xlu0 %961
        %963 = vrot.lane.b32.xlu0 %v960, 96
        %v964 = vpop.permute.xlu0 %963
        %965 = vrot.lane.b32.xlu0 %v398, 96
        %v966 = vpop.permute.xlu0 %965
        %vm967 = vcmask 785408
        %v968 = vsel %vm967, %v962, %v964
        %v969 = vsel %vm967, %v964, %v966
        %v971 = vsel %vm423, %v957, 0
        %v973 = vsel %vm427, %v968, 0
        %v975 = vsel %vm427, %v969, 0
        %977 = vmatprep.subr.mxu0 0.0
        %978 = vmatpush1.msra.mxu0 0.0
        %979 = vmatprep.subr.mxu0 0.0
        %980 = vmatpush1.msra.mxu0 0.0
        %981 = vmatprep.subr.mxu0 0.0
        %982 = vmatpush1.msra.mxu0 0.0
        %983 = vmatprep.subr.mxu0 0.0
        %984 = vmatpush1.msra.mxu0 0.0
        %985 = vmatprep.subr.mxu0 0.0
        %986 = vmatpush1.msra.mxu0 0.0
        %987 = vmatprep.subr.mxu0 0.0
        %988 = vmatpush1.msra.mxu0 0.0
        %989 = vmatprep.subr.mxu0 0.0
        %990 = vmatpush1.msra.mxu0 0.0
        %991 = vmatprep.subr.mxu0 0.0
        %992 = vmatpush1.msra.mxu0 0.0
        %993 = vmatprep.subr.mxu0 0.0
        %994 = vmatpush1.msra.mxu0 0.0
        %995 = vmatprep.subr.mxu0 0.0
        %996 = vmatpush1.msra.mxu0 0.0
        %997 = vmatprep.subr.mxu0 0.0
        %998 = vmatpush1.msra.mxu0 0.0
        %999 = vmatprep.subr.mxu0 0.0
        %1000 = vmatpush1.msra.mxu0 0.0
        %1001 = vmatprep.subr.mxu0 0.0
        %1002 = vmatpush1.msra.mxu0 0.0
        %1003 = vmatprep.subr.mxu0 0.0
        %1004 = vmatpush1.msra.mxu0 0.0
        %1005 = vmatprep.subr.mxu0 0.0
        %1006 = vmatpush1.msra.mxu0 0.0
        %1007 = vmatprep.subr.mxu0 %v975
        %1008 = vmatpush1.msra.mxu0 %v973
        %1009 = vmatprep.subr.mxu0 0.0
        %1010 = vmatpush2.msra.mxu0 0.0
        %1011 = vmatprep.subr.mxu0 0.0
        %1012 = vmatpush2.msra.mxu0 0.0
        %1013 = vmatprep.subr.mxu0 0.0
        %1014 = vmatpush2.msra.mxu0 0.0
        %1015 = vmatprep.subr.mxu0 0.0
        %1016 = vmatpush2.msra.mxu0 0.0
        %1017 = vmatprep.subr.mxu0 0.0
        %1018 = vmatpush2.msra.mxu0 0.0
        %1019 = vmatprep.subr.mxu0 0.0
        %1020 = vmatpush2.msra.mxu0 0.0
        %1021 = vmatprep.subr.mxu0 0.0
        %1022 = vmatpush2.msra.mxu0 0.0
        %1023 = vmatprep.subr.mxu0 0.0
        %1024 = vmatpush2.msra.mxu0 0.0
        %1025 = vmatprep.subr.mxu0 0.0
        %1026 = vmatpush2.msra.mxu0 0.0
        %1027 = vmatprep.subr.mxu0 0.0
        %1028 = vmatpush2.msra.mxu0 0.0
        %1029 = vmatprep.subr.mxu0 0.0
        %1030 = vmatpush2.msra.mxu0 0.0
        %1031 = vmatprep.subr.mxu0 0.0
        %1032 = vmatpush2.msra.mxu0 0.0
        %1033 = vmatprep.subr.mxu0 0.0
        %1034 = vmatpush2.msra.mxu0 0.0
        %1035 = vmatprep.subr.mxu0 0.0
        %1036 = vmatpush2.msra.mxu0 0.0
        %1037 = vmatprep.subr.mxu0 0.0
        %1038 = vmatpush2.msra.mxu0 0.0
        %1039 = vmatprep.subr.mxu0 0.0
        %1040 = vmatpush2.msra.mxu0 0.0
        %1041 = vmatprep.mubr.f32.mxu0 0.0
        %1042 = vmatmul.mubr.f32.gmra.mxu0 %v971
        %v1043 = vpop.f32.mrf.mxu0
        %v1044 = vadd.f32 0.0, %v1043
        %v1045 = vpop.f32.mrf.mxu0
        %v1046 = vadd.f32 0.0, %v1045
        %1047 = vdwg.mxu0
        %v1048 = vadd.f32 %v954, %v1044
        %v1049 = vadd.f32 %v955, %v1046
        %s1050 = scalar_lea.vmem %s3, 56
        %v1051 = vld [vmem:[%s1050] sm:$0xff]
        %1052 = vrot.lane.b32.xlu0 %v339, 95
        %v1053 = vpop.permute.xlu0 %1052
        %1054 = vrot.lane.b32.xlu0 %v413, 95
        %v1055 = vpop.permute.xlu0 %1054
        %1056 = vrot.lane.b32.xlu0 %v340, 95
        %v1057 = vpop.permute.xlu0 %1056
        %vm1058 = vcmask 777216
        %v1059 = vsel %vm1058, %v1053, %v1055
        %v1060 = vsel %vm1058, %v1055, %v1057
        %v1062 = vsel %vm423, %v1051, 0
        %v1064 = vsel %vm427, %v1059, 0
        %v1066 = vsel %vm427, %v1060, 0
        %1068 = vmatprep.subr.mxu0 0.0
        %1069 = vmatpush1.msra.mxu0 0.0
        %1070 = vmatprep.subr.mxu0 0.0
        %1071 = vmatpush1.msra.mxu0 0.0
        %1072 = vmatprep.subr.mxu0 0.0
        %1073 = vmatpush1.msra.mxu0 0.0
        %1074 = vmatprep.subr.mxu0 0.0
        %1075 = vmatpush1.msra.mxu0 0.0
        %1076 = vmatprep.subr.mxu0 0.0
        %1077 = vmatpush1.msra.mxu0 0.0
        %1078 = vmatprep.subr.mxu0 0.0
        %1079 = vmatpush1.msra.mxu0 0.0
        %1080 = vmatprep.subr.mxu0 0.0
        %1081 = vmatpush1.msra.mxu0 0.0
        %1082 = vmatprep.subr.mxu0 0.0
        %1083 = vmatpush1.msra.mxu0 0.0
        %1084 = vmatprep.subr.mxu0 0.0
        %1085 = vmatpush1.msra.mxu0 0.0
        %1086 = vmatprep.subr.mxu0 0.0
        %1087 = vmatpush1.msra.mxu0 0.0
        %1088 = vmatprep.subr.mxu0 0.0
        %1089 = vmatpush1.msra.mxu0 0.0
        %1090 = vmatprep.subr.mxu0 0.0
        %1091 = vmatpush1.msra.mxu0 0.0
        %1092 = vmatprep.subr.mxu0 0.0
        %1093 = vmatpush1.msra.mxu0 0.0
        %1094 = vmatprep.subr.mxu0 0.0
        %1095 = vmatpush1.msra.mxu0 0.0
        %1096 = vmatprep.subr.mxu0 0.0
        %1097 = vmatpush1.msra.mxu0 0.0
        %1098 = vmatprep.subr.mxu0 %v1066
        %1099 = vmatpush1.msra.mxu0 %v1064
        %1100 = vmatprep.subr.mxu0 0.0
        %1101 = vmatpush2.msra.mxu0 0.0
        %1102 = vmatprep.subr.mxu0 0.0
        %1103 = vmatpush2.msra.mxu0 0.0
        %1104 = vmatprep.subr.mxu0 0.0
        %1105 = vmatpush2.msra.mxu0 0.0
        %1106 = vmatprep.subr.mxu0 0.0
        %1107 = vmatpush2.msra.mxu0 0.0
        %1108 = vmatprep.subr.mxu0 0.0
        %1109 = vmatpush2.msra.mxu0 0.0
        %1110 = vmatprep.subr.mxu0 0.0
        %1111 = vmatpush2.msra.mxu0 0.0
        %1112 = vmatprep.subr.mxu0 0.0
        %1113 = vmatpush2.msra.mxu0 0.0
        %1114 = vmatprep.subr.mxu0 0.0
        %1115 = vmatpush2.msra.mxu0 0.0
        %1116 = vmatprep.subr.mxu0 0.0
        %1117 = vmatpush2.msra.mxu0 0.0
        %1118 = vmatprep.subr.mxu0 0.0
        %1119 = vmatpush2.msra.mxu0 0.0
        %1120 = vmatprep.subr.mxu0 0.0
        %1121 = vmatpush2.msra.mxu0 0.0
        %1122 = vmatprep.subr.mxu0 0.0
        %1123 = vmatpush2.msra.mxu0 0.0
        %1124 = vmatprep.subr.mxu0 0.0
        %1125 = vmatpush2.msra.mxu0 0.0
        %1126 = vmatprep.subr.mxu0 0.0
        %1127 = vmatpush2.msra.mxu0 0.0
        %1128 = vmatprep.subr.mxu0 0.0
        %1129 = vmatpush2.msra.mxu0 0.0
        %1130 = vmatprep.subr.mxu0 0.0
        %1131 = vmatpush2.msra.mxu0 0.0
        %1132 = vmatprep.mubr.f32.mxu0 0.0
        %1133 = vmatmul.mubr.f32.gmra.mxu0 %v1062
        %v1134 = vpop.f32.mrf.mxu0
        %v1135 = vadd.f32 0.0, %v1134
        %v1136 = vpop.f32.mrf.mxu0
        %v1137 = vadd.f32 0.0, %v1136
        %1138 = vdwg.mxu0
        %v1139 = vadd.f32 %v1048, %v1135
        %v1140 = vadd.f32 %v1049, %v1137
        %s1141 = scalar_lea.vmem %s3, 64
        %v1142 = vld [vmem:[%s1141] sm:$0xff]
        %v1145 = vcombine.high %v406, %v406
        %1146 = vrot.lane.b32.xlu0 %v406, 94
        %v1147 = vpop.permute.xlu0 %1146
        %1148 = vrot.lane.b32.xlu0 %v1145, 94
        %v1149 = vpop.permute.xlu0 %1148
        %1150 = vrot.lane.b32.xlu0 %v407, 94
        %v1151 = vpop.permute.xlu0 %1150
        %vm1152 = vcmask 769024
        %v1153 = vsel %vm1152, %v1147, %v1149
        %v1154 = vsel %vm1152, %v1149, %v1151
        %v1156 = vsel %vm423, %v1142, 0
        %v1158 = vsel %vm427, %v1153, 0
        %v1160 = vsel %vm427, %v1154, 0
        %1162 = vmatprep.subr.mxu0 0.0
        %1163 = vmatpush1.msra.mxu0 0.0
        %1164 = vmatprep.subr.mxu0 0.0
        %1165 = vmatpush1.msra.mxu0 0.0
        %1166 = vmatprep.subr.mxu0 0.0
        %1167 = vmatpush1.msra.mxu0 0.0
        %1168 = vmatprep.subr.mxu0 0.0
        %1169 = vmatpush1.msra.mxu0 0.0
        %1170 = vmatprep.subr.mxu0 0.0
        %1171 = vmatpush1.msra.mxu0 0.0
        %1172 = vmatprep.subr.mxu0 0.0
        %1173 = vmatpush1.msra.mxu0 0.0
        %1174 = vmatprep.subr.mxu0 0.0
        %1175 = vmatpush1.msra.mxu0 0.0
        %1176 = vmatprep.subr.mxu0 0.0
        %1177 = vmatpush1.msra.mxu0 0.0
        %1178 = vmatprep.subr.mxu0 0.0
        %1179 = vmatpush1.msra.mxu0 0.0
        %1180 = vmatprep.subr.mxu0 0.0
        %1181 = vmatpush1.msra.mxu0 0.0
        %1182 = vmatprep.subr.mxu0 0.0
        %1183 = vmatpush1.msra.mxu0 0.0
        %1184 = vmatprep.subr.mxu0 0.0
        %1185 = vmatpush1.msra.mxu0 0.0
        %1186 = vmatprep.subr.mxu0 0.0
        %1187 = vmatpush1.msra.mxu0 0.0
        %1188 = vmatprep.subr.mxu0 0.0
        %1189 = vmatpush1.msra.mxu0 0.0
        %1190 = vmatprep.subr.mxu0 0.0
        %1191 = vmatpush1.msra.mxu0 0.0
        %1192 = vmatprep.subr.mxu0 %v1160
        %1193 = vmatpush1.msra.mxu0 %v1158
        %1194 = vmatprep.subr.mxu0 0.0
        %1195 = vmatpush2.msra.mxu0 0.0
        %1196 = vmatprep.subr.mxu0 0.0
        %1197 = vmatpush2.msra.mxu0 0.0
        %1198 = vmatprep.subr.mxu0 0.0
        %1199 = vmatpush2.msra.mxu0 0.0
        %1200 = vmatprep.subr.mxu0 0.0
        %1201 = vmatpush2.msra.mxu0 0.0
        %1202 = vmatprep.subr.mxu0 0.0
        %1203 = vmatpush2.msra.mxu0 0.0
        %1204 = vmatprep.subr.mxu0 0.0
        %1205 = vmatpush2.msra.mxu0 0.0
        %1206 = vmatprep.subr.mxu0 0.0
        %1207 = vmatpush2.msra.mxu0 0.0
        %1208 = vmatprep.subr.mxu0 0.0
        %1209 = vmatpush2.msra.mxu0 0.0
        %1210 = vmatprep.subr.mxu0 0.0
        %1211 = vmatpush2.msra.mxu0 0.0
        %1212 = vmatprep.subr.mxu0 0.0
        %1213 = vmatpush2.msra.mxu0 0.0
        %1214 = vmatprep.subr.mxu0 0.0
        %1215 = vmatpush2.msra.mxu0 0.0
        %1216 = vmatprep.subr.mxu0 0.0
        %1217 = vmatpush2.msra.mxu0 0.0
        %1218 = vmatprep.subr.mxu0 0.0
        %1219 = vmatpush2.msra.mxu0 0.0
        %1220 = vmatprep.subr.mxu0 0.0
        %1221 = vmatpush2.msra.mxu0 0.0
        %1222 = vmatprep.subr.mxu0 0.0
        %1223 = vmatpush2.msra.mxu0 0.0
        %1224 = vmatprep.subr.mxu0 0.0
        %1225 = vmatpush2.msra.mxu0 0.0
        %1226 = vmatprep.mubr.f32.mxu0 0.0
        %1227 = vmatmul.mubr.f32.gmra.mxu0 %v1156
        %v1228 = vpop.f32.mrf.mxu0
        %v1229 = vadd.f32 0.0, %v1228
        %v1230 = vpop.f32.mrf.mxu0
        %v1231 = vadd.f32 0.0, %v1230
        %1232 = vdwg.mxu0
        %v1233 = vadd.f32 %v1139, %v1229
        %v1234 = vadd.f32 %v1140, %v1231
        %v1235 = vld [vmem:[%s4] sm:$0xff]
        %1237 = vset.pattern.permute.xlu0 0
        %1238 = vperm.xlu0 %1237, %v1235
        %v1239 = vpop.permute.xlu0 %1238
        %v1241 = vadd.f32 %v1233, %v1239
        %v1242 = vadd.f32 %v1234, %v1239
        %v1243 = vmax.f32 %v1241, 0.0
        %v1244 = vmax.f32 %v1242, 0.0
        %v1245 = vadd.f32 %v1243, %v1244
        %1246 = vadd.xlane.f32.xlu0 %v1245
        %v1247 = vpop.xlane.xlu0 %1246
        %v1248 = vrcp.pop 256.0
        %v1249 = vmul.f32 %v1247, %v1248
        %v1251 = vrot.slane %v1249, 4
        %v1253 = vadd.f32 %v1249, %v1251
        %v1254 = vld [vmem:[%s5] sm:$0xff]
        %v1255 = vld [vmem:[%s5 + $0x8] sm:$0xff]
        %v1256 = vld [vmem:[%s5 + $0x10] sm:$0xff]
        %v1257 = vld [vmem:[%s5 + $0x18] sm:$0xff]
        %v1258 = vld [vmem:[%s6] sm:$0xff]
        %v1259 = vld [vmem:[%s6 + $0x8] sm:$0xff]
        %v1260 = vld [vmem:[%s6 + $0x10] sm:$0xff]
        %v1261 = vld [vmem:[%s6 + $0x18] sm:$0xff]
        %v1263 = vsel %vm423, %v1254, 0
        %v1266 = vsel %vm423, %v1255, 0
        %v1269 = vsel %vm423, %v1256, 0
        %v1272 = vsel %vm423, %v1257, 0
        %v1275 = vsel %vm427, %v1253, 0
        %1277 = vmatprep.subr.mxu0 0.0
        %1278 = vmatpush1.msra.mxu0 0.0
        %1279 = vmatprep.subr.mxu0 0.0
        %1280 = vmatpush1.msra.mxu0 0.0
        %1281 = vmatprep.subr.mxu0 0.0
        %1282 = vmatpush1.msra.mxu0 0.0
        %1283 = vmatprep.subr.mxu0 0.0
        %1284 = vmatpush1.msra.mxu0 0.0
        %1285 = vmatprep.subr.mxu0 0.0
        %1286 = vmatpush1.msra.mxu0 0.0
        %1287 = vmatprep.subr.mxu0 0.0
        %1288 = vmatpush1.msra.mxu0 0.0
        %1289 = vmatprep.subr.mxu0 0.0
        %1290 = vmatpush1.msra.mxu0 0.0
        %1291 = vmatprep.subr.mxu0 0.0
        %1292 = vmatpush1.msra.mxu0 0.0
        %1293 = vmatprep.subr.mxu0 0.0
        %1294 = vmatpush1.msra.mxu0 0.0
        %1295 = vmatprep.subr.mxu0 0.0
        %1296 = vmatpush1.msra.mxu0 0.0
        %1297 = vmatprep.subr.mxu0 0.0
        %1298 = vmatpush1.msra.mxu0 0.0
        %1299 = vmatprep.subr.mxu0 0.0
        %1300 = vmatpush1.msra.mxu0 0.0
        %1301 = vmatprep.subr.mxu0 0.0
        %1302 = vmatpush1.msra.mxu0 0.0
        %1303 = vmatprep.subr.mxu0 0.0
        %1304 = vmatpush1.msra.mxu0 0.0
        %1305 = vmatprep.subr.mxu0 0.0
        %1306 = vmatpush1.msra.mxu0 0.0
        %1307 = vmatprep.subr.mxu0 0.0
        %1308 = vmatpush1.msra.mxu0 %v1275
        %1309 = vmatprep.subr.mxu0 0.0
        %1310 = vmatpush2.msra.mxu0 0.0
        %1311 = vmatprep.subr.mxu0 0.0
        %1312 = vmatpush2.msra.mxu0 0.0
        %1313 = vmatprep.subr.mxu0 0.0
        %1314 = vmatpush2.msra.mxu0 0.0
        %1315 = vmatprep.subr.mxu0 0.0
        %1316 = vmatpush2.msra.mxu0 0.0
        %1317 = vmatprep.subr.mxu0 0.0
        %1318 = vmatpush2.msra.mxu0 0.0
        %1319 = vmatprep.subr.mxu0 0.0
        %1320 = vmatpush2.msra.mxu0 0.0
        %1321 = vmatprep.subr.mxu0 0.0
        %1322 = vmatpush2.msra.mxu0 0.0
        %1323 = vmatprep.subr.mxu0 0.0
        %1324 = vmatpush2.msra.mxu0 0.0
        %1325 = vmatprep.subr.mxu0 0.0
        %1326 = vmatpush2.msra.mxu0 0.0
        %1327 = vmatprep.subr.mxu0 0.0
        %1328 = vmatpush2.msra.mxu0 0.0
        %1329 = vmatprep.subr.mxu0 0.0
        %1330 = vmatpush2.msra.mxu0 0.0
        %1331 = vmatprep.subr.mxu0 0.0
        %1332 = vmatpush2.msra.mxu0 0.0
        %1333 = vmatprep.subr.mxu0 0.0
        %1334 = vmatpush2.msra.mxu0 0.0
        %1335 = vmatprep.subr.mxu0 0.0
        %1336 = vmatpush2.msra.mxu0 0.0
        %1337 = vmatprep.subr.mxu0 0.0
        %1338 = vmatpush2.msra.mxu0 0.0
        %1339 = vmatprep.subr.mxu0 0.0
        %1340 = vmatpush2.msra.mxu0 0.0
        %1341 = vmatprep.mubr.f32.mxu0 0.0
        %1342 = vmatmul.mubr.f32.gmra.mxu0 %v1263
        %v1343 = vpop.f32.mrf.mxu0
        %v1344 = vadd.f32 %v1258, %v1343
        %v1345 = vpop.f32.mrf.mxu0
        %1346 = vmatprep.mubr.f32.mxu0 0.0
        %1347 = vmatmul.mubr.f32.gmra.mxu0 %v1266
        %v1348 = vpop.f32.mrf.mxu0
        %v1349 = vadd.f32 %v1259, %v1348
        %v1350 = vpop.f32.mrf.mxu0
        %1351 = vmatprep.mubr.f32.mxu0 0.0
        %1352 = vmatmul.mubr.f32.gmra.mxu0 %v1269
        %v1353 = vpop.f32.mrf.mxu0
        %v1354 = vadd.f32 %v1260, %v1353
        %v1355 = vpop.f32.mrf.mxu0
        %1356 = vmatprep.mubr.f32.mxu0 0.0
        %1357 = vmatmul.mubr.f32.gmra.mxu0 %v1272
        %v1358 = vpop.f32.mrf.mxu0
        %v1359 = vadd.f32 %v1261, %v1358
        %v1360 = vpop.f32.mrf.mxu0
        %1361 = vdwg.mxu0
        %v1362 = vmax.f32 %v1344, 0.0
        %v1363 = vmax.f32 %v1349, 0.0
        %v1364 = vmax.f32 %v1354, 0.0
        %v1365 = vmax.f32 %v1359, 0.0
        %v1366 = vld [vmem:[%s7] sm:$0xff]
        %v1367 = vld [vmem:[%s8] sm:$0xff]
        %v1369 = vsel %vm393, %v1366, 0
        %1371 = vmatprep.subr.mxu0 0.0
        %1372 = vmatpush1.msra.mxu0 0.0
        %1373 = vmatprep.subr.mxu0 0.0
        %1374 = vmatpush1.msra.mxu0 0.0
        %1375 = vmatprep.subr.mxu0 0.0
        %1376 = vmatpush1.msra.mxu0 0.0
        %1377 = vmatprep.subr.mxu0 0.0
        %1378 = vmatpush1.msra.mxu0 0.0
        %1379 = vmatprep.subr.mxu0 0.0
        %1380 = vmatpush1.msra.mxu0 0.0
        %1381 = vmatprep.subr.mxu0 0.0
        %1382 = vmatpush1.msra.mxu0 0.0
        %1383 = vmatprep.subr.mxu0 0.0
        %1384 = vmatpush1.msra.mxu0 0.0
        %1385 = vmatprep.subr.mxu0 0.0
        %1386 = vmatpush1.msra.mxu0 0.0
        %1387 = vmatprep.subr.mxu0 0.0
        %1388 = vmatpush1.msra.mxu0 0.0
        %1389 = vmatprep.subr.mxu0 0.0
        %1390 = vmatpush1.msra.mxu0 0.0
        %1391 = vmatprep.subr.mxu0 0.0
        %1392 = vmatpush1.msra.mxu0 0.0
        %1393 = vmatprep.subr.mxu0 0.0
        %1394 = vmatpush1.msra.mxu0 0.0
        %1395 = vmatprep.subr.mxu0 0.0
        %1396 = vmatpush1.msra.mxu0 %v1365
        %1397 = vmatprep.subr.mxu0 0.0
        %1398 = vmatpush1.msra.mxu0 %v1364
        %1399 = vmatprep.subr.mxu0 0.0
        %1400 = vmatpush1.msra.mxu0 %v1363
        %1401 = vmatprep.subr.mxu0 0.0
        %1402 = vmatpush1.msra.mxu0 %v1362
        %1403 = vmatprep.subr.mxu0 0.0
        %1404 = vmatpush2.msra.mxu0 0.0
        %1405 = vmatprep.subr.mxu0 0.0
        %1406 = vmatpush2.msra.mxu0 0.0
        %1407 = vmatprep.subr.mxu0 0.0
        %1408 = vmatpush2.msra.mxu0 0.0
        %1409 = vmatprep.subr.mxu0 0.0
        %1410 = vmatpush2.msra.mxu0 0.0
        %1411 = vmatprep.subr.mxu0 0.0
        %1412 = vmatpush2.msra.mxu0 0.0
        %1413 = vmatprep.subr.mxu0 0.0
        %1414 = vmatpush2.msra.mxu0 0.0
        %1415 = vmatprep.subr.mxu0 0.0
        %1416 = vmatpush2.msra.mxu0 0.0
        %1417 = vmatprep.subr.mxu0 0.0
        %1418 = vmatpush2.msra.mxu0 0.0
        %1419 = vmatprep.subr.mxu0 0.0
        %1420 = vmatpush2.msra.mxu0 0.0
        %1421 = vmatprep.subr.mxu0 0.0
        %1422 = vmatpush2.msra.mxu0 0.0
        %1423 = vmatprep.subr.mxu0 0.0
        %1424 = vmatpush2.msra.mxu0 0.0
        %1425 = vmatprep.subr.mxu0 0.0
        %1426 = vmatpush2.msra.mxu0 0.0
        %1427 = vmatprep.subr.mxu0 0.0
        %1428 = vmatpush2.msra.mxu0 0.0
        %1429 = vmatprep.subr.mxu0 0.0
        %1430 = vmatpush2.msra.mxu0 0.0
        %1431 = vmatprep.subr.mxu0 0.0
        %1432 = vmatpush2.msra.mxu0 0.0
        %1433 = vmatprep.subr.mxu0 0.0
        %1434 = vmatpush2.msra.mxu0 0.0
        %1435 = vmatprep.mubr.f32.mxu0 0.0
        %1436 = vmatmul.mubr.f32.gmra.mxu0 %v1369
        %v1437 = vpop.f32.mrf.mxu0
        %v1438 = vadd.f32 %v1367, %v1437
        %v1439 = vpop.f32.mrf.mxu0
        %1440 = vdwg.mxu0
        %v1442 = vrot.slane %v1438, 4
        %v1444 = vmax.f32 %v1438, %v1442
        %v1445 = vsub.f32 %v1438, %v1444
        %v1446 = vmul.f32 %v1445, 1.442695
        %v1447 = vpow.pop %v1446
        %v1449 = vrot.slane %v1444, 4
        %v1451 = vsub.f32 %v1438, %v1449
        %v1452 = vmul.f32 %v1451, 1.442695
        %v1453 = vpow.pop %v1452
        %v1455 = vrot.slane %v1453, 4
        %v1457 = vadd.f32 %v1447, %v1455
        %v1458 = vrcp.pop %v1457
        %v1459 = vmul.f32 %v1447, %v1458
        %1461 = vset.pattern.permute.xlu0 0
        %1462 = vperm.xlu0 %1461, %v1459
        %v1463 = vpop.permute.xlu0 %1462
        %v1465 = vmul.f32 %v1463, %v1243
        %v1466 = vmul.f32 %v1463, %v1244
        %v1468 = vrot.slane %v1458, 4
        %v1470 = vmul.f32 %v1453, %v1468
        %1472 = vset.pattern.permute.xlu0 0
        %1473 = vperm.xlu0 %1472, %v1470
        %v1474 = vpop.permute.xlu0 %1473
        %v1476 = vmul.f32 %v1474, %v1243
        %v1477 = vmul.f32 %v1474, %v1244
        %v1480 = vrot.slane %v1476, 4
        %v1481 = vrot.slane %v1477, 4
        %v1484 = vadd.f32 %v1465, %v1480
        %v1485 = vadd.f32 %v1466, %v1481
        %v1488 = vcombine.low %v1484, %v1485
        %1490 = vst [vmem:[%s328] sm:$0xff] %v1488
        %s1491 = scalar_lea.vmem %s334, 12
        %v1492 = vld [vmem:[%s1491] sm:$0xff]
        %v1493 = vld [vmem:[%s1491 + $0x8] sm:$0xf]
        %v1494 = vmul.f32 %v1492, %v350
        %v1495 = vmul.f32 %v1492, %v367
        %v1496 = vmul.f32 %v1493, %v365
        %v1497 = vmul.f32 %v1492, %v376
        %v1498 = vmul.f32 %v1493, %v374
        %v1499 = vmul.f32 %v1492, %v385
        %v1500 = vmul.f32 %v1493, %v383
        %v1501 = vmul.f32 %v1492, %v394
        %v1502 = vmul.f32 %v1493, %v392
        %v1503 = vmul.f32 %v1492, %v403
        %v1504 = vmul.f32 %v1493, %v401
        %v1505 = vld [vmem:[%s3] sm:$0xff]
        %v1506 = vld [vmem:[%s409] sm:$0xff]
        %v1509 = vcombine.high %v1492, %v1492
        %1510 = vrot.lane.b32.xlu0 %v1492, 127
        %v1511 = vpop.permute.xlu0 %1510
        %1512 = vrot.lane.b32.xlu0 %v1509, 127
        %v1513 = vpop.permute.xlu0 %1512
        %1514 = vrot.lane.b32.xlu0 %v1493, 127
        %v1515 = vpop.permute.xlu0 %1514
        %v1516 = vsel %vm420, %v1511, %v1513
        %v1517 = vsel %vm420, %v1513, %v1515
        %v1519 = vsel %vm423, %v1506, 0
        %v1521 = vsel %vm427, %v1516, 0
        %v1523 = vsel %vm427, %v1517, 0
        %1525 = vmatprep.subr.mxu0 0.0
        %1526 = vmatpush1.msra.mxu0 0.0
        %1527 = vmatprep.subr.mxu0 0.0
        %1528 = vmatpush1.msra.mxu0 0.0
        %1529 = vmatprep.subr.mxu0 0.0
        %1530 = vmatpush1.msra.mxu0 0.0
        %1531 = vmatprep.subr.mxu0 0.0
        %1532 = vmatpush1.msra.mxu0 0.0
        %1533 = vmatprep.subr.mxu0 0.0
        %1534 = vmatpush1.msra.mxu0 0.0
        %1535 = vmatprep.subr.mxu0 0.0
        %1536 = vmatpush1.msra.mxu0 0.0
        %1537 = vmatprep.subr.mxu0 0.0
        %1538 = vmatpush1.msra.mxu0 0.0
        %1539 = vmatprep.subr.mxu0 0.0
        %1540 = vmatpush1.msra.mxu0 0.0
        %1541 = vmatprep.subr.mxu0 0.0
        %1542 = vmatpush1.msra.mxu0 0.0
        %1543 = vmatprep.subr.mxu0 0.0
        %1544 = vmatpush1.msra.mxu0 0.0
        %1545 = vmatprep.subr.mxu0 0.0
        %1546 = vmatpush1.msra.mxu0 0.0
        %1547 = vmatprep.subr.mxu0 0.0
        %1548 = vmatpush1.msra.mxu0 0.0
        %1549 = vmatprep.subr.mxu0 0.0
        %1550 = vmatpush1.msra.mxu0 0.0
        %1551 = vmatprep.subr.mxu0 0.0
        %1552 = vmatpush1.msra.mxu0 0.0
        %1553 = vmatprep.subr.mxu0 0.0
        %1554 = vmatpush1.msra.mxu0 0.0
        %1555 = vmatprep.subr.mxu0 %v1523
        %1556 = vmatpush1.msra.mxu0 %v1521
        %1557 = vmatprep.subr.mxu0 0.0
        %1558 = vmatpush2.msra.mxu0 0.0
        %1559 = vmatprep.subr.mxu0 0.0
        %1560 = vmatpush2.msra.mxu0 0.0
        %1561 = vmatprep.subr.mxu0 0.0
        %1562 = vmatpush2.msra.mxu0 0.0
        %1563 = vmatprep.subr.mxu0 0.0
        %1564 = vmatpush2.msra.mxu0 0.0
        %1565 = vmatprep.subr.mxu0 0.0
        %1566 = vmatpush2.msra.mxu0 0.0
        %1567 = vmatprep.subr.mxu0 0.0
        %1568 = vmatpush2.msra.mxu0 0.0
        %1569 = vmatprep.subr.mxu0 0.0
        %1570 = vmatpush2.msra.mxu0 0.0
        %1571 = vmatprep.subr.mxu0 0.0
        %1572 = vmatpush2.msra.mxu0 0.0
        %1573 = vmatprep.subr.mxu0 0.0
        %1574 = vmatpush2.msra.mxu0 0.0
        %1575 = vmatprep.subr.mxu0 0.0
        %1576 = vmatpush2.msra.mxu0 0.0
        %1577 = vmatprep.subr.mxu0 0.0
        %1578 = vmatpush2.msra.mxu0 0.0
        %1579 = vmatprep.subr.mxu0 0.0
        %1580 = vmatpush2.msra.mxu0 0.0
        %1581 = vmatprep.subr.mxu0 0.0
        %1582 = vmatpush2.msra.mxu0 0.0
        %1583 = vmatprep.subr.mxu0 0.0
        %1584 = vmatpush2.msra.mxu0 0.0
        %1585 = vmatprep.subr.mxu0 0.0
        %1586 = vmatpush2.msra.mxu0 0.0
        %1587 = vmatprep.subr.mxu0 0.0
        %1588 = vmatpush2.msra.mxu0 0.0
        %1589 = vmatprep.mubr.f32.mxu0 0.0
        %1590 = vmatmul.mubr.f32.gmra.mxu0 %v1519
        %v1591 = vpop.f32.mrf.mxu0
        %v1592 = vadd.f32 0.0, %v1591
        %v1593 = vpop.f32.mrf.mxu0
        %v1594 = vadd.f32 0.0, %v1593
        %1595 = vdwg.mxu0
        %v1597 = vcombine.high %v1494, %v1494
        %v1599 = vsel %vm423, %v1505, 0
        %v1601 = vsel %vm427, %v1494, 0
        %v1603 = vsel %vm427, %v1597, 0
        %1605 = vmatprep.subr.mxu0 0.0
        %1606 = vmatpush1.msra.mxu0 0.0
        %1607 = vmatprep.subr.mxu0 0.0
        %1608 = vmatpush1.msra.mxu0 0.0
        %1609 = vmatprep.subr.mxu0 0.0
        %1610 = vmatpush1.msra.mxu0 0.0
        %1611 = vmatprep.subr.mxu0 0.0
        %1612 = vmatpush1.msra.mxu0 0.0
        %1613 = vmatprep.subr.mxu0 0.0
        %1614 = vmatpush1.msra.mxu0 0.0
        %1615 = vmatprep.subr.mxu0 0.0
        %1616 = vmatpush1.msra.mxu0 0.0
        %1617 = vmatprep.subr.mxu0 0.0
        %1618 = vmatpush1.msra.mxu0 0.0
        %1619 = vmatprep.subr.mxu0 0.0
        %1620 = vmatpush1.msra.mxu0 0.0
        %1621 = vmatprep.subr.mxu0 0.0
        %1622 = vmatpush1.msra.mxu0 0.0
        %1623 = vmatprep.subr.mxu0 0.0
        %1624 = vmatpush1.msra.mxu0 0.0
        %1625 = vmatprep.subr.mxu0 0.0
        %1626 = vmatpush1.msra.mxu0 0.0
        %1627 = vmatprep.subr.mxu0 0.0
        %1628 = vmatpush1.msra.mxu0 0.0
        %1629 = vmatprep.subr.mxu0 0.0
        %1630 = vmatpush1.msra.mxu0 0.0
        %1631 = vmatprep.subr.mxu0 0.0
        %1632 = vmatpush1.msra.mxu0 0.0
        %1633 = vmatprep.subr.mxu0 0.0
        %1634 = vmatpush1.msra.mxu0 0.0
        %1635 = vmatprep.subr.mxu0 %v1603
        %1636 = vmatpush1.msra.mxu0 %v1601
        %1637 = vmatprep.subr.mxu0 0.0
        %1638 = vmatpush2.msra.mxu0 0.0
        %1639 = vmatprep.subr.mxu0 0.0
        %1640 = vmatpush2.msra.mxu0 0.0
        %1641 = vmatprep.subr.mxu0 0.0
        %1642 = vmatpush2.msra.mxu0 0.0
        %1643 = vmatprep.subr.mxu0 0.0
        %1644 = vmatpush2.msra.mxu0 0.0
        %1645 = vmatprep.subr.mxu0 0.0
        %1646 = vmatpush2.msra.mxu0 0.0
        %1647 = vmatprep.subr.mxu0 0.0
        %1648 = vmatpush2.msra.mxu0 0.0
        %1649 = vmatprep.subr.mxu0 0.0
        %1650 = vmatpush2.msra.mxu0 0.0
        %1651 = vmatprep.subr.mxu0 0.0
        %1652 = vmatpush2.msra.mxu0 0.0
        %1653 = vmatprep.subr.mxu0 0.0
        %1654 = vmatpush2.msra.mxu0 0.0
        %1655 = vmatprep.subr.mxu0 0.0
        %1656 = vmatpush2.msra.mxu0 0.0
        %1657 = vmatprep.subr.mxu0 0.0
        %1658 = vmatpush2.msra.mxu0 0.0
        %1659 = vmatprep.subr.mxu0 0.0
        %1660 = vmatpush2.msra.mxu0 0.0
        %1661 = vmatprep.subr.mxu0 0.0
        %1662 = vmatpush2.msra.mxu0 0.0
        %1663 = vmatprep.subr.mxu0 0.0
        %1664 = vmatpush2.msra.mxu0 0.0
        %1665 = vmatprep.subr.mxu0 0.0
        %1666 = vmatpush2.msra.mxu0 0.0
        %1667 = vmatprep.subr.mxu0 0.0
        %1668 = vmatpush2.msra.mxu0 0.0
        %1669 = vmatprep.mubr.f32.mxu0 0.0
        %1670 = vmatmul.mubr.f32.gmra.mxu0 %v1599
        %v1671 = vpop.f32.mrf.mxu0
        %v1672 = vadd.f32 %v1592, %v1671
        %v1673 = vpop.f32.mrf.mxu0
        %v1674 = vadd.f32 %v1594, %v1673
        %1675 = vdwg.mxu0
        %v1676 = vld [vmem:[%s583] sm:$0xff]
        %v1679 = vcombine.high %v1495, %v1495
        %1680 = vrot.lane.b32.xlu0 %v1495, 126
        %v1681 = vpop.permute.xlu0 %1680
        %1682 = vrot.lane.b32.xlu0 %v1679, 126
        %v1683 = vpop.permute.xlu0 %1682
        %1684 = vrot.lane.b32.xlu0 %v1496, 126
        %v1685 = vpop.permute.xlu0 %1684
        %v1686 = vsel %vm594, %v1681, %v1683
        %v1687 = vsel %vm594, %v1683, %v1685
        %v1689 = vsel %vm423, %v1676, 0
        %v1691 = vsel %vm427, %v1686, 0
        %v1693 = vsel %vm427, %v1687, 0
        %1695 = vmatprep.subr.mxu0 0.0
        %1696 = vmatpush1.msra.mxu0 0.0
        %1697 = vmatprep.subr.mxu0 0.0
        %1698 = vmatpush1.msra.mxu0 0.0
        %1699 = vmatprep.subr.mxu0 0.0
        %1700 = vmatpush1.msra.mxu0 0.0
        %1701 = vmatprep.subr.mxu0 0.0
        %1702 = vmatpush1.msra.mxu0 0.0
        %1703 = vmatprep.subr.mxu0 0.0
        %1704 = vmatpush1.msra.mxu0 0.0
        %1705 = vmatprep.subr.mxu0 0.0
        %1706 = vmatpush1.msra.mxu0 0.0
        %1707 = vmatprep.subr.mxu0 0.0
        %1708 = vmatpush1.msra.mxu0 0.0
        %1709 = vmatprep.subr.mxu0 0.0
        %1710 = vmatpush1.msra.mxu0 0.0
        %1711 = vmatprep.subr.mxu0 0.0
        %1712 = vmatpush1.msra.mxu0 0.0
        %1713 = vmatprep.subr.mxu0 0.0
        %1714 = vmatpush1.msra.mxu0 0.0
        %1715 = vmatprep.subr.mxu0 0.0
        %1716 = vmatpush1.msra.mxu0 0.0
        %1717 = vmatprep.subr.mxu0 0.0
        %1718 = vmatpush1.msra.mxu0 0.0
        %1719 = vmatprep.subr.mxu0 0.0
        %1720 = vmatpush1.msra.mxu0 0.0
        %1721 = vmatprep.subr.mxu0 0.0
        %1722 = vmatpush1.msra.mxu0 0.0
        %1723 = vmatprep.subr.mxu0 0.0
        %1724 = vmatpush1.msra.mxu0 0.0
        %1725 = vmatprep.subr.mxu0 %v1693
        %1726 = vmatpush1.msra.mxu0 %v1691
        %1727 = vmatprep.subr.mxu0 0.0
        %1728 = vmatpush2.msra.mxu0 0.0
        %1729 = vmatprep.subr.mxu0 0.0
        %1730 = vmatpush2.msra.mxu0 0.0
        %1731 = vmatprep.subr.mxu0 0.0
        %1732 = vmatpush2.msra.mxu0 0.0
        %1733 = vmatprep.subr.mxu0 0.0
        %1734 = vmatpush2.msra.mxu0 0.0
        %1735 = vmatprep.subr.mxu0 0.0
        %1736 = vmatpush2.msra.mxu0 0.0
        %1737 = vmatprep.subr.mxu0 0.0
        %1738 = vmatpush2.msra.mxu0 0.0
        %1739 = vmatprep.subr.mxu0 0.0
        %1740 = vmatpush2.msra.mxu0 0.0
        %1741 = vmatprep.subr.mxu0 0.0
        %1742 = vmatpush2.msra.mxu0 0.0
        %1743 = vmatprep.subr.mxu0 0.0
        %1744 = vmatpush2.msra.mxu0 0.0
        %1745 = vmatprep.subr.mxu0 0.0
        %1746 = vmatpush2.msra.mxu0 0.0
        %1747 = vmatprep.subr.mxu0 0.0
        %1748 = vmatpush2.msra.mxu0 0.0
        %1749 = vmatprep.subr.mxu0 0.0
        %1750 = vmatpush2.msra.mxu0 0.0
        %1751 = vmatprep.subr.mxu0 0.0
        %1752 = vmatpush2.msra.mxu0 0.0
        %1753 = vmatprep.subr.mxu0 0.0
        %1754 = vmatpush2.msra.mxu0 0.0
        %1755 = vmatprep.subr.mxu0 0.0
        %1756 = vmatpush2.msra.mxu0 0.0
        %1757 = vmatprep.subr.mxu0 0.0
        %1758 = vmatpush2.msra.mxu0 0.0
        %1759 = vmatprep.mubr.f32.mxu0 0.0
        %1760 = vmatmul.mubr.f32.gmra.mxu0 %v1689
        %v1761 = vpop.f32.mrf.mxu0
        %v1762 = vadd.f32 0.0, %v1761
        %v1763 = vpop.f32.mrf.mxu0
        %v1764 = vadd.f32 0.0, %v1763
        %1765 = vdwg.mxu0
        %v1766 = vadd.f32 %v1672, %v1762
        %v1767 = vadd.f32 %v1674, %v1764
        %v1768 = vld [vmem:[%s677] sm:$0xff]
        %v1771 = vcombine.high %v1497, %v1497
        %1772 = vrot.lane.b32.xlu0 %v1497, 112
        %v1773 = vpop.permute.xlu0 %1772
        %1774 = vrot.lane.b32.xlu0 %v1771, 112
        %v1775 = vpop.permute.xlu0 %1774
        %1776 = vrot.lane.b32.xlu0 %v1498, 112
        %v1777 = vpop.permute.xlu0 %1776
        %v1778 = vsel %vm688, %v1773, %v1775
        %v1779 = vsel %vm688, %v1775, %v1777
        %v1781 = vsel %vm423, %v1768, 0
        %v1783 = vsel %vm427, %v1778, 0
        %v1785 = vsel %vm427, %v1779, 0
        %1787 = vmatprep.subr.mxu0 0.0
        %1788 = vmatpush1.msra.mxu0 0.0
        %1789 = vmatprep.subr.mxu0 0.0
        %1790 = vmatpush1.msra.mxu0 0.0
        %1791 = vmatprep.subr.mxu0 0.0
        %1792 = vmatpush1.msra.mxu0 0.0
        %1793 = vmatprep.subr.mxu0 0.0
        %1794 = vmatpush1.msra.mxu0 0.0
        %1795 = vmatprep.subr.mxu0 0.0
        %1796 = vmatpush1.msra.mxu0 0.0
        %1797 = vmatprep.subr.mxu0 0.0
        %1798 = vmatpush1.msra.mxu0 0.0
        %1799 = vmatprep.subr.mxu0 0.0
        %1800 = vmatpush1.msra.mxu0 0.0
        %1801 = vmatprep.subr.mxu0 0.0
        %1802 = vmatpush1.msra.mxu0 0.0
        %1803 = vmatprep.subr.mxu0 0.0
        %1804 = vmatpush1.msra.mxu0 0.0
        %1805 = vmatprep.subr.mxu0 0.0
        %1806 = vmatpush1.msra.mxu0 0.0
        %1807 = vmatprep.subr.mxu0 0.0
        %1808 = vmatpush1.msra.mxu0 0.0
        %1809 = vmatprep.subr.mxu0 0.0
        %1810 = vmatpush1.msra.mxu0 0.0
        %1811 = vmatprep.subr.mxu0 0.0
        %1812 = vmatpush1.msra.mxu0 0.0
        %1813 = vmatprep.subr.mxu0 0.0
        %1814 = vmatpush1.msra.mxu0 0.0
        %1815 = vmatprep.subr.mxu0 0.0
        %1816 = vmatpush1.msra.mxu0 0.0
        %1817 = vmatprep.subr.mxu0 %v1785
        %1818 = vmatpush1.msra.mxu0 %v1783
        %1819 = vmatprep.subr.mxu0 0.0
        %1820 = vmatpush2.msra.mxu0 0.0
        %1821 = vmatprep.subr.mxu0 0.0
        %1822 = vmatpush2.msra.mxu0 0.0
        %1823 = vmatprep.subr.mxu0 0.0
        %1824 = vmatpush2.msra.mxu0 0.0
        %1825 = vmatprep.subr.mxu0 0.0
        %1826 = vmatpush2.msra.mxu0 0.0
        %1827 = vmatprep.subr.mxu0 0.0
        %1828 = vmatpush2.msra.mxu0 0.0
        %1829 = vmatprep.subr.mxu0 0.0
        %1830 = vmatpush2.msra.mxu0 0.0
        %1831 = vmatprep.subr.mxu0 0.0
        %1832 = vmatpush2.msra.mxu0 0.0
        %1833 = vmatprep.subr.mxu0 0.0
        %1834 = vmatpush2.msra.mxu0 0.0
        %1835 = vmatprep.subr.mxu0 0.0
        %1836 = vmatpush2.msra.mxu0 0.0
        %1837 = vmatprep.subr.mxu0 0.0
        %1838 = vmatpush2.msra.mxu0 0.0
        %1839 = vmatprep.subr.mxu0 0.0
        %1840 = vmatpush2.msra.mxu0 0.0
        %1841 = vmatprep.subr.mxu0 0.0
        %1842 = vmatpush2.msra.mxu0 0.0
        %1843 = vmatprep.subr.mxu0 0.0
        %1844 = vmatpush2.msra.mxu0 0.0
        %1845 = vmatprep.subr.mxu0 0.0
        %1846 = vmatpush2.msra.mxu0 0.0
        %1847 = vmatprep.subr.mxu0 0.0
        %1848 = vmatpush2.msra.mxu0 0.0
        %1849 = vmatprep.subr.mxu0 0.0
        %1850 = vmatpush2.msra.mxu0 0.0
        %1851 = vmatprep.mubr.f32.mxu0 0.0
        %1852 = vmatmul.mubr.f32.gmra.mxu0 %v1781
        %v1853 = vpop.f32.mrf.mxu0
        %v1854 = vadd.f32 0.0, %v1853
        %v1855 = vpop.f32.mrf.mxu0
        %v1856 = vadd.f32 0.0, %v1855
        %1857 = vdwg.mxu0
        %v1858 = vadd.f32 %v1766, %v1854
        %v1859 = vadd.f32 %v1767, %v1856
        %v1860 = vld [vmem:[%s771] sm:$0xff]
        %1861 = vrot.lane.b32.xlu0 %v1492, 111
        %v1862 = vpop.permute.xlu0 %1861
        %1863 = vrot.lane.b32.xlu0 %v1509, 111
        %v1864 = vpop.permute.xlu0 %1863
        %1865 = vrot.lane.b32.xlu0 %v1493, 111
        %v1866 = vpop.permute.xlu0 %1865
        %v1867 = vsel %vm779, %v1862, %v1864
        %v1868 = vsel %vm779, %v1864, %v1866
        %v1870 = vsel %vm423, %v1860, 0
        %v1872 = vsel %vm427, %v1867, 0
        %v1874 = vsel %vm427, %v1868, 0
        %1876 = vmatprep.subr.mxu0 0.0
        %1877 = vmatpush1.msra.mxu0 0.0
        %1878 = vmatprep.subr.mxu0 0.0
        %1879 = vmatpush1.msra.mxu0 0.0
        %1880 = vmatprep.subr.mxu0 0.0
        %1881 = vmatpush1.msra.mxu0 0.0
        %1882 = vmatprep.subr.mxu0 0.0
        %1883 = vmatpush1.msra.mxu0 0.0
        %1884 = vmatprep.subr.mxu0 0.0
        %1885 = vmatpush1.msra.mxu0 0.0
        %1886 = vmatprep.subr.mxu0 0.0
        %1887 = vmatpush1.msra.mxu0 0.0
        %1888 = vmatprep.subr.mxu0 0.0
        %1889 = vmatpush1.msra.mxu0 0.0
        %1890 = vmatprep.subr.mxu0 0.0
        %1891 = vmatpush1.msra.mxu0 0.0
        %1892 = vmatprep.subr.mxu0 0.0
        %1893 = vmatpush1.msra.mxu0 0.0
        %1894 = vmatprep.subr.mxu0 0.0
        %1895 = vmatpush1.msra.mxu0 0.0
        %1896 = vmatprep.subr.mxu0 0.0
        %1897 = vmatpush1.msra.mxu0 0.0
        %1898 = vmatprep.subr.mxu0 0.0
        %1899 = vmatpush1.msra.mxu0 0.0
        %1900 = vmatprep.subr.mxu0 0.0
        %1901 = vmatpush1.msra.mxu0 0.0
        %1902 = vmatprep.subr.mxu0 0.0
        %1903 = vmatpush1.msra.mxu0 0.0
        %1904 = vmatprep.subr.mxu0 0.0
        %1905 = vmatpush1.msra.mxu0 0.0
        %1906 = vmatprep.subr.mxu0 %v1874
        %1907 = vmatpush1.msra.mxu0 %v1872
        %1908 = vmatprep.subr.mxu0 0.0
        %1909 = vmatpush2.msra.mxu0 0.0
        %1910 = vmatprep.subr.mxu0 0.0
        %1911 = vmatpush2.msra.mxu0 0.0
        %1912 = vmatprep.subr.mxu0 0.0
        %1913 = vmatpush2.msra.mxu0 0.0
        %1914 = vmatprep.subr.mxu0 0.0
        %1915 = vmatpush2.msra.mxu0 0.0
        %1916 = vmatprep.subr.mxu0 0.0
        %1917 = vmatpush2.msra.mxu0 0.0
        %1918 = vmatprep.subr.mxu0 0.0
        %1919 = vmatpush2.msra.mxu0 0.0
        %1920 = vmatprep.subr.mxu0 0.0
        %1921 = vmatpush2.msra.mxu0 0.0
        %1922 = vmatprep.subr.mxu0 0.0
        %1923 = vmatpush2.msra.mxu0 0.0
        %1924 = vmatprep.subr.mxu0 0.0
        %1925 = vmatpush2.msra.mxu0 0.0
        %1926 = vmatprep.subr.mxu0 0.0
        %1927 = vmatpush2.msra.mxu0 0.0
        %1928 = vmatprep.subr.mxu0 0.0
        %1929 = vmatpush2.msra.mxu0 0.0
        %1930 = vmatprep.subr.mxu0 0.0
        %1931 = vmatpush2.msra.mxu0 0.0
        %1932 = vmatprep.subr.mxu0 0.0
        %1933 = vmatpush2.msra.mxu0 0.0
        %1934 = vmatprep.subr.mxu0 0.0
        %1935 = vmatpush2.msra.mxu0 0.0
        %1936 = vmatprep.subr.mxu0 0.0
        %1937 = vmatpush2.msra.mxu0 0.0
        %1938 = vmatprep.subr.mxu0 0.0
        %1939 = vmatpush2.msra.mxu0 0.0
        %1940 = vmatprep.mubr.f32.mxu0 0.0
        %1941 = vmatmul.mubr.f32.gmra.mxu0 %v1870
        %v1942 = vpop.f32.mrf.mxu0
        %v1943 = vadd.f32 0.0, %v1942
        %v1944 = vpop.f32.mrf.mxu0
        %v1945 = vadd.f32 0.0, %v1944
        %1946 = vdwg.mxu0
        %v1947 = vadd.f32 %v1858, %v1943
        %v1948 = vadd.f32 %v1859, %v1945
        %v1949 = vld [vmem:[%s862] sm:$0xff]
        %v1952 = vcombine.high %v1499, %v1499
        %1953 = vrot.lane.b32.xlu0 %v1499, 110
        %v1954 = vpop.permute.xlu0 %1953
        %1955 = vrot.lane.b32.xlu0 %v1952, 110
        %v1956 = vpop.permute.xlu0 %1955
        %1957 = vrot.lane.b32.xlu0 %v1500, 110
        %v1958 = vpop.permute.xlu0 %1957
        %v1959 = vsel %vm873, %v1954, %v1956
        %v1960 = vsel %vm873, %v1956, %v1958
        %v1962 = vsel %vm423, %v1949, 0
        %v1964 = vsel %vm427, %v1959, 0
        %v1966 = vsel %vm427, %v1960, 0
        %1968 = vmatprep.subr.mxu0 0.0
        %1969 = vmatpush1.msra.mxu0 0.0
        %1970 = vmatprep.subr.mxu0 0.0
        %1971 = vmatpush1.msra.mxu0 0.0
        %1972 = vmatprep.subr.mxu0 0.0
        %1973 = vmatpush1.msra.mxu0 0.0
        %1974 = vmatprep.subr.mxu0 0.0
        %1975 = vmatpush1.msra.mxu0 0.0
        %1976 = vmatprep.subr.mxu0 0.0
        %1977 = vmatpush1.msra.mxu0 0.0
        %1978 = vmatprep.subr.mxu0 0.0
        %1979 = vmatpush1.msra.mxu0 0.0
        %1980 = vmatprep.subr.mxu0 0.0
        %1981 = vmatpush1.msra.mxu0 0.0
        %1982 = vmatprep.subr.mxu0 0.0
        %1983 = vmatpush1.msra.mxu0 0.0
        %1984 = vmatprep.subr.mxu0 0.0
        %1985 = vmatpush1.msra.mxu0 0.0
        %1986 = vmatprep.subr.mxu0 0.0
        %1987 = vmatpush1.msra.mxu0 0.0
        %1988 = vmatprep.subr.mxu0 0.0
        %1989 = vmatpush1.msra.mxu0 0.0
        %1990 = vmatprep.subr.mxu0 0.0
        %1991 = vmatpush1.msra.mxu0 0.0
        %1992 = vmatprep.subr.mxu0 0.0
        %1993 = vmatpush1.msra.mxu0 0.0
        %1994 = vmatprep.subr.mxu0 0.0
        %1995 = vmatpush1.msra.mxu0 0.0
        %1996 = vmatprep.subr.mxu0 0.0
        %1997 = vmatpush1.msra.mxu0 0.0
        %1998 = vmatprep.subr.mxu0 %v1966
        %1999 = vmatpush1.msra.mxu0 %v1964
        %2000 = vmatprep.subr.mxu0 0.0
        %2001 = vmatpush2.msra.mxu0 0.0
        %2002 = vmatprep.subr.mxu0 0.0
        %2003 = vmatpush2.msra.mxu0 0.0
        %2004 = vmatprep.subr.mxu0 0.0
        %2005 = vmatpush2.msra.mxu0 0.0
        %2006 = vmatprep.subr.mxu0 0.0
        %2007 = vmatpush2.msra.mxu0 0.0
        %2008 = vmatprep.subr.mxu0 0.0
        %2009 = vmatpush2.msra.mxu0 0.0
        %2010 = vmatprep.subr.mxu0 0.0
        %2011 = vmatpush2.msra.mxu0 0.0
        %2012 = vmatprep.subr.mxu0 0.0
        %2013 = vmatpush2.msra.mxu0 0.0
        %2014 = vmatprep.subr.mxu0 0.0
        %2015 = vmatpush2.msra.mxu0 0.0
        %2016 = vmatprep.subr.mxu0 0.0
        %2017 = vmatpush2.msra.mxu0 0.0
        %2018 = vmatprep.subr.mxu0 0.0
        %2019 = vmatpush2.msra.mxu0 0.0
        %2020 = vmatprep.subr.mxu0 0.0
        %2021 = vmatpush2.msra.mxu0 0.0
        %2022 = vmatprep.subr.mxu0 0.0
        %2023 = vmatpush2.msra.mxu0 0.0
        %2024 = vmatprep.subr.mxu0 0.0
        %2025 = vmatpush2.msra.mxu0 0.0
        %2026 = vmatprep.subr.mxu0 0.0
        %2027 = vmatpush2.msra.mxu0 0.0
        %2028 = vmatprep.subr.mxu0 0.0
        %2029 = vmatpush2.msra.mxu0 0.0
        %2030 = vmatprep.subr.mxu0 0.0
        %2031 = vmatpush2.msra.mxu0 0.0
        %2032 = vmatprep.mubr.f32.mxu0 0.0
        %2033 = vmatmul.mubr.f32.gmra.mxu0 %v1962
        %v2034 = vpop.f32.mrf.mxu0
        %v2035 = vadd.f32 0.0, %v2034
        %v2036 = vpop.f32.mrf.mxu0
        %v2037 = vadd.f32 0.0, %v2036
        %2038 = vdwg.mxu0
        %v2039 = vadd.f32 %v1947, %v2035
        %v2040 = vadd.f32 %v1948, %v2037
        %v2041 = vld [vmem:[%s956] sm:$0xff]
        %v2044 = vcombine.high %v1501, %v1501
        %2045 = vrot.lane.b32.xlu0 %v1501, 96
        %v2046 = vpop.permute.xlu0 %2045
        %2047 = vrot.lane.b32.xlu0 %v2044, 96
        %v2048 = vpop.permute.xlu0 %2047
        %2049 = vrot.lane.b32.xlu0 %v1502, 96
        %v2050 = vpop.permute.xlu0 %2049
        %v2051 = vsel %vm967, %v2046, %v2048
        %v2052 = vsel %vm967, %v2048, %v2050
        %v2054 = vsel %vm423, %v2041, 0
        %v2056 = vsel %vm427, %v2051, 0
        %v2058 = vsel %vm427, %v2052, 0
        %2060 = vmatprep.subr.mxu0 0.0
        %2061 = vmatpush1.msra.mxu0 0.0
        %2062 = vmatprep.subr.mxu0 0.0
        %2063 = vmatpush1.msra.mxu0 0.0
        %2064 = vmatprep.subr.mxu0 0.0
        %2065 = vmatpush1.msra.mxu0 0.0
        %2066 = vmatprep.subr.mxu0 0.0
        %2067 = vmatpush1.msra.mxu0 0.0
        %2068 = vmatprep.subr.mxu0 0.0
        %2069 = vmatpush1.msra.mxu0 0.0
        %2070 = vmatprep.subr.mxu0 0.0
        %2071 = vmatpush1.msra.mxu0 0.0
        %2072 = vmatprep.subr.mxu0 0.0
        %2073 = vmatpush1.msra.mxu0 0.0
        %2074 = vmatprep.subr.mxu0 0.0
        %2075 = vmatpush1.msra.mxu0 0.0
        %2076 = vmatprep.subr.mxu0 0.0
        %2077 = vmatpush1.msra.mxu0 0.0
        %2078 = vmatprep.subr.mxu0 0.0
        %2079 = vmatpush1.msra.mxu0 0.0
        %2080 = vmatprep.subr.mxu0 0.0
        %2081 = vmatpush1.msra.mxu0 0.0
        %2082 = vmatprep.subr.mxu0 0.0
        %2083 = vmatpush1.msra.mxu0 0.0
        %2084 = vmatprep.subr.mxu0 0.0
        %2085 = vmatpush1.msra.mxu0 0.0
        %2086 = vmatprep.subr.mxu0 0.0
        %2087 = vmatpush1.msra.mxu0 0.0
        %2088 = vmatprep.subr.mxu0 0.0
        %2089 = vmatpush1.msra.mxu0 0.0
        %2090 = vmatprep.subr.mxu0 %v2058
        %2091 = vmatpush1.msra.mxu0 %v2056
        %2092 = vmatprep.subr.mxu0 0.0
        %2093 = vmatpush2.msra.mxu0 0.0
        %2094 = vmatprep.subr.mxu0 0.0
        %2095 = vmatpush2.msra.mxu0 0.0
        %2096 = vmatprep.subr.mxu0 0.0
        %2097 = vmatpush2.msra.mxu0 0.0
        %2098 = vmatprep.subr.mxu0 0.0
        %2099 = vmatpush2.msra.mxu0 0.0
        %2100 = vmatprep.subr.mxu0 0.0
        %2101 = vmatpush2.msra.mxu0 0.0
        %2102 = vmatprep.subr.mxu0 0.0
        %2103 = vmatpush2.msra.mxu0 0.0
        %2104 = vmatprep.subr.mxu0 0.0
        %2105 = vmatpush2.msra.mxu0 0.0
        %2106 = vmatprep.subr.mxu0 0.0
        %2107 = vmatpush2.msra.mxu0 0.0
        %2108 = vmatprep.subr.mxu0 0.0
        %2109 = vmatpush2.msra.mxu0 0.0
        %2110 = vmatprep.subr.mxu0 0.0
        %2111 = vmatpush2.msra.mxu0 0.0
        %2112 = vmatprep.subr.mxu0 0.0
        %2113 = vmatpush2.msra.mxu0 0.0
        %2114 = vmatprep.subr.mxu0 0.0
        %2115 = vmatpush2.msra.mxu0 0.0
        %2116 = vmatprep.subr.mxu0 0.0
        %2117 = vmatpush2.msra.mxu0 0.0
        %2118 = vmatprep.subr.mxu0 0.0
        %2119 = vmatpush2.msra.mxu0 0.0
        %2120 = vmatprep.subr.mxu0 0.0
        %2121 = vmatpush2.msra.mxu0 0.0
        %2122 = vmatprep.subr.mxu0 0.0
        %2123 = vmatpush2.msra.mxu0 0.0
        %2124 = vmatprep.mubr.f32.mxu0 0.0
        %2125 = vmatmul.mubr.f32.gmra.mxu0 %v2054
        %v2126 = vpop.f32.mrf.mxu0
        %v2127 = vadd.f32 0.0, %v2126
        %v2128 = vpop.f32.mrf.mxu0
        %v2129 = vadd.f32 0.0, %v2128
        %2130 = vdwg.mxu0
        %v2131 = vadd.f32 %v2039, %v2127
        %v2132 = vadd.f32 %v2040, %v2129
        %v2133 = vld [vmem:[%s1050] sm:$0xff]
        %2134 = vrot.lane.b32.xlu0 %v1492, 95
        %v2135 = vpop.permute.xlu0 %2134
        %2136 = vrot.lane.b32.xlu0 %v1509, 95
        %v2137 = vpop.permute.xlu0 %2136
        %2138 = vrot.lane.b32.xlu0 %v1493, 95
        %v2139 = vpop.permute.xlu0 %2138
        %v2140 = vsel %vm1058, %v2135, %v2137
        %v2141 = vsel %vm1058, %v2137, %v2139
        %v2143 = vsel %vm423, %v2133, 0
        %v2145 = vsel %vm427, %v2140, 0
        %v2147 = vsel %vm427, %v2141, 0
        %2149 = vmatprep.subr.mxu0 0.0
        %2150 = vmatpush1.msra.mxu0 0.0
        %2151 = vmatprep.subr.mxu0 0.0
        %2152 = vmatpush1.msra.mxu0 0.0
        %2153 = vmatprep.subr.mxu0 0.0
        %2154 = vmatpush1.msra.mxu0 0.0
        %2155 = vmatprep.subr.mxu0 0.0
        %2156 = vmatpush1.msra.mxu0 0.0
        %2157 = vmatprep.subr.mxu0 0.0
        %2158 = vmatpush1.msra.mxu0 0.0
        %2159 = vmatprep.subr.mxu0 0.0
        %2160 = vmatpush1.msra.mxu0 0.0
        %2161 = vmatprep.subr.mxu0 0.0
        %2162 = vmatpush1.msra.mxu0 0.0
        %2163 = vmatprep.subr.mxu0 0.0
        %2164 = vmatpush1.msra.mxu0 0.0
        %2165 = vmatprep.subr.mxu0 0.0
        %2166 = vmatpush1.msra.mxu0 0.0
        %2167 = vmatprep.subr.mxu0 0.0
        %2168 = vmatpush1.msra.mxu0 0.0
        %2169 = vmatprep.subr.mxu0 0.0
        %2170 = vmatpush1.msra.mxu0 0.0
        %2171 = vmatprep.subr.mxu0 0.0
        %2172 = vmatpush1.msra.mxu0 0.0
        %2173 = vmatprep.subr.mxu0 0.0
        %2174 = vmatpush1.msra.mxu0 0.0
        %2175 = vmatprep.subr.mxu0 0.0
        %2176 = vmatpush1.msra.mxu0 0.0
        %2177 = vmatprep.subr.mxu0 0.0
        %2178 = vmatpush1.msra.mxu0 0.0
        %2179 = vmatprep.subr.mxu0 %v2147
        %2180 = vmatpush1.msra.mxu0 %v2145
        %2181 = vmatprep.subr.mxu0 0.0
        %2182 = vmatpush2.msra.mxu0 0.0
        %2183 = vmatprep.subr.mxu0 0.0
        %2184 = vmatpush2.msra.mxu0 0.0
        %2185 = vmatprep.subr.mxu0 0.0
        %2186 = vmatpush2.msra.mxu0 0.0
        %2187 = vmatprep.subr.mxu0 0.0
        %2188 = vmatpush2.msra.mxu0 0.0
        %2189 = vmatprep.subr.mxu0 0.0
        %2190 = vmatpush2.msra.mxu0 0.0
        %2191 = vmatprep.subr.mxu0 0.0
        %2192 = vmatpush2.msra.mxu0 0.0
        %2193 = vmatprep.subr.mxu0 0.0
        %2194 = vmatpush2.msra.mxu0 0.0
        %2195 = vmatprep.subr.mxu0 0.0
        %2196 = vmatpush2.msra.mxu0 0.0
        %2197 = vmatprep.subr.mxu0 0.0
        %2198 = vmatpush2.msra.mxu0 0.0
        %2199 = vmatprep.subr.mxu0 0.0
        %2200 = vmatpush2.msra.mxu0 0.0
        %2201 = vmatprep.subr.mxu0 0.0
        %2202 = vmatpush2.msra.mxu0 0.0
        %2203 = vmatprep.subr.mxu0 0.0
        %2204 = vmatpush2.msra.mxu0 0.0
        %2205 = vmatprep.subr.mxu0 0.0
        %2206 = vmatpush2.msra.mxu0 0.0
        %2207 = vmatprep.subr.mxu0 0.0
        %2208 = vmatpush2.msra.mxu0 0.0
        %2209 = vmatprep.subr.mxu0 0.0
        %2210 = vmatpush2.msra.mxu0 0.0
        %2211 = vmatprep.subr.mxu0 0.0
        %2212 = vmatpush2.msra.mxu0 0.0
        %2213 = vmatprep.mubr.f32.mxu0 0.0
        %2214 = vmatmul.mubr.f32.gmra.mxu0 %v2143
        %v2215 = vpop.f32.mrf.mxu0
        %v2216 = vadd.f32 0.0, %v2215
        %v2217 = vpop.f32.mrf.mxu0
        %v2218 = vadd.f32 0.0, %v2217
        %2219 = vdwg.mxu0
        %v2220 = vadd.f32 %v2131, %v2216
        %v2221 = vadd.f32 %v2132, %v2218
        %v2222 = vld [vmem:[%s1141] sm:$0xff]
        %v2225 = vcombine.high %v1503, %v1503
        %2226 = vrot.lane.b32.xlu0 %v1503, 94
        %v2227 = vpop.permute.xlu0 %2226
        %2228 = vrot.lane.b32.xlu0 %v2225, 94
        %v2229 = vpop.permute.xlu0 %2228
        %2230 = vrot.lane.b32.xlu0 %v1504, 94
        %v2231 = vpop.permute.xlu0 %2230
        %v2232 = vsel %vm1152, %v2227, %v2229
        %v2233 = vsel %vm1152, %v2229, %v2231
        %v2235 = vsel %vm423, %v2222, 0
        %v2237 = vsel %vm427, %v2232, 0
        %v2239 = vsel %vm427, %v2233, 0
        %2241 = vmatprep.subr.mxu0 0.0
        %2242 = vmatpush1.msra.mxu0 0.0
        %2243 = vmatprep.subr.mxu0 0.0
        %2244 = vmatpush1.msra.mxu0 0.0
        %2245 = vmatprep.subr.mxu0 0.0
        %2246 = vmatpush1.msra.mxu0 0.0
        %2247 = vmatprep.subr.mxu0 0.0
        %2248 = vmatpush1.msra.mxu0 0.0
        %2249 = vmatprep.subr.mxu0 0.0
        %2250 = vmatpush1.msra.mxu0 0.0
        %2251 = vmatprep.subr.mxu0 0.0
        %2252 = vmatpush1.msra.mxu0 0.0
        %2253 = vmatprep.subr.mxu0 0.0
        %2254 = vmatpush1.msra.mxu0 0.0
        %2255 = vmatprep.subr.mxu0 0.0
        %2256 = vmatpush1.msra.mxu0 0.0
        %2257 = vmatprep.subr.mxu0 0.0
        %2258 = vmatpush1.msra.mxu0 0.0
        %2259 = vmatprep.subr.mxu0 0.0
        %2260 = vmatpush1.msra.mxu0 0.0
        %2261 = vmatprep.subr.mxu0 0.0
        %2262 = vmatpush1.msra.mxu0 0.0
        %2263 = vmatprep.subr.mxu0 0.0
        %2264 = vmatpush1.msra.mxu0 0.0
        %2265 = vmatprep.subr.mxu0 0.0
        %2266 = vmatpush1.msra.mxu0 0.0
        %2267 = vmatprep.subr.mxu0 0.0
        %2268 = vmatpush1.msra.mxu0 0.0
        %2269 = vmatprep.subr.mxu0 0.0
        %2270 = vmatpush1.msra.mxu0 0.0
        %2271 = vmatprep.subr.mxu0 %v2239
        %2272 = vmatpush1.msra.mxu0 %v2237
        %2273 = vmatprep.subr.mxu0 0.0
        %2274 = vmatpush2.msra.mxu0 0.0
        %2275 = vmatprep.subr.mxu0 0.0
        %2276 = vmatpush2.msra.mxu0 0.0
        %2277 = vmatprep.subr.mxu0 0.0
        %2278 = vmatpush2.msra.mxu0 0.0
        %2279 = vmatprep.subr.mxu0 0.0
        %2280 = vmatpush2.msra.mxu0 0.0
        %2281 = vmatprep.subr.mxu0 0.0
        %2282 = vmatpush2.msra.mxu0 0.0
        %2283 = vmatprep.subr.mxu0 0.0
        %2284 = vmatpush2.msra.mxu0 0.0
        %2285 = vmatprep.subr.mxu0 0.0
        %2286 = vmatpush2.msra.mxu0 0.0
        %2287 = vmatprep.subr.mxu0 0.0
        %2288 = vmatpush2.msra.mxu0 0.0
        %2289 = vmatprep.subr.mxu0 0.0
        %2290 = vmatpush2.msra.mxu0 0.0
        %2291 = vmatprep.subr.mxu0 0.0
        %2292 = vmatpush2.msra.mxu0 0.0
        %2293 = vmatprep.subr.mxu0 0.0
        %2294 = vmatpush2.msra.mxu0 0.0
        %2295 = vmatprep.subr.mxu0 0.0
        %2296 = vmatpush2.msra.mxu0 0.0
        %2297 = vmatprep.subr.mxu0 0.0
        %2298 = vmatpush2.msra.mxu0 0.0
        %2299 = vmatprep.subr.mxu0 0.0
        %2300 = vmatpush2.msra.mxu0 0.0
        %2301 = vmatprep.subr.mxu0 0.0
        %2302 = vmatpush2.msra.mxu0 0.0
        %2303 = vmatprep.subr.mxu0 0.0
        %2304 = vmatpush2.msra.mxu0 0.0
        %2305 = vmatprep.mubr.f32.mxu0 0.0
        %2306 = vmatmul.mubr.f32.gmra.mxu0 %v2235
        %v2307 = vpop.f32.mrf.mxu0
        %v2308 = vadd.f32 0.0, %v2307
        %v2309 = vpop.f32.mrf.mxu0
        %v2310 = vadd.f32 0.0, %v2309
        %2311 = vdwg.mxu0
        %v2312 = vadd.f32 %v2220, %v2308
        %v2313 = vadd.f32 %v2221, %v2310
        %v2314 = vld [vmem:[%s4] sm:$0xff]
        %2316 = vset.pattern.permute.xlu0 0
        %2317 = vperm.xlu0 %2316, %v2314
        %v2318 = vpop.permute.xlu0 %2317
        %v2320 = vadd.f32 %v2312, %v2318
        %v2321 = vadd.f32 %v2313, %v2318
        %v2322 = vmax.f32 %v2320, 0.0
        %v2323 = vmax.f32 %v2321, 0.0
        %v2324 = vadd.f32 %v2322, %v2323
        %2325 = vadd.xlane.f32.xlu0 %v2324
        %v2326 = vpop.xlane.xlu0 %2325
        %v2327 = vmul.f32 %v2326, %v1248
        %v2329 = vrot.slane %v2327, 4
        %v2331 = vadd.f32 %v2327, %v2329
        %v2332 = vld [vmem:[%s5] sm:$0xff]
        %v2333 = vld [vmem:[%s5 + $0x8] sm:$0xff]
        %v2334 = vld [vmem:[%s5 + $0x10] sm:$0xff]
        %v2335 = vld [vmem:[%s5 + $0x18] sm:$0xff]
        %v2336 = vld [vmem:[%s6] sm:$0xff]
        %v2337 = vld [vmem:[%s6 + $0x8] sm:$0xff]
        %v2338 = vld [vmem:[%s6 + $0x10] sm:$0xff]
        %v2339 = vld [vmem:[%s6 + $0x18] sm:$0xff]
        %v2341 = vsel %vm423, %v2332, 0
        %v2344 = vsel %vm423, %v2333, 0
        %v2347 = vsel %vm423, %v2334, 0
        %v2350 = vsel %vm423, %v2335, 0
        %v2353 = vsel %vm427, %v2331, 0
        %2355 = vmatprep.subr.mxu0 0.0
        %2356 = vmatpush1.msra.mxu0 0.0
        %2357 = vmatprep.subr.mxu0 0.0
        %2358 = vmatpush1.msra.mxu0 0.0
        %2359 = vmatprep.subr.mxu0 0.0
        %2360 = vmatpush1.msra.mxu0 0.0
        %2361 = vmatprep.subr.mxu0 0.0
        %2362 = vmatpush1.msra.mxu0 0.0
        %2363 = vmatprep.subr.mxu0 0.0
        %2364 = vmatpush1.msra.mxu0 0.0
        %2365 = vmatprep.subr.mxu0 0.0
        %2366 = vmatpush1.msra.mxu0 0.0
        %2367 = vmatprep.subr.mxu0 0.0
        %2368 = vmatpush1.msra.mxu0 0.0
        %2369 = vmatprep.subr.mxu0 0.0
        %2370 = vmatpush1.msra.mxu0 0.0
        %2371 = vmatprep.subr.mxu0 0.0
        %2372 = vmatpush1.msra.mxu0 0.0
        %2373 = vmatprep.subr.mxu0 0.0
        %2374 = vmatpush1.msra.mxu0 0.0
        %2375 = vmatprep.subr.mxu0 0.0
        %2376 = vmatpush1.msra.mxu0 0.0
        %2377 = vmatprep.subr.mxu0 0.0
        %2378 = vmatpush1.msra.mxu0 0.0
        %2379 = vmatprep.subr.mxu0 0.0
        %2380 = vmatpush1.msra.mxu0 0.0
        %2381 = vmatprep.subr.mxu0 0.0
        %2382 = vmatpush1.msra.mxu0 0.0
        %2383 = vmatprep.subr.mxu0 0.0
        %2384 = vmatpush1.msra.mxu0 0.0
        %2385 = vmatprep.subr.mxu0 0.0
        %2386 = vmatpush1.msra.mxu0 %v2353
        %2387 = vmatprep.subr.mxu0 0.0
        %2388 = vmatpush2.msra.mxu0 0.0
        %2389 = vmatprep.subr.mxu0 0.0
        %2390 = vmatpush2.msra.mxu0 0.0
        %2391 = vmatprep.subr.mxu0 0.0
        %2392 = vmatpush2.msra.mxu0 0.0
        %2393 = vmatprep.subr.mxu0 0.0
        %2394 = vmatpush2.msra.mxu0 0.0
        %2395 = vmatprep.subr.mxu0 0.0
        %2396 = vmatpush2.msra.mxu0 0.0
        %2397 = vmatprep.subr.mxu0 0.0
        %2398 = vmatpush2.msra.mxu0 0.0
        %2399 = vmatprep.subr.mxu0 0.0
        %2400 = vmatpush2.msra.mxu0 0.0
        %2401 = vmatprep.subr.mxu0 0.0
        %2402 = vmatpush2.msra.mxu0 0.0
        %2403 = vmatprep.subr.mxu0 0.0
        %2404 = vmatpush2.msra.mxu0 0.0
        %2405 = vmatprep.subr.mxu0 0.0
        %2406 = vmatpush2.msra.mxu0 0.0
        %2407 = vmatprep.subr.mxu0 0.0
        %2408 = vmatpush2.msra.mxu0 0.0
        %2409 = vmatprep.subr.mxu0 0.0
        %2410 = vmatpush2.msra.mxu0 0.0
        %2411 = vmatprep.subr.mxu0 0.0
        %2412 = vmatpush2.msra.mxu0 0.0
        %2413 = vmatprep.subr.mxu0 0.0
        %2414 = vmatpush2.msra.mxu0 0.0
        %2415 = vmatprep.subr.mxu0 0.0
        %2416 = vmatpush2.msra.mxu0 0.0
        %2417 = vmatprep.subr.mxu0 0.0
        %2418 = vmatpush2.msra.mxu0 0.0
        %2419 = vmatprep.mubr.f32.mxu0 0.0
        %2420 = vmatmul.mubr.f32.gmra.mxu0 %v2341
        %v2421 = vpop.f32.mrf.mxu0
        %v2422 = vadd.f32 %v2336, %v2421
        %v2423 = vpop.f32.mrf.mxu0
        %2424 = vmatprep.mubr.f32.mxu0 0.0
        %2425 = vmatmul.mubr.f32.gmra.mxu0 %v2344
        %v2426 = vpop.f32.mrf.mxu0
        %v2427 = vadd.f32 %v2337, %v2426
        %v2428 = vpop.f32.mrf.mxu0
        %2429 = vmatprep.mubr.f32.mxu0 0.0
        %2430 = vmatmul.mubr.f32.gmra.mxu0 %v2347
        %v2431 = vpop.f32.mrf.mxu0
        %v2432 = vadd.f32 %v2338, %v2431
        %v2433 = vpop.f32.mrf.mxu0
        %2434 = vmatprep.mubr.f32.mxu0 0.0
        %2435 = vmatmul.mubr.f32.gmra.mxu0 %v2350
        %v2436 = vpop.f32.mrf.mxu0
        %v2437 = vadd.f32 %v2339, %v2436
        %v2438 = vpop.f32.mrf.mxu0
        %2439 = vdwg.mxu0
        %v2440 = vmax.f32 %v2422, 0.0
        %v2441 = vmax.f32 %v2427, 0.0
        %v2442 = vmax.f32 %v2432, 0.0
        %v2443 = vmax.f32 %v2437, 0.0
        %v2444 = vld [vmem:[%s7] sm:$0xff]
        %v2445 = vld [vmem:[%s8] sm:$0xff]
        %v2447 = vsel %vm393, %v2444, 0
        %2449 = vmatprep.subr.mxu0 0.0
        %2450 = vmatpush1.msra.mxu0 0.0
        %2451 = vmatprep.subr.mxu0 0.0
        %2452 = vmatpush1.msra.mxu0 0.0
        %2453 = vmatprep.subr.mxu0 0.0
        %2454 = vmatpush1.msra.mxu0 0.0
        %2455 = vmatprep.subr.mxu0 0.0
        %2456 = vmatpush1.msra.mxu0 0.0
        %2457 = vmatprep.subr.mxu0 0.0
        %2458 = vmatpush1.msra.mxu0 0.0
        %2459 = vmatprep.subr.mxu0 0.0
        %2460 = vmatpush1.msra.mxu0 0.0
        %2461 = vmatprep.subr.mxu0 0.0
        %2462 = vmatpush1.msra.mxu0 0.0
        %2463 = vmatprep.subr.mxu0 0.0
        %2464 = vmatpush1.msra.mxu0 0.0
        %2465 = vmatprep.subr.mxu0 0.0
        %2466 = vmatpush1.msra.mxu0 0.0
        %2467 = vmatprep.subr.mxu0 0.0
        %2468 = vmatpush1.msra.mxu0 0.0
        %2469 = vmatprep.subr.mxu0 0.0
        %2470 = vmatpush1.msra.mxu0 0.0
        %2471 = vmatprep.subr.mxu0 0.0
        %2472 = vmatpush1.msra.mxu0 0.0
        %2473 = vmatprep.subr.mxu0 0.0
        %2474 = vmatpush1.msra.mxu0 %v2443
        %2475 = vmatprep.subr.mxu0 0.0
        %2476 = vmatpush1.msra.mxu0 %v2442
        %2477 = vmatprep.subr.mxu0 0.0
        %2478 = vmatpush1.msra.mxu0 %v2441
        %2479 = vmatprep.subr.mxu0 0.0
        %2480 = vmatpush1.msra.mxu0 %v2440
        %2481 = vmatprep.subr.mxu0 0.0
        %2482 = vmatpush2.msra.mxu0 0.0
        %2483 = vmatprep.subr.mxu0 0.0
        %2484 = vmatpush2.msra.mxu0 0.0
        %2485 = vmatprep.subr.mxu0 0.0
        %2486 = vmatpush2.msra.mxu0 0.0
        %2487 = vmatprep.subr.mxu0 0.0
        %2488 = vmatpush2.msra.mxu0 0.0
        %2489 = vmatprep.subr.mxu0 0.0
        %2490 = vmatpush2.msra.mxu0 0.0
        %2491 = vmatprep.subr.mxu0 0.0
        %2492 = vmatpush2.msra.mxu0 0.0
        %2493 = vmatprep.subr.mxu0 0.0
        %2494 = vmatpush2.msra.mxu0 0.0
        %2495 = vmatprep.subr.mxu0 0.0
        %2496 = vmatpush2.msra.mxu0 0.0
        %2497 = vmatprep.subr.mxu0 0.0
        %2498 = vmatpush2.msra.mxu0 0.0
        %2499 = vmatprep.subr.mxu0 0.0
        %2500 = vmatpush2.msra.mxu0 0.0
        %2501 = vmatprep.subr.mxu0 0.0
        %2502 = vmatpush2.msra.mxu0 0.0
        %2503 = vmatprep.subr.mxu0 0.0
        %2504 = vmatpush2.msra.mxu0 0.0
        %2505 = vmatprep.subr.mxu0 0.0
        %2506 = vmatpush2.msra.mxu0 0.0
        %2507 = vmatprep.subr.mxu0 0.0
        %2508 = vmatpush2.msra.mxu0 0.0
        %2509 = vmatprep.subr.mxu0 0.0
        %2510 = vmatpush2.msra.mxu0 0.0
        %2511 = vmatprep.subr.mxu0 0.0
        %2512 = vmatpush2.msra.mxu0 0.0
        %2513 = vmatprep.mubr.f32.mxu0 0.0
        %2514 = vmatmul.mubr.f32.gmra.mxu0 %v2447
        %v2515 = vpop.f32.mrf.mxu0
        %v2516 = vadd.f32 %v2445, %v2515
        %v2517 = vpop.f32.mrf.mxu0
        %2518 = vdwg.mxu0
        %v2520 = vrot.slane %v2516, 4
        %v2522 = vmax.f32 %v2516, %v2520
        %v2523 = vsub.f32 %v2516, %v2522
        %v2524 = vmul.f32 %v2523, 1.442695
        %v2525 = vpow.pop %v2524
        %v2527 = vrot.slane %v2522, 4
        %v2529 = vsub.f32 %v2516, %v2527
        %v2530 = vmul.f32 %v2529, 1.442695
        %v2531 = vpow.pop %v2530
        %v2533 = vrot.slane %v2531, 4
        %v2535 = vadd.f32 %v2525, %v2533
        %v2536 = vrcp.pop %v2535
        %v2537 = vmul.f32 %v2525, %v2536
        %2539 = vset.pattern.permute.xlu0 0
        %2540 = vperm.xlu0 %2539, %v2537
        %v2541 = vpop.permute.xlu0 %2540
        %v2543 = vmul.f32 %v2541, %v2322
        %v2544 = vmul.f32 %v2541, %v2323
        %v2546 = vrot.slane %v2536, 4
        %v2548 = vmul.f32 %v2531, %v2546
        %2550 = vset.pattern.permute.xlu0 0
        %2551 = vperm.xlu0 %2550, %v2548
        %v2552 = vpop.permute.xlu0 %2551
        %v2554 = vmul.f32 %v2552, %v2322
        %v2555 = vmul.f32 %v2552, %v2323
        %v2558 = vrot.slane %v2554, 4
        %v2559 = vrot.slane %v2555, 4
        %v2562 = vadd.f32 %v2543, %v2558
        %v2563 = vadd.f32 %v2544, %v2559
        %v2566 = vcombine.low %v2562, %v2563
        %s2568 = scalar_lea.vmem %s328, 8 [#allocation2]
        %2569 = vst [vmem:[%s2568] sm:$0xff] %v2566
        %s2570 = sand.u32 %s225, 1
        %s2571 = scalar_lea.sflag [#allocation3], %s2570
        %s2572 = sand.u32 %s225, 1
        %s2573 = smul.addr %s2572, 16
        %s2574 = scalar_lea.vmem [#allocation2], %s2573
        // Predicated region
        $region57: #{tpu_custom_call.1} parent=55 // pred_check
          %p2575 = pneg %p235
        $region58: #{tpu_custom_call.1} parent=55 // pred_check_branch
          %2577 = sbr.rel (%p2575) target = $region60
        $region59: #{tpu_custom_call.1} parent=55 // pred_region
          %s2578 = smul.u32 2, %s23
          %s2580 = ssub.s32 256, 256
          %2581 = vsyncadd %s2571, %s2580
          %s2582 = smul.addr %s2578, 2
          %s2583 = smul.addr %s2582, 64
          %s2584 = scalar_lea.hbm %s9, %s2583
          %s2585 = sshll.u32 %s2574, 4
          %s2586 = int_to_ptr.vmem [resolvable:$true] %s2585
          %2591 = dma.vmem_to_hbm [thread:$0]  %s2586, 256, %s2584, %s2571, 128, 128, 8
        $region60: #{tpu_custom_call.1} parent=55 // pred_fallthru
          _
      $region56: #{tpu_custom_call.1} parent=5 // pred_fallthru
        _
      %p2592 = scmp.le.s32.totalorder 2, %s18
      // Predicated region
      $region61: #{tpu_custom_call.1} parent=5 // pred_check
        %p2593 = pneg %p2592
      $region62: #{tpu_custom_call.1} parent=5 // pred_check_branch
        %2595 = sbr.rel (%p2593) target = $region64
      $region63: #{tpu_custom_call.1} parent=5 // pred_region
        %s2596 = ssub.s32 %s18, 2
        // Predicated region
        $region65: #{tpu_custom_call.1} parent=63 // pred_check
          %p2597 = pneg %p241
        $region66: #{tpu_custom_call.1} parent=63 // pred_check_branch
          %2599 = sbr.rel (%p2597) target = $region68
        $region67: #{tpu_custom_call.1} parent=63 // pred_region
          %s2600 = sand.u32 %s226, 1
          %s2601 = scalar_lea.sflag [#allocation3], %s2600
          %s2602 = sand.u32 %s226, 1
          %s2603 = smul.addr %s2602, 16
          %s2604 = scalar_lea.vmem [#allocation2], %s2603
          %2605 = dma.done %s2601, 256
        $region68: #{tpu_custom_call.1} parent=63 // pred_fallthru
          _
      $region64: #{tpu_custom_call.1} parent=5 // pred_fallthru
        _
    $region6: #{tpu_custom_call.1} parent=1 // loop_footer
      %s22 = sadd.s32 1, %s18
    $region7: #{tpu_custom_call.1} parent=1 // loop_footer_branch
      %17 = sbr.rel target = $region3
    $region8: #{tpu_custom_call.1} parent=1 // loop_exit
      _
    %2606 = vsyncpa [#allocation3], 1
    %s2607 = scalar_lea.sflag [#allocation3], 1
    %2608 = vsyncpa %s2607, 1

// kernel: tpu_custom_call.1
$region0: #{tpu_custom_call.1}
  #allocation0 [shape = 'u32[]', space=smem, size = 0x4, offset = 0x4, fixed_abs, tag = 'smem constant byte address 0x4 - core index']
  #allocation1 [shape = 'u32[144,128]{1,0:T(1,128)}', space=vmem, size = 0x12000, scoped, tag = 'internal scratch']
  %s0 = inlined_call_operand.vmem [shape: f32[4,4,384], index: 0, kind: input, shape index: {}]
  %s1 = inlined_call_operand.vmem [shape: f32[1,256], index: 1, kind: input, shape index: {}]
  %s2 = inlined_call_operand.vmem [shape: f32[1,256], index: 2, kind: input, shape index: {}]
  %s3 = inlined_call_operand.vmem [shape: f32[9,8,4], index: 3, kind: input, shape index: {}]
  %s4 = inlined_call_operand.vmem [shape: f32[8,1], index: 4, kind: input, shape index: {}]
  %s5 = inlined_call_operand.vmem [shape: f32[32,4], index: 5, kind: input, shape index: {}]
  %s6 = inlined_call_operand.vmem [shape: f32[32,1], index: 6, kind: input, shape index: {}]
  %s7 = inlined_call_operand.vmem [shape: f32[8,32], index: 7, kind: input, shape index: {}]
  %s8 = inlined_call_operand.vmem [shape: f32[8,1], index: 8, kind: input, shape index: {}]
  %s9 = inlined_call_operand.hbm [shape: f32[4,4,256], index: 9, kind: output, shape index: {}]
  %s10 = sld [smem:[#allocation0]]
  $region69: #{tpu_custom_call.1} parent=0
    _
  %s12 = ssub.s32 1, %s10
  %s13 = scalar_select 0, %s12, %s10
  $region1: #{tpu_custom_call.1} parent=0
    #allocation2 [shape = 'u8[16384]{0}', space=vmem, size = 0x4000, scoped, tag = 'output window, operand 0']
    #allocation3 [shape = 's32[2]{0}', space=sflag, size = 0x8, scoped, tag = 'scoped memory for tpu_custom_call.1']
    %14 = vsyncpa [#allocation3], 0
    %s15 = scalar_lea.sflag [#allocation3], 1
    %16 = vsyncpa %s15, 0
    loop: start=0, step=1, limit=4
    $region2: #{tpu_custom_call.1} parent=1 // loop_pre_header
      _
    $region3: #{tpu_custom_call.1} parent=1 // loop_header
      %s18 = sphi 0, %s22
      %p19 = scmp.ge.s32.totalorder %s18, 4
      %s28 = sphi 0, %s30
      %s31 = sphi 0, %s28
      %s32 = sphi 0, %s31
      %s48 = sphi 0, %s32
      %s52 = sphi 0, %s52
      %s54 = sphi 0, %s52
      %s55 = sphi 0, %s54
      %s69 = sphi 0, %s55
      %s73 = sphi 0, %s73
      %s75 = sphi 0, %s73
      %s76 = sphi 0, %s75
      %s90 = sphi 0, %s76
      %s94 = sphi 0, %s94
      %s96 = sphi 0, %s94
      %s97 = sphi 0, %s96
      %s111 = sphi 0, %s97
      %s115 = sphi 0, %s115
      %s117 = sphi 0, %s115
      %s118 = sphi 0, %s117
      %s132 = sphi 0, %s118
      %s136 = sphi 0, %s136
      %s138 = sphi 0, %s136
      %s139 = sphi 0, %s138
      %s153 = sphi 0, %s139
      %s157 = sphi 0, %s157
      %s159 = sphi 0, %s157
      %s160 = sphi 0, %s159
      %s174 = sphi 0, %s160
      %s178 = sphi 0, %s178
      %s180 = sphi 0, %s178
      %s181 = sphi 0, %s180
      %s195 = sphi 0, %s181
      %s199 = sphi 0, %s199
      %s201 = sphi 0, %s199
      %s202 = sphi 0, %s201
      %s216 = sphi 0, %s202
      %s222 = sphi 0, %s224
      %s225 = sphi 0, %s222
      %s226 = sphi 0, %s225
      %s242 = sphi 0, %s226
    $region4: #{tpu_custom_call.1} parent=1 // loop_header_branch
      %21 = sbr.rel (%p19) target = $region8
    $region5: #{tpu_custom_call.1} parent=1 // loop_body
      %s23 = ssub.s32 %s18, 1
      %s24 = ssub.s32 %s18, 2
      %s25 = sadd.s32 %s18, 1
      %s26 = ssub.s32 %s18, %s25
      %p27 = scmp.eq.s32.totalorder %s26, 0
      %s29 = sadd.s32 %s28, 1
      %s30 = scalar_select %p27, %s28, %s29
      %p33 = pneg %p27
      %p34 = scmp.eq.s32.totalorder %s18, 1
      %p35 = por %p33, %p34
      %p36 = scmp.ne.s32.totalorder %s28, %s31
      %p37 = scmp.eq.s32.totalorder %s18, 0
      %p38 = por %p36, %p37
      %p39 = scmp.ne.s32.totalorder %s28, %s31
      %p40 = scmp.eq.s32.totalorder %s23, 1
      %p41 = por %p39, %p40
      %p42 = scmp.ne.s32.totalorder %s31, %s32
      %p43 = scmp.eq.s32.totalorder %s23, 0
      %p44 = por %p42, %p43
      %p45 = scmp.ne.s32.totalorder %s31, %s32
      %p46 = scmp.eq.s32.totalorder %s24, 1
      %p47 = por %p45, %p46
      %p49 = scmp.ne.s32.totalorder %s32, %s48
      %p50 = scmp.eq.s32.totalorder %s24, 0
      %p51 = por %p49, %p50
      %s53 = sadd.s32 %s52, 1
      %p56 = scmp.eq.s32.totalorder %s18, 1
      %p57 = scmp.ne.s32.totalorder %s52, %s54
      %p58 = scmp.eq.s32.totalorder %s18, 0
      %p59 = por %p57, %p58
      %p60 = scmp.ne.s32.totalorder %s52, %s54
      %p61 = scmp.eq.s32.totalorder %s23, 1
      %p62 = por %p60, %p61
      %p63 = scmp.ne.s32.totalorder %s54, %s55
      %p64 = scmp.eq.s32.totalorder %s23, 0
      %p65 = por %p63, %p64
      %p66 = scmp.ne.s32.totalorder %s54, %s55
      %p67 = scmp.eq.s32.totalorder %s24, 1
      %p68 = por %p66, %p67
      %p70 = scmp.ne.s32.totalorder %s55, %s69
      %p71 = scmp.eq.s32.totalorder %s24, 0
      %p72 = por %p70, %p71
      %s74 = sadd.s32 %s73, 1
      %p77 = scmp.eq.s32.totalorder %s18, 1
      %p78 = scmp.ne.s32.totalorder %s73, %s75
      %p79 = scmp.eq.s32.totalorder %s18, 0
      %p80 = por %p78, %p79
      %p81 = scmp.ne.s32.totalorder %s73, %s75
      %p82 = scmp.eq.s32.totalorder %s23, 1
      %p83 = por %p81, %p82
      %p84 = scmp.ne.s32.totalorder %s75, %s76
      %p85 = scmp.eq.s32.totalorder %s23, 0
      %p86 = por %p84, %p85
      %p87 = scmp.ne.s32.totalorder %s75, %s76
      %p88 = scmp.eq.s32.totalorder %s24, 1
      %p89 = por %p87, %p88
      %p91 = scmp.ne.s32.totalorder %s76, %s90
      %p92 = scmp.eq.s32.totalorder %s24, 0
      %p93 = por %p91, %p92
      %s95 = sadd.s32 %s94, 1
      %p98 = scmp.eq.s32.totalorder %s18, 1
      %p99 = scmp.ne.s32.totalorder %s94, %s96
      %p100 = scmp.eq.s32.totalorder %s18, 0
      %p101 = por %p99, %p100
      %p102 = scmp.ne.s32.totalorder %s94, %s96
      %p103 = scmp.eq.s32.totalorder %s23, 1
      %p104 = por %p102, %p103
      %p105 = scmp.ne.s32.totalorder %s96, %s97
      %p106 = scmp.eq.s32.totalorder %s23, 0
      %p107 = por %p105, %p106
      %p108 = scmp.ne.s32.totalorder %s96, %s97
      %p109 = scmp.eq.s32.totalorder %s24, 1
      %p110 = por %p108, %p109
      %p112 = scmp.ne.s32.totalorder %s97, %s111
      %p113 = scmp.eq.s32.totalorder %s24, 0
      %p114 = por %p112, %p113
      %s116 = sadd.s32 %s115, 1
      %p119 = scmp.eq.s32.totalorder %s18, 1
      %p120 = scmp.ne.s32.totalorder %s115, %s117
      %p121 = scmp.eq.s32.totalorder %s18, 0
      %p122 = por %p120, %p121
      %p123 = scmp.ne.s32.totalorder %s115, %s117
      %p124 = scmp.eq.s32.totalorder %s23, 1
      %p125 = por %p123, %p124
      %p126 = scmp.ne.s32.totalorder %s117, %s118
      %p127 = scmp.eq.s32.totalorder %s23, 0
      %p128 = por %p126, %p127
      %p129 = scmp.ne.s32.totalorder %s117, %s118
      %p130 = scmp.eq.s32.totalorder %s24, 1
      %p131 = por %p129, %p130
      %p133 = scmp.ne.s32.totalorder %s118, %s132
      %p134 = scmp.eq.s32.totalorder %s24, 0
      %p135 = por %p133, %p134
      %s137 = sadd.s32 %s136, 1
      %p140 = scmp.eq.s32.totalorder %s18, 1
      %p141 = scmp.ne.s32.totalorder %s136, %s138
      %p142 = scmp.eq.s32.totalorder %s18, 0
      %p143 = por %p141, %p142
      %p144 = scmp.ne.s32.totalorder %s136, %s138
      %p145 = scmp.eq.s32.totalorder %s23, 1
      %p146 = por %p144, %p145
      %p147 = scmp.ne.s32.totalorder %s138, %s139
      %p148 = scmp.eq.s32.totalorder %s23, 0
      %p149 = por %p147, %p148
      %p150 = scmp.ne.s32.totalorder %s138, %s139
      %p151 = scmp.eq.s32.totalorder %s24, 1
      %p152 = por %p150, %p151
      %p154 = scmp.ne.s32.totalorder %s139, %s153
      %p155 = scmp.eq.s32.totalorder %s24, 0
      %p156 = por %p154, %p155
      %s158 = sadd.s32 %s157, 1
      %p161 = scmp.eq.s32.totalorder %s18, 1
      %p162 = scmp.ne.s32.totalorder %s157, %s159
      %p163 = scmp.eq.s32.totalorder %s18, 0
      %p164 = por %p162, %p163
      %p165 = scmp.ne.s32.totalorder %s157, %s159
      %p166 = scmp.eq.s32.totalorder %s23, 1
      %p167 = por %p165, %p166
      %p168 = scmp.ne.s32.totalorder %s159, %s160
      %p169 = scmp.eq.s32.totalorder %s23, 0
      %p170 = por %p168, %p169
      %p171 = scmp.ne.s32.totalorder %s159, %s160
      %p172 = scmp.eq.s32.totalorder %s24, 1
      %p173 = por %p171, %p172
      %p175 = scmp.ne.s32.totalorder %s160, %s174
      %p176 = scmp.eq.s32.totalorder %s24, 0
      %p177 = por %p175, %p176
      %s179 = sadd.s32 %s178, 1
      %p182 = scmp.eq.s32.totalorder %s18, 1
      %p183 = scmp.ne.s32.totalorder %s178, %s180
      %p184 = scmp.eq.s32.totalorder %s18, 0
      %p185 = por %p183, %p184
      %p186 = scmp.ne.s32.totalorder %s178, %s180
      %p187 = scmp.eq.s32.totalorder %s23, 1
      %p188 = por %p186, %p187
      %p189 = scmp.ne.s32.totalorder %s180, %s181
      %p190 = scmp.eq.s32.totalorder %s23, 0
      %p191 = por %p189, %p190
      %p192 = scmp.ne.s32.totalorder %s180, %s181
      %p193 = scmp.eq.s32.totalorder %s24, 1
      %p194 = por %p192, %p193
      %p196 = scmp.ne.s32.totalorder %s181, %s195
      %p197 = scmp.eq.s32.totalorder %s24, 0
      %p198 = por %p196, %p197
      %s200 = sadd.s32 %s199, 1
      %p203 = scmp.eq.s32.totalorder %s18, 1
      %p204 = scmp.ne.s32.totalorder %s199, %s201
      %p205 = scmp.eq.s32.totalorder %s18, 0
      %p206 = por %p204, %p205
      %p207 = scmp.ne.s32.totalorder %s199, %s201
      %p208 = scmp.eq.s32.totalorder %s23, 1
      %p209 = por %p207, %p208
      %p210 = scmp.ne.s32.totalorder %s201, %s202
      %p211 = scmp.eq.s32.totalorder %s23, 0
      %p212 = por %p210, %p211
      %p213 = scmp.ne.s32.totalorder %s201, %s202
      %p214 = scmp.eq.s32.totalorder %s24, 1
      %p215 = por %p213, %p214
      %p217 = scmp.ne.s32.totalorder %s202, %s216
      %p218 = scmp.eq.s32.totalorder %s24, 0
      %p219 = por %p217, %p218
      %s220 = ssub.s32 %s18, %s25
      %p221 = scmp.eq.s32.totalorder %s220, 0
      %s223 = sadd.s32 %s222, 1
      %s224 = scalar_select %p221, %s222, %s223
      %p227 = pneg %p221
      %p228 = scmp.eq.s32.totalorder %s18, 1
      %p229 = por %p227, %p228
      %p230 = scmp.ne.s32.totalorder %s222, %s225
      %p231 = scmp.eq.s32.totalorder %s18, 0
      %p232 = por %p230, %p231
      %p233 = scmp.ne.s32.totalorder %s222, %s225
      %p234 = scmp.eq.s32.totalorder %s23, 1
      %p235 = por %p233, %p234
      %p236 = scmp.ne.s32.totalorder %s225, %s226
      %p237 = scmp.eq.s32.totalorder %s23, 0
      %p238 = por %p236, %p237
      %p239 = scmp.ne.s32.totalorder %s225, %s226
      %p240 = scmp.eq.s32.totalorder %s24, 1
      %p241 = por %p239, %p240
      %p243 = scmp.ne.s32.totalorder %s226, %s242
      %p244 = scmp.eq.s32.totalorder %s24, 0
      %p245 = por %p243, %p244
      %p246 = scmp.le.s32.totalorder 1, %s18
      %p247 = scmp.lt.s32.totalorder %s18, 3
      %p248 = pnand %p246, %p247
      %p249 = pneg %p248
      // Predicated region
      $region9: #{tpu_custom_call.1} parent=5 // pred_check
        _
      $region10: #{tpu_custom_call.1} parent=5 // pred_check_branch
        %251 = sbr.rel (%p248) target = $region12
      $region11: #{tpu_custom_call.1} parent=5 // pred_region
        %s252 = ssub.s32 %s18, 1
        // Predicated region
        $region13: #{tpu_custom_call.1} parent=11 // pred_check
          %p253 = pneg %p65
        $region14: #{tpu_custom_call.1} parent=11 // pred_check_branch
          %255 = sbr.rel (%p253) target = $region16
        $region15: #{tpu_custom_call.1} parent=11 // pred_region
          _
        $region16: #{tpu_custom_call.1} parent=11 // pred_fallthru
          _
        // Predicated region
        $region17: #{tpu_custom_call.1} parent=11 // pred_check
          %p256 = pneg %p86
        $region18: #{tpu_custom_call.1} parent=11 // pred_check_branch
          %258 = sbr.rel (%p256) target = $region20
        $region19: #{tpu_custom_call.1} parent=11 // pred_region
          _
        $region20: #{tpu_custom_call.1} parent=11 // pred_fallthru
          _
        // Predicated region
        $region21: #{tpu_custom_call.1} parent=11 // pred_check
          %p259 = pneg %p107
        $region22: #{tpu_custom_call.1} parent=11 // pred_check_branch
          %261 = sbr.rel (%p259) target = $region24
        $region23: #{tpu_custom_call.1} parent=11 // pred_region
          _
        $region24: #{tpu_custom_call.1} parent=11 // pred_fallthru
          _
        // Predicated region
        $region25: #{tpu_custom_call.1} parent=11 // pred_check
          %p262 = pneg %p128
        $region26: #{tpu_custom_call.1} parent=11 // pred_check_branch
          %264 = sbr.rel (%p262) target = $region28
        $region27: #{tpu_custom_call.1} parent=11 // pred_region
          _
        $region28: #{tpu_custom_call.1} parent=11 // pred_fallthru
          _
        // Predicated region
        $region29: #{tpu_custom_call.1} parent=11 // pred_check
          %p265 = pneg %p149
        $region30: #{tpu_custom_call.1} parent=11 // pred_check_branch
          %267 = sbr.rel (%p265) target = $region32
        $region31: #{tpu_custom_call.1} parent=11 // pred_region
          _
        $region32: #{tpu_custom_call.1} parent=11 // pred_fallthru
          _
        // Predicated region
        $region33: #{tpu_custom_call.1} parent=11 // pred_check
          %p268 = pneg %p170
        $region34: #{tpu_custom_call.1} parent=11 // pred_check_branch
          %270 = sbr.rel (%p268) target = $region36
        $region35: #{tpu_custom_call.1} parent=11 // pred_region
          _
        $region36: #{tpu_custom_call.1} parent=11 // pred_fallthru
          _
        // Predicated region
        $region37: #{tpu_custom_call.1} parent=11 // pred_check
          %p271 = pneg %p191
        $region38: #{tpu_custom_call.1} parent=11 // pred_check_branch
          %273 = sbr.rel (%p271) target = $region40
        $region39: #{tpu_custom_call.1} parent=11 // pred_region
          _
        $region40: #{tpu_custom_call.1} parent=11 // pred_fallthru
          _
        // Predicated region
        $region41: #{tpu_custom_call.1} parent=11 // pred_check
          %p274 = pneg %p212
        $region42: #{tpu_custom_call.1} parent=11 // pred_check_branch
          %276 = sbr.rel (%p274) target = $region44
        $region43: #{tpu_custom_call.1} parent=11 // pred_region
          _
        $region44: #{tpu_custom_call.1} parent=11 // pred_fallthru
          _
      $region12: #{tpu_custom_call.1} parent=5 // pred_fallthru
        _
      %p277 = scmp.lt.s32.totalorder %s18, 2
      // Predicated region
      $region45: #{tpu_custom_call.1} parent=5 // pred_check
        %p278 = pneg %p277
      $region46: #{tpu_custom_call.1} parent=5 // pred_check_branch
        %280 = sbr.rel (%p278) target = $region48
      $region47: #{tpu_custom_call.1} parent=5 // pred_region
        // Predicated region
        $region49: #{tpu_custom_call.1} parent=47 // pred_check
          %p281 = pneg %p38
        $region50: #{tpu_custom_call.1} parent=47 // pred_check_branch
          %283 = sbr.rel (%p281) target = $region52
        $region51: #{tpu_custom_call.1} parent=47 // pred_region
          %s284 = smul.u32 2, %s18
          %p285 = scmp.lt.s32.totalorder %s284, 3
          %s286 = scalar_select %p285, %s284, 3
          %s287 = smul.addr %s286, 3
          %s288 = smul.addr %s287, 4
          %s289 = scalar_lea.vmem %s0, %s288
          %s290 = smul.u32 2, %s18
        $region52: #{tpu_custom_call.1} parent=47 // pred_fallthru
          _
      $region48: #{tpu_custom_call.1} parent=5 // pred_fallthru
        _
      %p291 = scmp.le.s32.totalorder 1, %s18
      %p292 = scmp.lt.s32.totalorder %s18, 3
      %p293 = pnand %p291, %p292
      %p294 = pneg %p293
      // Predicated region
      $region53: #{tpu_custom_call.1} parent=5 // pred_check
        _
      $region54: #{tpu_custom_call.1} parent=5 // pred_check_branch
        %296 = sbr.rel (%p293) target = $region56
      $region55: #{tpu_custom_call.1} parent=5 // pred_region
        %s297 = ssub.s32 %s18, 1
        %s298 = smul.u32 2, %s23
        %p299 = scmp.lt.s32.totalorder %s298, 3
        %s300 = scalar_select %p299, %s298, 3
        %s301 = smul.addr %s300, 3
        %s302 = smul.addr %s301, 4
        %s303 = scalar_lea.vmem %s0, %s302
        %p304 = pneg %p44
        %p305 = pneg %p41
        %p306 = pneg %p65
        %p307 = pneg %p62
        %p308 = pneg %p86
        %p309 = pneg %p83
        %p310 = pneg %p107
        %p311 = pneg %p104
        %p312 = pneg %p128
        %p313 = pneg %p125
        %p314 = pneg %p149
        %p315 = pneg %p146
        %p316 = pneg %p170
        %p317 = pneg %p167
        %p318 = pneg %p191
        %p319 = pneg %p188
        %p320 = pneg %p212
        %p321 = pneg %p209
        %p322 = pneg %p238
        %p323 = pneg %p235
        %s324 = sand.u32 %s225, 1
        %s325 = scalar_lea.sflag [#allocation3], %s324
        %s326 = sand.u32 %s225, 1
        %s327 = smul.addr %s326, 16
        %s328 = scalar_lea.vmem [#allocation2], %s327
        %s329 = smul.u32 2, %s23
        %p330 = scmp.lt.s32.totalorder %s329, 3
        %s331 = scalar_select %p330, %s329, 3
        %s332 = smul.addr %s331, 3
        %s333 = smul.addr %s332, 4
        %s334 = scalar_lea.vmem %s0, %s333
        %s335 = smul.u32 2, %s23
        %s336 = smul.u32 2, %s23
        %v337 = vld [vmem:[%s1] sm:$0x3]
        %v338 = vld [vmem:[%s2] sm:$0x3]
        %v339 = vld [vmem:[%s334] sm:$0xff]
        %v340 = vld [vmem:[%s334 + $0x8] sm:$0xf]
        %v342 = vlaneseq
        %v343 = vshrl.u32 %v342, 7
        %v344 = vsub.s32 0, %v343
        %v345 = vrot.slane %v337, %v344
        %v346 = vlaneseq
        %v347 = vshrl.u32 %v346, 7
        %v348 = vsub.s32 1, %v347
        %v349 = vrot.slane %v337, %v348
        %v350 = vcombine.low %v345, %v349
        %v352 = vmul.f32 %v339, %v350
        %v354 = vlaneseq
        %v355 = vshrl.u32 %v354, 7
        %v356 = vsub.s32 0, %v355
        %v357 = vrot.slane %v338, %v356
        %v358 = vlaneseq
        %v359 = vshrl.u32 %v358, 7
        %v360 = vsub.s32 1, %v359
        %v361 = vrot.slane %v338, %v360
        %v362 = vcombine.low %v357, %v361
        %363 = vrot.lane.b32.xlu0 %v362, 2
        %v364 = vpop.permute.xlu0 %363
        %v365 = vrot.slane %v364, 4
        %vm366 = vcmask 15360
        %v367 = vsel %vm366, %v365, %v364
        %v370 = vmul.f32 %v339, %v367
        %v371 = vmul.f32 %v340, %v365
        %372 = vrot.lane.b32.xlu0 %v350, 16
        %v373 = vpop.permute.xlu0 %372
        %v374 = vrot.slane %v373, 4
        %vm375 = vcmask 130048
        %v376 = vsel %vm375, %v374, %v373
        %v379 = vmul.f32 %v339, %v376
        %v380 = vmul.f32 %v340, %v374
        %381 = vrot.lane.b32.xlu0 %v362, 18
        %v382 = vpop.permute.xlu0 %381
        %v383 = vrot.slane %v382, 4
        %vm384 = vcmask 146432
        %v385 = vsel %vm384, %v383, %v382
        %v388 = vmul.f32 %v339, %v385
        %v389 = vmul.f32 %v340, %v383
        %390 = vrot.lane.b32.xlu0 %v350, 32
        %v391 = vpop.permute.xlu0 %390
        %v392 = vrot.slane %v391, 4
        %vm393 = vcmask 261120
        %v394 = vsel %vm393, %v392, %v391
        %v397 = vmul.f32 %v339, %v394
        %v398 = vmul.f32 %v340, %v392
        %399 = vrot.lane.b32.xlu0 %v362, 34
        %v400 = vpop.permute.xlu0 %399
        %v401 = vrot.slane %v400, 4
        %vm402 = vcmask 277504
        %v403 = vsel %vm402, %v401, %v400
        %v406 = vmul.f32 %v339, %v403
        %v407 = vmul.f32 %v340, %v401
        %v408 = vld [vmem:[%s3] sm:$0xff]
        %s409 = scalar_lea.vmem %s3, 8
        %v410 = vld [vmem:[%s409] sm:$0xff]
        %v413 = vcombine.high %v339, %v339
        %414 = vrot.lane.b32.xlu0 %v339, 127
        %v415 = vpop.permute.xlu0 %414
        %416 = vrot.lane.b32.xlu0 %v413, 127
        %v417 = vpop.permute.xlu0 %416
        %418 = vrot.lane.b32.xlu0 %v340, 127
        %v419 = vpop.permute.xlu0 %418
        %vm420 = vcmask 1039360
        %v421 = vsel %vm420, %v415, %v417
        %v422 = vsel %vm420, %v417, %v419
        %vm423 = vcmask 31744
        %v425 = vsel %vm423, %v410, 0
        %vm427 = vcmask 1043456
        %v428 = vsel %vm427, %v421, 0
        %v430 = vsel %vm427, %v422, 0
        %432 = vmatprep.subr.mxu0 0.0
        %433 = vmatpush1.msra.mxu0 0.0
        %434 = vmatprep.subr.mxu0 0.0
        %435 = vmatpush1.msra.mxu0 0.0
        %436 = vmatprep.subr.mxu0 0.0
        %437 = vmatpush1.msra.mxu0 0.0
        %438 = vmatprep.subr.mxu0 0.0
        %439 = vmatpush1.msra.mxu0 0.0
        %440 = vmatprep.subr.mxu0 0.0
        %441 = vmatpush1.msra.mxu0 0.0
        %442 = vmatprep.subr.mxu0 0.0
        %443 = vmatpush1.msra.mxu0 0.0
        %444 = vmatprep.subr.mxu0 0.0
        %445 = vmatpush1.msra.mxu0 0.0
        %446 = vmatprep.subr.mxu0 0.0
        %447 = vmatpush1.msra.mxu0 0.0
        %448 = vmatprep.subr.mxu0 0.0
        %449 = vmatpush1.msra.mxu0 0.0
        %450 = vmatprep.subr.mxu0 0.0
        %451 = vmatpush1.msra.mxu0 0.0
        %452 = vmatprep.subr.mxu0 0.0
        %453 = vmatpush1.msra.mxu0 0.0
        %454 = vmatprep.subr.mxu0 0.0
        %455 = vmatpush1.msra.mxu0 0.0
        %456 = vmatprep.subr.mxu0 0.0
        %457 = vmatpush1.msra.mxu0 0.0
        %458 = vmatprep.subr.mxu0 0.0
        %459 = vmatpush1.msra.mxu0 0.0
        %460 = vmatprep.subr.mxu0 0.0
        %461 = vmatpush1.msra.mxu0 0.0
        %462 = vmatprep.subr.mxu0 %v430
        %463 = vmatpush1.msra.mxu0 %v428
        %464 = vmatprep.subr.mxu0 0.0
        %465 = vmatpush2.msra.mxu0 0.0
        %466 = vmatprep.subr.mxu0 0.0
        %467 = vmatpush2.msra.mxu0 0.0
        %468 = vmatprep.subr.mxu0 0.0
        %469 = vmatpush2.msra.mxu0 0.0
        %470 = vmatprep.subr.mxu0 0.0
        %471 = vmatpush2.msra.mxu0 0.0
        %472 = vmatprep.subr.mxu0 0.0
        %473 = vmatpush2.msra.mxu0 0.0
        %474 = vmatprep.subr.mxu0 0.0
        %475 = vmatpush2.msra.mxu0 0.0
        %476 = vmatprep.subr.mxu0 0.0
        %477 = vmatpush2.msra.mxu0 0.0
        %478 = vmatprep.subr.mxu0 0.0
        %479 = vmatpush2.msra.mxu0 0.0
        %480 = vmatprep.subr.mxu0 0.0
        %481 = vmatpush2.msra.mxu0 0.0
        %482 = vmatprep.subr.mxu0 0.0
        %483 = vmatpush2.msra.mxu0 0.0
        %484 = vmatprep.subr.mxu0 0.0
        %485 = vmatpush2.msra.mxu0 0.0
        %486 = vmatprep.subr.mxu0 0.0
        %487 = vmatpush2.msra.mxu0 0.0
        %488 = vmatprep.subr.mxu0 0.0
        %489 = vmatpush2.msra.mxu0 0.0
        %490 = vmatprep.subr.mxu0 0.0
        %491 = vmatpush2.msra.mxu0 0.0
        %492 = vmatprep.subr.mxu0 0.0
        %493 = vmatpush2.msra.mxu0 0.0
        %494 = vmatprep.subr.mxu0 0.0
        %495 = vmatpush2.msra.mxu0 0.0
        %496 = vmatprep.mubr.f32.mxu0 0.0
        %497 = vmatmul.mubr.f32.gmra.mxu0 %v425
        %v498 = vpop.f32.mrf.mxu0
        %v499 = vadd.f32 0.0, %v498
        %v500 = vpop.f32.mrf.mxu0
        %v501 = vadd.f32 0.0, %v500
        %502 = vdwg.mxu0
        %v504 = vcombine.high %v352, %v352
        %v506 = vsel %vm423, %v408, 0
        %v508 = vsel %vm427, %v352, 0
        %v510 = vsel %vm427, %v504, 0
        %512 = vmatprep.subr.mxu0 0.0
        %513 = vmatpush1.msra.mxu0 0.0
        %514 = vmatprep.subr.mxu0 0.0
        %515 = vmatpush1.msra.mxu0 0.0
        %516 = vmatprep.subr.mxu0 0.0
        %517 = vmatpush1.msra.mxu0 0.0
        %518 = vmatprep.subr.mxu0 0.0
        %519 = vmatpush1.msra.mxu0 0.0
        %520 = vmatprep.subr.mxu0 0.0
        %521 = vmatpush1.msra.mxu0 0.0
        %522 = vmatprep.subr.mxu0 0.0
        %523 = vmatpush1.msra.mxu0 0.0
        %524 = vmatprep.subr.mxu0 0.0
        %525 = vmatpush1.msra.mxu0 0.0
        %526 = vmatprep.subr.mxu0 0.0
        %527 = vmatpush1.msra.mxu0 0.0
        %528 = vmatprep.subr.mxu0 0.0
        %529 = vmatpush1.msra.mxu0 0.0
        %530 = vmatprep.subr.mxu0 0.0
        %531 = vmatpush1.msra.mxu0 0.0
        %532 = vmatprep.subr.mxu0 0.0
        %533 = vmatpush1.msra.mxu0 0.0
        %534 = vmatprep.subr.mxu0 0.0
        %535 = vmatpush1.msra.mxu0 0.0
        %536 = vmatprep.subr.mxu0 0.0
        %537 = vmatpush1.msra.mxu0 0.0
        %538 = vmatprep.subr.mxu0 0.0
        %539 = vmatpush1.msra.mxu0 0.0
        %540 = vmatprep.subr.mxu0 0.0
        %541 = vmatpush1.msra.mxu0 0.0
        %542 = vmatprep.subr.mxu0 %v510
        %543 = vmatpush1.msra.mxu0 %v508
        %544 = vmatprep.subr.mxu0 0.0
        %545 = vmatpush2.msra.mxu0 0.0
        %546 = vmatprep.subr.mxu0 0.0
        %547 = vmatpush2.msra.mxu0 0.0
        %548 = vmatprep.subr.mxu0 0.0
        %549 = vmatpush2.msra.mxu0 0.0
        %550 = vmatprep.subr.mxu0 0.0
        %551 = vmatpush2.msra.mxu0 0.0
        %552 = vmatprep.subr.mxu0 0.0
        %553 = vmatpush2.msra.mxu0 0.0
        %554 = vmatprep.subr.mxu0 0.0
        %555 = vmatpush2.msra.mxu0 0.0
        %556 = vmatprep.subr.mxu0 0.0
        %557 = vmatpush2.msra.mxu0 0.0
        %558 = vmatprep.subr.mxu0 0.0
        %559 = vmatpush2.msra.mxu0 0.0
        %560 = vmatprep.subr.mxu0 0.0
        %561 = vmatpush2.msra.mxu0 0.0
        %562 = vmatprep.subr.mxu0 0.0
        %563 = vmatpush2.msra.mxu0 0.0
        %564 = vmatprep.subr.mxu0 0.0
        %565 = vmatpush2.msra.mxu0 0.0
        %566 = vmatprep.subr.mxu0 0.0
        %567 = vmatpush2.msra.mxu0 0.0
        %568 = vmatprep.subr.mxu0 0.0
        %569 = vmatpush2.msra.mxu0 0.0
        %570 = vmatprep.subr.mxu0 0.0
        %571 = vmatpush2.msra.mxu0 0.0
        %572 = vmatprep.subr.mxu0 0.0
        %573 = vmatpush2.msra.mxu0 0.0
        %574 = vmatprep.subr.mxu0 0.0
        %575 = vmatpush2.msra.mxu0 0.0
        %576 = vmatprep.mubr.f32.mxu0 0.0
        %577 = vmatmul.mubr.f32.gmra.mxu0 %v506
        %v578 = vpop.f32.mrf.mxu0
        %v579 = vadd.f32 %v499, %v578
        %v580 = vpop.f32.mrf.mxu0
        %v581 = vadd.f32 %v501, %v580
        %582 = vdwg.mxu0
        %s583 = scalar_lea.vmem %s3, 16
        %v584 = vld [vmem:[%s583] sm:$0xff]
        %v587 = vcombine.high %v370, %v370
        %588 = vrot.lane.b32.xlu0 %v370, 126
        %v589 = vpop.permute.xlu0 %588
        %590 = vrot.lane.b32.xlu0 %v587, 126
        %v591 = vpop.permute.xlu0 %590
        %592 = vrot.lane.b32.xlu0 %v371, 126
        %v593 = vpop.permute.xlu0 %592
        %vm594 = vcmask 1031168
        %v595 = vsel %vm594, %v589, %v591
        %v596 = vsel %vm594, %v591, %v593
        %v598 = vsel %vm423, %v584, 0
        %v600 = vsel %vm427, %v595, 0
        %v602 = vsel %vm427, %v596, 0
        %604 = vmatprep.subr.mxu0 0.0
        %605 = vmatpush1.msra.mxu0 0.0
        %606 = vmatprep.subr.mxu0 0.0
        %607 = vmatpush1.msra.mxu0 0.0
        %608 = vmatprep.subr.mxu0 0.0
        %609 = vmatpush1.msra.mxu0 0.0
        %610 = vmatprep.subr.mxu0 0.0
        %611 = vmatpush1.msra.mxu0 0.0
        %612 = vmatprep.subr.mxu0 0.0
        %613 = vmatpush1.msra.mxu0 0.0
        %614 = vmatprep.subr.mxu0 0.0
        %615 = vmatpush1.msra.mxu0 0.0
        %616 = vmatprep.subr.mxu0 0.0
        %617 = vmatpush1.msra.mxu0 0.0
        %618 = vmatprep.subr.mxu0 0.0
        %619 = vmatpush1.msra.mxu0 0.0
        %620 = vmatprep.subr.mxu0 0.0
        %621 = vmatpush1.msra.mxu0 0.0
        %622 = vmatprep.subr.mxu0 0.0
        %623 = vmatpush1.msra.mxu0 0.0
        %624 = vmatprep.subr.mxu0 0.0
        %625 = vmatpush1.msra.mxu0 0.0
        %626 = vmatprep.subr.mxu0 0.0
        %627 = vmatpush1.msra.mxu0 0.0
        %628 = vmatprep.subr.mxu0 0.0
        %629 = vmatpush1.msra.mxu0 0.0
        %630 = vmatprep.subr.mxu0 0.0
        %631 = vmatpush1.msra.mxu0 0.0
        %632 = vmatprep.subr.mxu0 0.0
        %633 = vmatpush1.msra.mxu0 0.0
        %634 = vmatprep.subr.mxu0 %v602
        %635 = vmatpush1.msra.mxu0 %v600
        %636 = vmatprep.subr.mxu0 0.0
        %637 = vmatpush2.msra.mxu0 0.0
        %638 = vmatprep.subr.mxu0 0.0
        %639 = vmatpush2.msra.mxu0 0.0
        %640 = vmatprep.subr.mxu0 0.0
        %641 = vmatpush2.msra.mxu0 0.0
        %642 = vmatprep.subr.mxu0 0.0
        %643 = vmatpush2.msra.mxu0 0.0
        %644 = vmatprep.subr.mxu0 0.0
        %645 = vmatpush2.msra.mxu0 0.0
        %646 = vmatprep.subr.mxu0 0.0
        %647 = vmatpush2.msra.mxu0 0.0
        %648 = vmatprep.subr.mxu0 0.0
        %649 = vmatpush2.msra.mxu0 0.0
        %650 = vmatprep.subr.mxu0 0.0
        %651 = vmatpush2.msra.mxu0 0.0
        %652 = vmatprep.subr.mxu0 0.0
        %653 = vmatpush2.msra.mxu0 0.0
        %654 = vmatprep.subr.mxu0 0.0
        %655 = vmatpush2.msra.mxu0 0.0
        %656 = vmatprep.subr.mxu0 0.0
        %657 = vmatpush2.msra.mxu0 0.0
        %658 = vmatprep.subr.mxu0 0.0
        %659 = vmatpush2.msra.mxu0 0.0
        %660 = vmatprep.subr.mxu0 0.0
        %661 = vmatpush2.msra.mxu0 0.0
        %662 = vmatprep.subr.mxu0 0.0
        %663 = vmatpush2.msra.mxu0 0.0
        %664 = vmatprep.subr.mxu0 0.0
        %665 = vmatpush2.msra.mxu0 0.0
        %666 = vmatprep.subr.mxu0 0.0
        %667 = vmatpush2.msra.mxu0 0.0
        %668 = vmatprep.mubr.f32.mxu0 0.0
        %669 = vmatmul.mubr.f32.gmra.mxu0 %v598
        %v670 = vpop.f32.mrf.mxu0
        %v671 = vadd.f32 0.0, %v670
        %v672 = vpop.f32.mrf.mxu0
        %v673 = vadd.f32 0.0, %v672
        %674 = vdwg.mxu0
        %v675 = vadd.f32 %v579, %v671
        %v676 = vadd.f32 %v581, %v673
        %s677 = scalar_lea.vmem %s3, 24
        %v678 = vld [vmem:[%s677] sm:$0xff]
        %v681 = vcombine.high %v379, %v379
        %682 = vrot.lane.b32.xlu0 %v379, 112
        %v683 = vpop.permute.xlu0 %682
        %684 = vrot.lane.b32.xlu0 %v681, 112
        %v685 = vpop.permute.xlu0 %684
        %686 = vrot.lane.b32.xlu0 %v380, 112
        %v687 = vpop.permute.xlu0 %686
        %vm688 = vcmask 916480
        %v689 = vsel %vm688, %v683, %v685
        %v690 = vsel %vm688, %v685, %v687
        %v692 = vsel %vm423, %v678, 0
        %v694 = vsel %vm427, %v689, 0
        %v696 = vsel %vm427, %v690, 0
        %698 = vmatprep.subr.mxu0 0.0
        %699 = vmatpush1.msra.mxu0 0.0
        %700 = vmatprep.subr.mxu0 0.0
        %701 = vmatpush1.msra.mxu0 0.0
        %702 = vmatprep.subr.mxu0 0.0
        %703 = vmatpush1.msra.mxu0 0.0
        %704 = vmatprep.subr.mxu0 0.0
        %705 = vmatpush1.msra.mxu0 0.0
        %706 = vmatprep.subr.mxu0 0.0
        %707 = vmatpush1.msra.mxu0 0.0
        %708 = vmatprep.subr.mxu0 0.0
        %709 = vmatpush1.msra.mxu0 0.0
        %710 = vmatprep.subr.mxu0 0.0
        %711 = vmatpush1.msra.mxu0 0.0
        %712 = vmatprep.subr.mxu0 0.0
        %713 = vmatpush1.msra.mxu0 0.0
        %714 = vmatprep.subr.mxu0 0.0
        %715 = vmatpush1.msra.mxu0 0.0
        %716 = vmatprep.subr.mxu0 0.0
        %717 = vmatpush1.msra.mxu0 0.0
        %718 = vmatprep.subr.mxu0 0.0
        %719 = vmatpush1.msra.mxu0 0.0
        %720 = vmatprep.subr.mxu0 0.0
        %721 = vmatpush1.msra.mxu0 0.0
        %722 = vmatprep.subr.mxu0 0.0
        %723 = vmatpush1.msra.mxu0 0.0
        %724 = vmatprep.subr.mxu0 0.0
        %725 = vmatpush1.msra.mxu0 0.0
        %726 = vmatprep.subr.mxu0 0.0
        %727 = vmatpush1.msra.mxu0 0.0
        %728 = vmatprep.subr.mxu0 %v696
        %729 = vmatpush1.msra.mxu0 %v694
        %730 = vmatprep.subr.mxu0 0.0
        %731 = vmatpush2.msra.mxu0 0.0
        %732 = vmatprep.subr.mxu0 0.0
        %733 = vmatpush2.msra.mxu0 0.0
        %734 = vmatprep.subr.mxu0 0.0
        %735 = vmatpush2.msra.mxu0 0.0
        %736 = vmatprep.subr.mxu0 0.0
        %737 = vmatpush2.msra.mxu0 0.0
        %738 = vmatprep.subr.mxu0 0.0
        %739 = vmatpush2.msra.mxu0 0.0
        %740 = vmatprep.subr.mxu0 0.0
        %741 = vmatpush2.msra.mxu0 0.0
        %742 = vmatprep.subr.mxu0 0.0
        %743 = vmatpush2.msra.mxu0 0.0
        %744 = vmatprep.subr.mxu0 0.0
        %745 = vmatpush2.msra.mxu0 0.0
        %746 = vmatprep.subr.mxu0 0.0
        %747 = vmatpush2.msra.mxu0 0.0
        %748 = vmatprep.subr.mxu0 0.0
        %749 = vmatpush2.msra.mxu0 0.0
        %750 = vmatprep.subr.mxu0 0.0
        %751 = vmatpush2.msra.mxu0 0.0
        %752 = vmatprep.subr.mxu0 0.0
        %753 = vmatpush2.msra.mxu0 0.0
        %754 = vmatprep.subr.mxu0 0.0
        %755 = vmatpush2.msra.mxu0 0.0
        %756 = vmatprep.subr.mxu0 0.0
        %757 = vmatpush2.msra.mxu0 0.0
        %758 = vmatprep.subr.mxu0 0.0
        %759 = vmatpush2.msra.mxu0 0.0
        %760 = vmatprep.subr.mxu0 0.0
        %761 = vmatpush2.msra.mxu0 0.0
        %762 = vmatprep.mubr.f32.mxu0 0.0
        %763 = vmatmul.mubr.f32.gmra.mxu0 %v692
        %v764 = vpop.f32.mrf.mxu0
        %v765 = vadd.f32 0.0, %v764
        %v766 = vpop.f32.mrf.mxu0
        %v767 = vadd.f32 0.0, %v766
        %768 = vdwg.mxu0
        %v769 = vadd.f32 %v675, %v765
        %v770 = vadd.f32 %v676, %v767
        %s771 = scalar_lea.vmem %s3, 32
        %v772 = vld [vmem:[%s771] sm:$0xff]
        %773 = vrot.lane.b32.xlu0 %v339, 111
        %v774 = vpop.permute.xlu0 %773
        %775 = vrot.lane.b32.xlu0 %v413, 111
        %v776 = vpop.permute.xlu0 %775
        %777 = vrot.lane.b32.xlu0 %v340, 111
        %v778 = vpop.permute.xlu0 %777
        %vm779 = vcmask 908288
        %v780 = vsel %vm779, %v774, %v776
        %v781 = vsel %vm779, %v776, %v778
        %v783 = vsel %vm423, %v772, 0
        %v785 = vsel %vm427, %v780, 0
        %v787 = vsel %vm427, %v781, 0
        %789 = vmatprep.subr.mxu0 0.0
        %790 = vmatpush1.msra.mxu0 0.0
        %791 = vmatprep.subr.mxu0 0.0
        %792 = vmatpush1.msra.mxu0 0.0
        %793 = vmatprep.subr.mxu0 0.0
        %794 = vmatpush1.msra.mxu0 0.0
        %795 = vmatprep.subr.mxu0 0.0
        %796 = vmatpush1.msra.mxu0 0.0
        %797 = vmatprep.subr.mxu0 0.0
        %798 = vmatpush1.msra.mxu0 0.0
        %799 = vmatprep.subr.mxu0 0.0
        %800 = vmatpush1.msra.mxu0 0.0
        %801 = vmatprep.subr.mxu0 0.0
        %802 = vmatpush1.msra.mxu0 0.0
        %803 = vmatprep.subr.mxu0 0.0
        %804 = vmatpush1.msra.mxu0 0.0
        %805 = vmatprep.subr.mxu0 0.0
        %806 = vmatpush1.msra.mxu0 0.0
        %807 = vmatprep.subr.mxu0 0.0
        %808 = vmatpush1.msra.mxu0 0.0
        %809 = vmatprep.subr.mxu0 0.0
        %810 = vmatpush1.msra.mxu0 0.0
        %811 = vmatprep.subr.mxu0 0.0
        %812 = vmatpush1.msra.mxu0 0.0
        %813 = vmatprep.subr.mxu0 0.0
        %814 = vmatpush1.msra.mxu0 0.0
        %815 = vmatprep.subr.mxu0 0.0
        %816 = vmatpush1.msra.mxu0 0.0
        %817 = vmatprep.subr.mxu0 0.0
        %818 = vmatpush1.msra.mxu0 0.0
        %819 = vmatprep.subr.mxu0 %v787
        %820 = vmatpush1.msra.mxu0 %v785
        %821 = vmatprep.subr.mxu0 0.0
        %822 = vmatpush2.msra.mxu0 0.0
        %823 = vmatprep.subr.mxu0 0.0
        %824 = vmatpush2.msra.mxu0 0.0
        %825 = vmatprep.subr.mxu0 0.0
        %826 = vmatpush2.msra.mxu0 0.0
        %827 = vmatprep.subr.mxu0 0.0
        %828 = vmatpush2.msra.mxu0 0.0
        %829 = vmatprep.subr.mxu0 0.0
        %830 = vmatpush2.msra.mxu0 0.0
        %831 = vmatprep.subr.mxu0 0.0
        %832 = vmatpush2.msra.mxu0 0.0
        %833 = vmatprep.subr.mxu0 0.0
        %834 = vmatpush2.msra.mxu0 0.0
        %835 = vmatprep.subr.mxu0 0.0
        %836 = vmatpush2.msra.mxu0 0.0
        %837 = vmatprep.subr.mxu0 0.0
        %838 = vmatpush2.msra.mxu0 0.0
        %839 = vmatprep.subr.mxu0 0.0
        %840 = vmatpush2.msra.mxu0 0.0
        %841 = vmatprep.subr.mxu0 0.0
        %842 = vmatpush2.msra.mxu0 0.0
        %843 = vmatprep.subr.mxu0 0.0
        %844 = vmatpush2.msra.mxu0 0.0
        %845 = vmatprep.subr.mxu0 0.0
        %846 = vmatpush2.msra.mxu0 0.0
        %847 = vmatprep.subr.mxu0 0.0
        %848 = vmatpush2.msra.mxu0 0.0
        %849 = vmatprep.subr.mxu0 0.0
        %850 = vmatpush2.msra.mxu0 0.0
        %851 = vmatprep.subr.mxu0 0.0
        %852 = vmatpush2.msra.mxu0 0.0
        %853 = vmatprep.mubr.f32.mxu0 0.0
        %854 = vmatmul.mubr.f32.gmra.mxu0 %v783
        %v855 = vpop.f32.mrf.mxu0
        %v856 = vadd.f32 0.0, %v855
        %v857 = vpop.f32.mrf.mxu0
        %v858 = vadd.f32 0.0, %v857
        %859 = vdwg.mxu0
        %v860 = vadd.f32 %v769, %v856
        %v861 = vadd.f32 %v770, %v858
        %s862 = scalar_lea.vmem %s3, 40
        %v863 = vld [vmem:[%s862] sm:$0xff]
        %v866 = vcombine.high %v388, %v388
        %867 = vrot.lane.b32.xlu0 %v388, 110
        %v868 = vpop.permute.xlu0 %867
        %869 = vrot.lane.b32.xlu0 %v866, 110
        %v870 = vpop.permute.xlu0 %869
        %871 = vrot.lane.b32.xlu0 %v389, 110
        %v872 = vpop.permute.xlu0 %871
        %vm873 = vcmask 900096
        %v874 = vsel %vm873, %v868, %v870
        %v875 = vsel %vm873, %v870, %v872
        %v877 = vsel %vm423, %v863, 0
        %v879 = vsel %vm427, %v874, 0
        %v881 = vsel %vm427, %v875, 0
        %883 = vmatprep.subr.mxu0 0.0
        %884 = vmatpush1.msra.mxu0 0.0
        %885 = vmatprep.subr.mxu0 0.0
        %886 = vmatpush1.msra.mxu0 0.0
        %887 = vmatprep.subr.mxu0 0.0
        %888 = vmatpush1.msra.mxu0 0.0
        %889 = vmatprep.subr.mxu0 0.0
        %890 = vmatpush1.msra.mxu0 0.0
        %891 = vmatprep.subr.mxu0 0.0
        %892 = vmatpush1.msra.mxu0 0.0
        %893 = vmatprep.subr.mxu0 0.0
        %894 = vmatpush1.msra.mxu0 0.0
        %895 = vmatprep.subr.mxu0 0.0
        %896 = vmatpush1.msra.mxu0 0.0
        %897 = vmatprep.subr.mxu0 0.0
        %898 = vmatpush1.msra.mxu0 0.0
        %899 = vmatprep.subr.mxu0 0.0
        %900 = vmatpush1.msra.mxu0 0.0
        %901 = vmatprep.subr.mxu0 0.0
        %902 = vmatpush1.msra.mxu0 0.0
        %903 = vmatprep.subr.mxu0 0.0
        %904 = vmatpush1.msra.mxu0 0.0
        %905 = vmatprep.subr.mxu0 0.0
        %906 = vmatpush1.msra.mxu0 0.0
        %907 = vmatprep.subr.mxu0 0.0
        %908 = vmatpush1.msra.mxu0 0.0
        %909 = vmatprep.subr.mxu0 0.0
        %910 = vmatpush1.msra.mxu0 0.0
        %911 = vmatprep.subr.mxu0 0.0
        %912 = vmatpush1.msra.mxu0 0.0
        %913 = vmatprep.subr.mxu0 %v881
        %914 = vmatpush1.msra.mxu0 %v879
        %915 = vmatprep.subr.mxu0 0.0
        %916 = vmatpush2.msra.mxu0 0.0
        %917 = vmatprep.subr.mxu0 0.0
        %918 = vmatpush2.msra.mxu0 0.0
        %919 = vmatprep.subr.mxu0 0.0
        %920 = vmatpush2.msra.mxu0 0.0
        %921 = vmatprep.subr.mxu0 0.0
        %922 = vmatpush2.msra.mxu0 0.0
        %923 = vmatprep.subr.mxu0 0.0
        %924 = vmatpush2.msra.mxu0 0.0
        %925 = vmatprep.subr.mxu0 0.0
        %926 = vmatpush2.msra.mxu0 0.0
        %927 = vmatprep.subr.mxu0 0.0
        %928 = vmatpush2.msra.mxu0 0.0
        %929 = vmatprep.subr.mxu0 0.0
        %930 = vmatpush2.msra.mxu0 0.0
        %931 = vmatprep.subr.mxu0 0.0
        %932 = vmatpush2.msra.mxu0 0.0
        %933 = vmatprep.subr.mxu0 0.0
        %934 = vmatpush2.msra.mxu0 0.0
        %935 = vmatprep.subr.mxu0 0.0
        %936 = vmatpush2.msra.mxu0 0.0
        %937 = vmatprep.subr.mxu0 0.0
        %938 = vmatpush2.msra.mxu0 0.0
        %939 = vmatprep.subr.mxu0 0.0
        %940 = vmatpush2.msra.mxu0 0.0
        %941 = vmatprep.subr.mxu0 0.0
        %942 = vmatpush2.msra.mxu0 0.0
        %943 = vmatprep.subr.mxu0 0.0
        %944 = vmatpush2.msra.mxu0 0.0
        %945 = vmatprep.subr.mxu0 0.0
        %946 = vmatpush2.msra.mxu0 0.0
        %947 = vmatprep.mubr.f32.mxu0 0.0
        %948 = vmatmul.mubr.f32.gmra.mxu0 %v877
        %v949 = vpop.f32.mrf.mxu0
        %v950 = vadd.f32 0.0, %v949
        %v951 = vpop.f32.mrf.mxu0
        %v952 = vadd.f32 0.0, %v951
        %953 = vdwg.mxu0
        %v954 = vadd.f32 %v860, %v950
        %v955 = vadd.f32 %v861, %v952
        %s956 = scalar_lea.vmem %s3, 48
        %v957 = vld [vmem:[%s956] sm:$0xff]
        %v960 = vcombine.high %v397, %v397
        %961 = vrot.lane.b32.xlu0 %v397, 96
        %v962 = vpop.permute.xlu0 %961
        %963 = vrot.lane.b32.xlu0 %v960, 96
        %v964 = vpop.permute.xlu0 %963
        %965 = vrot.lane.b32.xlu0 %v398, 96
        %v966 = vpop.permute.xlu0 %965
        %vm967 = vcmask 785408
        %v968 = vsel %vm967, %v962, %v964
        %v969 = vsel %vm967, %v964, %v966
        %v971 = vsel %vm423, %v957, 0
        %v973 = vsel %vm427, %v968, 0
        %v975 = vsel %vm427, %v969, 0
        %977 = vmatprep.subr.mxu0 0.0
        %978 = vmatpush1.msra.mxu0 0.0
        %979 = vmatprep.subr.mxu0 0.0
        %980 = vmatpush1.msra.mxu0 0.0
        %981 = vmatprep.subr.mxu0 0.0
        %982 = vmatpush1.msra.mxu0 0.0
        %983 = vmatprep.subr.mxu0 0.0
        %984 = vmatpush1.msra.mxu0 0.0
        %985 = vmatprep.subr.mxu0 0.0
        %986 = vmatpush1.msra.mxu0 0.0
        %987 = vmatprep.subr.mxu0 0.0
        %988 = vmatpush1.msra.mxu0 0.0
        %989 = vmatprep.subr.mxu0 0.0
        %990 = vmatpush1.msra.mxu0 0.0
        %991 = vmatprep.subr.mxu0 0.0
        %992 = vmatpush1.msra.mxu0 0.0
        %993 = vmatprep.subr.mxu0 0.0
        %994 = vmatpush1.msra.mxu0 0.0
        %995 = vmatprep.subr.mxu0 0.0
        %996 = vmatpush1.msra.mxu0 0.0
        %997 = vmatprep.subr.mxu0 0.0
        %998 = vmatpush1.msra.mxu0 0.0
        %999 = vmatprep.subr.mxu0 0.0
        %1000 = vmatpush1.msra.mxu0 0.0
        %1001 = vmatprep.subr.mxu0 0.0
        %1002 = vmatpush1.msra.mxu0 0.0
        %1003 = vmatprep.subr.mxu0 0.0
        %1004 = vmatpush1.msra.mxu0 0.0
        %1005 = vmatprep.subr.mxu0 0.0
        %1006 = vmatpush1.msra.mxu0 0.0
        %1007 = vmatprep.subr.mxu0 %v975
        %1008 = vmatpush1.msra.mxu0 %v973
        %1009 = vmatprep.subr.mxu0 0.0
        %1010 = vmatpush2.msra.mxu0 0.0
        %1011 = vmatprep.subr.mxu0 0.0
        %1012 = vmatpush2.msra.mxu0 0.0
        %1013 = vmatprep.subr.mxu0 0.0
        %1014 = vmatpush2.msra.mxu0 0.0
        %1015 = vmatprep.subr.mxu0 0.0
        %1016 = vmatpush2.msra.mxu0 0.0
        %1017 = vmatprep.subr.mxu0 0.0
        %1018 = vmatpush2.msra.mxu0 0.0
        %1019 = vmatprep.subr.mxu0 0.0
        %1020 = vmatpush2.msra.mxu0 0.0
        %1021 = vmatprep.subr.mxu0 0.0
        %1022 = vmatpush2.msra.mxu0 0.0
        %1023 = vmatprep.subr.mxu0 0.0
        %1024 = vmatpush2.msra.mxu0 0.0
        %1025 = vmatprep.subr.mxu0 0.0
        %1026 = vmatpush2.msra.mxu0 0.0
        %1027 = vmatprep.subr.mxu0 0.0
        %1028 = vmatpush2.msra.mxu0 0.0
        %1029 = vmatprep.subr.mxu0 0.0
        %1030 = vmatpush2.msra.mxu0 0.0
        %1031 = vmatprep.subr.mxu0 0.0
        %1032 = vmatpush2.msra.mxu0 0.0
        %1033 = vmatprep.subr.mxu0 0.0
        %1034 = vmatpush2.msra.mxu0 0.0
        %1035 = vmatprep.subr.mxu0 0.0
        %1036 = vmatpush2.msra.mxu0 0.0
        %1037 = vmatprep.subr.mxu0 0.0
        %1038 = vmatpush2.msra.mxu0 0.0
        %1039 = vmatprep.subr.mxu0 0.0
        %1040 = vmatpush2.msra.mxu0 0.0
        %1041 = vmatprep.mubr.f32.mxu0 0.0
        %1042 = vmatmul.mubr.f32.gmra.mxu0 %v971
        %v1043 = vpop.f32.mrf.mxu0
        %v1044 = vadd.f32 0.0, %v1043
        %v1045 = vpop.f32.mrf.mxu0
        %v1046 = vadd.f32 0.0, %v1045
        %1047 = vdwg.mxu0
        %v1048 = vadd.f32 %v954, %v1044
        %v1049 = vadd.f32 %v955, %v1046
        %s1050 = scalar_lea.vmem %s3, 56
        %v1051 = vld [vmem:[%s1050] sm:$0xff]
        %1052 = vrot.lane.b32.xlu0 %v339, 95
        %v1053 = vpop.permute.xlu0 %1052
        %1054 = vrot.lane.b32.xlu0 %v413, 95
        %v1055 = vpop.permute.xlu0 %1054
        %1056 = vrot.lane.b32.xlu0 %v340, 95
        %v1057 = vpop.permute.xlu0 %1056
        %vm1058 = vcmask 777216
        %v1059 = vsel %vm1058, %v1053, %v1055
        %v1060 = vsel %vm1058, %v1055, %v1057
        %v1062 = vsel %vm423, %v1051, 0
        %v1064 = vsel %vm427, %v1059, 0
        %v1066 = vsel %vm427, %v1060, 0
        %1068 = vmatprep.subr.mxu0 0.0
        %1069 = vmatpush1.msra.mxu0 0.0
        %1070 = vmatprep.subr.mxu0 0.0
        %1071 = vmatpush1.msra.mxu0 0.0
        %1072 = vmatprep.subr.mxu0 0.0
        %1073 = vmatpush1.msra.mxu0 0.0
        %1074 = vmatprep.subr.mxu0 0.0
        %1075 = vmatpush1.msra.mxu0 0.0
        %1076 = vmatprep.subr.mxu0 0.0
        %1077 = vmatpush1.msra.mxu0 0.0
        %1078 = vmatprep.subr.mxu0 0.0
        %1079 = vmatpush1.msra.mxu0 0.0
        %1080 = vmatprep.subr.mxu0 0.0
        %1081 = vmatpush1.msra.mxu0 0.0
        %1082 = vmatprep.subr.mxu0 0.0
        %1083 = vmatpush1.msra.mxu0 0.0
        %1084 = vmatprep.subr.mxu0 0.0
        %1085 = vmatpush1.msra.mxu0 0.0
        %1086 = vmatprep.subr.mxu0 0.0
        %1087 = vmatpush1.msra.mxu0 0.0
        %1088 = vmatprep.subr.mxu0 0.0
        %1089 = vmatpush1.msra.mxu0 0.0
        %1090 = vmatprep.subr.mxu0 0.0
        %1091 = vmatpush1.msra.mxu0 0.0
        %1092 = vmatprep.subr.mxu0 0.0
        %1093 = vmatpush1.msra.mxu0 0.0
        %1094 = vmatprep.subr.mxu0 0.0
        %1095 = vmatpush1.msra.mxu0 0.0
        %1096 = vmatprep.subr.mxu0 0.0
        %1097 = vmatpush1.msra.mxu0 0.0
        %1098 = vmatprep.subr.mxu0 %v1066
        %1099 = vmatpush1.msra.mxu0 %v1064
        %1100 = vmatprep.subr.mxu0 0.0
        %1101 = vmatpush2.msra.mxu0 0.0
        %1102 = vmatprep.subr.mxu0 0.0
        %1103 = vmatpush2.msra.mxu0 0.0
        %1104 = vmatprep.subr.mxu0 0.0
        %1105 = vmatpush2.msra.mxu0 0.0
        %1106 = vmatprep.subr.mxu0 0.0
        %1107 = vmatpush2.msra.mxu0 0.0
        %1108 = vmatprep.subr.mxu0 0.0
        %1109 = vmatpush2.msra.mxu0 0.0
        %1110 = vmatprep.subr.mxu0 0.0
        %1111 = vmatpush2.msra.mxu0 0.0
        %1112 = vmatprep.subr.mxu0 0.0
        %1113 = vmatpush2.msra.mxu0 0.0
        %1114 = vmatprep.subr.mxu0 0.0
        %1115 = vmatpush2.msra.mxu0 0.0
        %1116 = vmatprep.subr.mxu0 0.0
        %1117 = vmatpush2.msra.mxu0 0.0
        %1118 = vmatprep.subr.mxu0 0.0
        %1119 = vmatpush2.msra.mxu0 0.0
        %1120 = vmatprep.subr.mxu0 0.0
        %1121 = vmatpush2.msra.mxu0 0.0
        %1122 = vmatprep.subr.mxu0 0.0
        %1123 = vmatpush2.msra.mxu0 0.0
        %1124 = vmatprep.subr.mxu0 0.0
        %1125 = vmatpush2.msra.mxu0 0.0
        %1126 = vmatprep.subr.mxu0 0.0
        %1127 = vmatpush2.msra.mxu0 0.0
        %1128 = vmatprep.subr.mxu0 0.0
        %1129 = vmatpush2.msra.mxu0 0.0
        %1130 = vmatprep.subr.mxu0 0.0
        %1131 = vmatpush2.msra.mxu0 0.0
        %1132 = vmatprep.mubr.f32.mxu0 0.0
        %1133 = vmatmul.mubr.f32.gmra.mxu0 %v1062
        %v1134 = vpop.f32.mrf.mxu0
        %v1135 = vadd.f32 0.0, %v1134
        %v1136 = vpop.f32.mrf.mxu0
        %v1137 = vadd.f32 0.0, %v1136
        %1138 = vdwg.mxu0
        %v1139 = vadd.f32 %v1048, %v1135
        %v1140 = vadd.f32 %v1049, %v1137
        %s1141 = scalar_lea.vmem %s3, 64
        %v1142 = vld [vmem:[%s1141] sm:$0xff]
        %v1145 = vcombine.high %v406, %v406
        %1146 = vrot.lane.b32.xlu0 %v406, 94
        %v1147 = vpop.permute.xlu0 %1146
        %1148 = vrot.lane.b32.xlu0 %v1145, 94
        %v1149 = vpop.permute.xlu0 %1148
        %1150 = vrot.lane.b32.xlu0 %v407, 94
        %v1151 = vpop.permute.xlu0 %1150
        %vm1152 = vcmask 769024
        %v1153 = vsel %vm1152, %v1147, %v1149
        %v1154 = vsel %vm1152, %v1149, %v1151
        %v1156 = vsel %vm423, %v1142, 0
        %v1158 = vsel %vm427, %v1153, 0
        %v1160 = vsel %vm427, %v1154, 0
        %1162 = vmatprep.subr.mxu0 0.0
        %1163 = vmatpush1.msra.mxu0 0.0
        %1164 = vmatprep.subr.mxu0 0.0
        %1165 = vmatpush1.msra.mxu0 0.0
        %1166 = vmatprep.subr.mxu0 0.0
        %1167 = vmatpush1.msra.mxu0 0.0
        %1168 = vmatprep.subr.mxu0 0.0
        %1169 = vmatpush1.msra.mxu0 0.0
        %1170 = vmatprep.subr.mxu0 0.0
        %1171 = vmatpush1.msra.mxu0 0.0
        %1172 = vmatprep.subr.mxu0 0.0
        %1173 = vmatpush1.msra.mxu0 0.0
        %1174 = vmatprep.subr.mxu0 0.0
        %1175 = vmatpush1.msra.mxu0 0.0
        %1176 = vmatprep.subr.mxu0 0.0
        %1177 = vmatpush1.msra.mxu0 0.0
        %1178 = vmatprep.subr.mxu0 0.0
        %1179 = vmatpush1.msra.mxu0 0.0
        %1180 = vmatprep.subr.mxu0 0.0
        %1181 = vmatpush1.msra.mxu0 0.0
        %1182 = vmatprep.subr.mxu0 0.0
        %1183 = vmatpush1.msra.mxu0 0.0
        %1184 = vmatprep.subr.mxu0 0.0
        %1185 = vmatpush1.msra.mxu0 0.0
        %1186 = vmatprep.subr.mxu0 0.0
        %1187 = vmatpush1.msra.mxu0 0.0
        %1188 = vmatprep.subr.mxu0 0.0
        %1189 = vmatpush1.msra.mxu0 0.0
        %1190 = vmatprep.subr.mxu0 0.0
        %1191 = vmatpush1.msra.mxu0 0.0
        %1192 = vmatprep.subr.mxu0 %v1160
        %1193 = vmatpush1.msra.mxu0 %v1158
        %1194 = vmatprep.subr.mxu0 0.0
        %1195 = vmatpush2.msra.mxu0 0.0
        %1196 = vmatprep.subr.mxu0 0.0
        %1197 = vmatpush2.msra.mxu0 0.0
        %1198 = vmatprep.subr.mxu0 0.0
        %1199 = vmatpush2.msra.mxu0 0.0
        %1200 = vmatprep.subr.mxu0 0.0
        %1201 = vmatpush2.msra.mxu0 0.0
        %1202 = vmatprep.subr.mxu0 0.0
        %1203 = vmatpush2.msra.mxu0 0.0
        %1204 = vmatprep.subr.mxu0 0.0
        %1205 = vmatpush2.msra.mxu0 0.0
        %1206 = vmatprep.subr.mxu0 0.0
        %1207 = vmatpush2.msra.mxu0 0.0
        %1208 = vmatprep.subr.mxu0 0.0
        %1209 = vmatpush2.msra.mxu0 0.0
        %1210 = vmatprep.subr.mxu0 0.0
        %1211 = vmatpush2.msra.mxu0 0.0
        %1212 = vmatprep.subr.mxu0 0.0
        %1213 = vmatpush2.msra.mxu0 0.0
        %1214 = vmatprep.subr.mxu0 0.0
        %1215 = vmatpush2.msra.mxu0 0.0
        %1216 = vmatprep.subr.mxu0 0.0
        %1217 = vmatpush2.msra.mxu0 0.0
        %1218 = vmatprep.subr.mxu0 0.0
        %1219 = vmatpush2.msra.mxu0 0.0
        %1220 = vmatprep.subr.mxu0 0.0
        %1221 = vmatpush2.msra.mxu0 0.0
        %1222 = vmatprep.subr.mxu0 0.0
        %1223 = vmatpush2.msra.mxu0 0.0
        %1224 = vmatprep.subr.mxu0 0.0
        %1225 = vmatpush2.msra.mxu0 0.0
        %1226 = vmatprep.mubr.f32.mxu0 0.0
        %1227 = vmatmul.mubr.f32.gmra.mxu0 %v1156
        %v1228 = vpop.f32.mrf.mxu0
        %v1229 = vadd.f32 0.0, %v1228
        %v1230 = vpop.f32.mrf.mxu0
        %v1231 = vadd.f32 0.0, %v1230
        %1232 = vdwg.mxu0
        %v1233 = vadd.f32 %v1139, %v1229
        %v1234 = vadd.f32 %v1140, %v1231
        %v1235 = vld [vmem:[%s4] sm:$0xff]
        %1237 = vset.pattern.permute.xlu0 0
        %1238 = vperm.xlu0 %1237, %v1235
        %v1239 = vpop.permute.xlu0 %1238
        %v1241 = vadd.f32 %v1233, %v1239
        %v1242 = vadd.f32 %v1234, %v1239
        %v1243 = vmax.f32 %v1241, 0.0
        %v1244 = vmax.f32 %v1242, 0.0
        %v1245 = vadd.f32 %v1243, %v1244
        %1246 = vadd.xlane.f32.xlu0 %v1245
        %v1247 = vpop.xlane.xlu0 %1246
        %v1248 = vrcp.pop 256.0
        %v1249 = vmul.f32 %v1247, %v1248
        %v1251 = vrot.slane %v1249, 4
        %v1253 = vadd.f32 %v1249, %v1251
        %v1254 = vld [vmem:[%s5] sm:$0xff]
        %v1255 = vld [vmem:[%s5 + $0x8] sm:$0xff]
        %v1256 = vld [vmem:[%s5 + $0x10] sm:$0xff]
        %v1257 = vld [vmem:[%s5 + $0x18] sm:$0xff]
        %v1258 = vld [vmem:[%s6] sm:$0xff]
        %v1259 = vld [vmem:[%s6 + $0x8] sm:$0xff]
        %v1260 = vld [vmem:[%s6 + $0x10] sm:$0xff]
        %v1261 = vld [vmem:[%s6 + $0x18] sm:$0xff]
        %v1263 = vsel %vm423, %v1254, 0
        %v1266 = vsel %vm423, %v1255, 0
        %v1269 = vsel %vm423, %v1256, 0
        %v1272 = vsel %vm423, %v1257, 0
        %v1275 = vsel %vm427, %v1253, 0
        %1277 = vmatprep.subr.mxu0 0.0
        %1278 = vmatpush1.msra.mxu0 0.0
        %1279 = vmatprep.subr.mxu0 0.0
        %1280 = vmatpush1.msra.mxu0 0.0
        %1281 = vmatprep.subr.mxu0 0.0
        %1282 = vmatpush1.msra.mxu0 0.0
        %1283 = vmatprep.subr.mxu0 0.0
        %1284 = vmatpush1.msra.mxu0 0.0
        %1285 = vmatprep.subr.mxu0 0.0
        %1286 = vmatpush1.msra.mxu0 0.0
        %1287 = vmatprep.subr.mxu0 0.0
        %1288 = vmatpush1.msra.mxu0 0.0
        %1289 = vmatprep.subr.mxu0 0.0
        %1290 = vmatpush1.msra.mxu0 0.0
        %1291 = vmatprep.subr.mxu0 0.0
        %1292 = vmatpush1.msra.mxu0 0.0
        %1293 = vmatprep.subr.mxu0 0.0
        %1294 = vmatpush1.msra.mxu0 0.0
        %1295 = vmatprep.subr.mxu0 0.0
        %1296 = vmatpush1.msra.mxu0 0.0
        %1297 = vmatprep.subr.mxu0 0.0
        %1298 = vmatpush1.msra.mxu0 0.0
        %1299 = vmatprep.subr.mxu0 0.0
        %1300 = vmatpush1.msra.mxu0 0.0
        %1301 = vmatprep.subr.mxu0 0.0
        %1302 = vmatpush1.msra.mxu0 0.0
        %1303 = vmatprep.subr.mxu0 0.0
        %1304 = vmatpush1.msra.mxu0 0.0
        %1305 = vmatprep.subr.mxu0 0.0
        %1306 = vmatpush1.msra.mxu0 0.0
        %1307 = vmatprep.subr.mxu0 0.0
        %1308 = vmatpush1.msra.mxu0 %v1275
        %1309 = vmatprep.subr.mxu0 0.0
        %1310 = vmatpush2.msra.mxu0 0.0
        %1311 = vmatprep.subr.mxu0 0.0
        %1312 = vmatpush2.msra.mxu0 0.0
        %1313 = vmatprep.subr.mxu0 0.0
        %1314 = vmatpush2.msra.mxu0 0.0
        %1315 = vmatprep.subr.mxu0 0.0
        %1316 = vmatpush2.msra.mxu0 0.0
        %1317 = vmatprep.subr.mxu0 0.0
        %1318 = vmatpush2.msra.mxu0 0.0
        %1319 = vmatprep.subr.mxu0 0.0
        %1320 = vmatpush2.msra.mxu0 0.0
        %1321 = vmatprep.subr.mxu0 0.0
        %1322 = vmatpush2.msra.mxu0 0.0
        %1323 = vmatprep.subr.mxu0 0.0
        %1324 = vmatpush2.msra.mxu0 0.0
        %1325 = vmatprep.subr.mxu0 0.0
        %1326 = vmatpush2.msra.mxu0 0.0
        %1327 = vmatprep.subr.mxu0 0.0
        %1328 = vmatpush2.msra.mxu0 0.0
        %1329 = vmatprep.subr.mxu0 0.0
        %1330 = vmatpush2.msra.mxu0 0.0
        %1331 = vmatprep.subr.mxu0 0.0
        %1332 = vmatpush2.msra.mxu0 0.0
        %1333 = vmatprep.subr.mxu0 0.0
        %1334 = vmatpush2.msra.mxu0 0.0
        %1335 = vmatprep.subr.mxu0 0.0
        %1336 = vmatpush2.msra.mxu0 0.0
        %1337 = vmatprep.subr.mxu0 0.0
        %1338 = vmatpush2.msra.mxu0 0.0
        %1339 = vmatprep.subr.mxu0 0.0
        %1340 = vmatpush2.msra.mxu0 0.0
        %1341 = vmatprep.mubr.f32.mxu0 0.0
        %1342 = vmatmul.mubr.f32.gmra.mxu0 %v1263
        %v1343 = vpop.f32.mrf.mxu0
        %v1344 = vadd.f32 %v1258, %v1343
        %v1345 = vpop.f32.mrf.mxu0
        %1346 = vmatprep.mubr.f32.mxu0 0.0
        %1347 = vmatmul.mubr.f32.gmra.mxu0 %v1266
        %v1348 = vpop.f32.mrf.mxu0
        %v1349 = vadd.f32 %v1259, %v1348
        %v1350 = vpop.f32.mrf.mxu0
        %1351 = vmatprep.mubr.f32.mxu0 0.0
        %1352 = vmatmul.mubr.f32.gmra.mxu0 %v1269
        %v1353 = vpop.f32.mrf.mxu0
        %v1354 = vadd.f32 %v1260, %v1353
        %v1355 = vpop.f32.mrf.mxu0
        %1356 = vmatprep.mubr.f32.mxu0 0.0
        %1357 = vmatmul.mubr.f32.gmra.mxu0 %v1272
        %v1358 = vpop.f32.mrf.mxu0
        %v1359 = vadd.f32 %v1261, %v1358
        %v1360 = vpop.f32.mrf.mxu0
        %1361 = vdwg.mxu0
        %v1362 = vmax.f32 %v1344, 0.0
        %v1363 = vmax.f32 %v1349, 0.0
        %v1364 = vmax.f32 %v1354, 0.0
        %v1365 = vmax.f32 %v1359, 0.0
        %v1366 = vld [vmem:[%s7] sm:$0xff]
        %v1367 = vld [vmem:[%s8] sm:$0xff]
        %v1369 = vsel %vm393, %v1366, 0
        %1371 = vmatprep.subr.mxu0 0.0
        %1372 = vmatpush1.msra.mxu0 0.0
        %1373 = vmatprep.subr.mxu0 0.0
        %1374 = vmatpush1.msra.mxu0 0.0
        %1375 = vmatprep.subr.mxu0 0.0
        %1376 = vmatpush1.msra.mxu0 0.0
        %1377 = vmatprep.subr.mxu0 0.0
        %1378 = vmatpush1.msra.mxu0 0.0
        %1379 = vmatprep.subr.mxu0 0.0
        %1380 = vmatpush1.msra.mxu0 0.0
        %1381 = vmatprep.subr.mxu0 0.0
        %1382 = vmatpush1.msra.mxu0 0.0
        %1383 = vmatprep.subr.mxu0 0.0
        %1384 = vmatpush1.msra.mxu0 0.0
        %1385 = vmatprep.subr.mxu0 0.0
        %1386 = vmatpush1.msra.mxu0 0.0
        %1387 = vmatprep.subr.mxu0 0.0
        %1388 = vmatpush1.msra.mxu0 0.0
        %1389 = vmatprep.subr.mxu0 0.0
        %1390 = vmatpush1.msra.mxu0 0.0
        %1391 = vmatprep.subr.mxu0 0.0
        %1392 = vmatpush1.msra.mxu0 0.0
        %1393 = vmatprep.subr.mxu0 0.0
        %1394 = vmatpush1.msra.mxu0 0.0
        %1395 = vmatprep.subr.mxu0 0.0
        %1396 = vmatpush1.msra.mxu0 %v1365
        %1397 = vmatprep.subr.mxu0 0.0
        %1398 = vmatpush1.msra.mxu0 %v1364
        %1399 = vmatprep.subr.mxu0 0.0
        %1400 = vmatpush1.msra.mxu0 %v1363
        %1401 = vmatprep.subr.mxu0 0.0
        %1402 = vmatpush1.msra.mxu0 %v1362
        %1403 = vmatprep.subr.mxu0 0.0
        %1404 = vmatpush2.msra.mxu0 0.0
        %1405 = vmatprep.subr.mxu0 0.0
        %1406 = vmatpush2.msra.mxu0 0.0
        %1407 = vmatprep.subr.mxu0 0.0
        %1408 = vmatpush2.msra.mxu0 0.0
        %1409 = vmatprep.subr.mxu0 0.0
        %1410 = vmatpush2.msra.mxu0 0.0
        %1411 = vmatprep.subr.mxu0 0.0
        %1412 = vmatpush2.msra.mxu0 0.0
        %1413 = vmatprep.subr.mxu0 0.0
        %1414 = vmatpush2.msra.mxu0 0.0
        %1415 = vmatprep.subr.mxu0 0.0
        %1416 = vmatpush2.msra.mxu0 0.0
        %1417 = vmatprep.subr.mxu0 0.0
        %1418 = vmatpush2.msra.mxu0 0.0
        %1419 = vmatprep.subr.mxu0 0.0
        %1420 = vmatpush2.msra.mxu0 0.0
        %1421 = vmatprep.subr.mxu0 0.0
        %1422 = vmatpush2.msra.mxu0 0.0
        %1423 = vmatprep.subr.mxu0 0.0
        %1424 = vmatpush2.msra.mxu0 0.0
        %1425 = vmatprep.subr.mxu0 0.0
        %1426 = vmatpush2.msra.mxu0 0.0
        %1427 = vmatprep.subr.mxu0 0.0
        %1428 = vmatpush2.msra.mxu0 0.0
        %1429 = vmatprep.subr.mxu0 0.0
        %1430 = vmatpush2.msra.mxu0 0.0
        %1431 = vmatprep.subr.mxu0 0.0
        %1432 = vmatpush2.msra.mxu0 0.0
        %1433 = vmatprep.subr.mxu0 0.0
        %1434 = vmatpush2.msra.mxu0 0.0
        %1435 = vmatprep.mubr.f32.mxu0 0.0
        %1436 = vmatmul.mubr.f32.gmra.mxu0 %v1369
        %v1437 = vpop.f32.mrf.mxu0
        %v1438 = vadd.f32 %v1367, %v1437
        %v1439 = vpop.f32.mrf.mxu0
        %1440 = vdwg.mxu0
        %v1442 = vrot.slane %v1438, 4
        %v1444 = vmax.f32 %v1438, %v1442
        %v1445 = vsub.f32 %v1438, %v1444
        %v1446 = vmul.f32 %v1445, 1.442695
        %v1447 = vpow.pop %v1446
        %v1449 = vrot.slane %v1444, 4
        %v1451 = vsub.f32 %v1438, %v1449
        %v1452 = vmul.f32 %v1451, 1.442695
        %v1453 = vpow.pop %v1452
        %v1455 = vrot.slane %v1453, 4
        %v1457 = vadd.f32 %v1447, %v1455
        %v1458 = vrcp.pop %v1457
        %v1459 = vmul.f32 %v1447, %v1458
        %1461 = vset.pattern.permute.xlu0 0
        %1462 = vperm.xlu0 %1461, %v1459
        %v1463 = vpop.permute.xlu0 %1462
        %v1465 = vmul.f32 %v1463, %v1243
        %v1466 = vmul.f32 %v1463, %v1244
        %v1468 = vrot.slane %v1458, 4
        %v1470 = vmul.f32 %v1453, %v1468
        %1472 = vset.pattern.permute.xlu0 0
        %1473 = vperm.xlu0 %1472, %v1470
        %v1474 = vpop.permute.xlu0 %1473
        %v1476 = vmul.f32 %v1474, %v1243
        %v1477 = vmul.f32 %v1474, %v1244
        %v1480 = vrot.slane %v1476, 4
        %v1481 = vrot.slane %v1477, 4
        %v1484 = vadd.f32 %v1465, %v1480
        %v1485 = vadd.f32 %v1466, %v1481
        %v1488 = vcombine.low %v1484, %v1485
        %1490 = vst [vmem:[%s328] sm:$0xff] %v1488
        %s1491 = scalar_lea.vmem %s334, 12
        %v1492 = vld [vmem:[%s1491] sm:$0xff]
        %v1493 = vld [vmem:[%s1491 + $0x8] sm:$0xf]
        %v1494 = vmul.f32 %v1492, %v350
        %v1495 = vmul.f32 %v1492, %v367
        %v1496 = vmul.f32 %v1493, %v365
        %v1497 = vmul.f32 %v1492, %v376
        %v1498 = vmul.f32 %v1493, %v374
        %v1499 = vmul.f32 %v1492, %v385
        %v1500 = vmul.f32 %v1493, %v383
        %v1501 = vmul.f32 %v1492, %v394
        %v1502 = vmul.f32 %v1493, %v392
        %v1503 = vmul.f32 %v1492, %v403
        %v1504 = vmul.f32 %v1493, %v401
        %v1505 = vld [vmem:[%s3] sm:$0xff]
        %v1506 = vld [vmem:[%s409] sm:$0xff]
        %v1509 = vcombine.high %v1492, %v1492
        %1510 = vrot.lane.b32.xlu0 %v1492, 127
        %v1511 = vpop.permute.xlu0 %1510
        %1512 = vrot.lane.b32.xlu0 %v1509, 127
        %v1513 = vpop.permute.xlu0 %1512
        %1514 = vrot.lane.b32.xlu0 %v1493, 127
        %v1515 = vpop.permute.xlu0 %1514
        %v1516 = vsel %vm420, %v1511, %v1513
        %v1517 = vsel %vm420, %v1513, %v1515
        %v1519 = vsel %vm423, %v1506, 0
        %v1521 = vsel %vm427, %v1516, 0
        %v1523 = vsel %vm427, %v1517, 0
        %1525 = vmatprep.subr.mxu0 0.0
        %1526 = vmatpush1.msra.mxu0 0.0
        %1527 = vmatprep.subr.mxu0 0.0
        %1528 = vmatpush1.msra.mxu0 0.0
        %1529 = vmatprep.subr.mxu0 0.0
        %1530 = vmatpush1.msra.mxu0 0.0
        %1531 = vmatprep.subr.mxu0 0.0
        %1532 = vmatpush1.msra.mxu0 0.0
        %1533 = vmatprep.subr.mxu0 0.0
        %1534 = vmatpush1.msra.mxu0 0.0
        %1535 = vmatprep.subr.mxu0 0.0
        %1536 = vmatpush1.msra.mxu0 0.0
        %1537 = vmatprep.subr.mxu0 0.0
        %1538 = vmatpush1.msra.mxu0 0.0
        %1539 = vmatprep.subr.mxu0 0.0
        %1540 = vmatpush1.msra.mxu0 0.0
        %1541 = vmatprep.subr.mxu0 0.0
        %1542 = vmatpush1.msra.mxu0 0.0
        %1543 = vmatprep.subr.mxu0 0.0
        %1544 = vmatpush1.msra.mxu0 0.0
        %1545 = vmatprep.subr.mxu0 0.0
        %1546 = vmatpush1.msra.mxu0 0.0
        %1547 = vmatprep.subr.mxu0 0.0
        %1548 = vmatpush1.msra.mxu0 0.0
        %1549 = vmatprep.subr.mxu0 0.0
        %1550 = vmatpush1.msra.mxu0 0.0
        %1551 = vmatprep.subr.mxu0 0.0
        %1552 = vmatpush1.msra.mxu0 0.0
        %1553 = vmatprep.subr.mxu0 0.0
        %1554 = vmatpush1.msra.mxu0 0.0
        %1555 = vmatprep.subr.mxu0 %v1523
        %1556 = vmatpush1.msra.mxu0 %v1521
        %1557 = vmatprep.subr.mxu0 0.0
        %1558 = vmatpush2.msra.mxu0 0.0
        %1559 = vmatprep.subr.mxu0 0.0
        %1560 = vmatpush2.msra.mxu0 0.0
        %1561 = vmatprep.subr.mxu0 0.0
        %1562 = vmatpush2.msra.mxu0 0.0
        %1563 = vmatprep.subr.mxu0 0.0
        %1564 = vmatpush2.msra.mxu0 0.0
        %1565 = vmatprep.subr.mxu0 0.0
        %1566 = vmatpush2.msra.mxu0 0.0
        %1567 = vmatprep.subr.mxu0 0.0
        %1568 = vmatpush2.msra.mxu0 0.0
        %1569 = vmatprep.subr.mxu0 0.0
        %1570 = vmatpush2.msra.mxu0 0.0
        %1571 = vmatprep.subr.mxu0 0.0
        %1572 = vmatpush2.msra.mxu0 0.0
        %1573 = vmatprep.subr.mxu0 0.0
        %1574 = vmatpush2.msra.mxu0 0.0
        %1575 = vmatprep.subr.mxu0 0.0
        %1576 = vmatpush2.msra.mxu0 0.0
        %1577 = vmatprep.subr.mxu0 0.0
        %1578 = vmatpush2.msra.mxu0 0.0
        %1579 = vmatprep.subr.mxu0 0.0
        %1580 = vmatpush2.msra.mxu0 0.0
        %1581 = vmatprep.subr.mxu0 0.0
        %1582 = vmatpush2.msra.mxu0 0.0
        %1583 = vmatprep.subr.mxu0 0.0
        %1584 = vmatpush2.msra.mxu0 0.0
        %1585 = vmatprep.subr.mxu0 0.0
        %1586 = vmatpush2.msra.mxu0 0.0
        %1587 = vmatprep.subr.mxu0 0.0
        %1588 = vmatpush2.msra.mxu0 0.0
        %1589 = vmatprep.mubr.f32.mxu0 0.0
        %1590 = vmatmul.mubr.f32.gmra.mxu0 %v1519
        %v1591 = vpop.f32.mrf.mxu0
        %v1592 = vadd.f32 0.0, %v1591
        %v1593 = vpop.f32.mrf.mxu0
        %v1594 = vadd.f32 0.0, %v1593
        %1595 = vdwg.mxu0
        %v1597 = vcombine.high %v1494, %v1494
        %v1599 = vsel %vm423, %v1505, 0
        %v1601 = vsel %vm427, %v1494, 0
        %v1603 = vsel %vm427, %v1597, 0
        %1605 = vmatprep.subr.mxu0 0.0
        %1606 = vmatpush1.msra.mxu0 0.0
        %1607 = vmatprep.subr.mxu0 0.0
        %1608 = vmatpush1.msra.mxu0 0.0
        %1609 = vmatprep.subr.mxu0 0.0
        %1610 = vmatpush1.msra.mxu0 0.0
        %1611 = vmatprep.subr.mxu0 0.0
        %1612 = vmatpush1.msra.mxu0 0.0
        %1613 = vmatprep.subr.mxu0 0.0
        %1614 = vmatpush1.msra.mxu0 0.0
        %1615 = vmatprep.subr.mxu0 0.0
        %1616 = vmatpush1.msra.mxu0 0.0
        %1617 = vmatprep.subr.mxu0 0.0
        %1618 = vmatpush1.msra.mxu0 0.0
        %1619 = vmatprep.subr.mxu0 0.0
        %1620 = vmatpush1.msra.mxu0 0.0
        %1621 = vmatprep.subr.mxu0 0.0
        %1622 = vmatpush1.msra.mxu0 0.0
        %1623 = vmatprep.subr.mxu0 0.0
        %1624 = vmatpush1.msra.mxu0 0.0
        %1625 = vmatprep.subr.mxu0 0.0
        %1626 = vmatpush1.msra.mxu0 0.0
        %1627 = vmatprep.subr.mxu0 0.0
        %1628 = vmatpush1.msra.mxu0 0.0
        %1629 = vmatprep.subr.mxu0 0.0
        %1630 = vmatpush1.msra.mxu0 0.0
        %1631 = vmatprep.subr.mxu0 0.0
        %1632 = vmatpush1.msra.mxu0 0.0
        %1633 = vmatprep.subr.mxu0 0.0
        %1634 = vmatpush1.msra.mxu0 0.0
        %1635 = vmatprep.subr.mxu0 %v1603
        %1636 = vmatpush1.msra.mxu0 %v1601
        %1637 = vmatprep.subr.mxu0 0.0
        %1638 = vmatpush2.msra.mxu0 0.0
        %1639 = vmatprep.subr.mxu0 0.0
        %1640 = vmatpush2.msra.mxu0 0.0
        %1641 = vmatprep.subr.mxu0 0.0
        %1642 = vmatpush2.msra.mxu0 0.0
        %1643 = vmatprep.subr.mxu0 0.0
        %1644 = vmatpush2.msra.mxu0 0.0
        %1645 = vmatprep.subr.mxu0 0.0
        %1646 = vmatpush2.msra.mxu0 0.0
        %1647 = vmatprep.subr.mxu0 0.0
        %1648 = vmatpush2.msra.mxu0 0.0
        %1649 = vmatprep.subr.mxu0 0.0
        %1650 = vmatpush2.msra.mxu0 0.0
        %1651 = vmatprep.subr.mxu0 0.0
        %1652 = vmatpush2.msra.mxu0 0.0
        %1653 = vmatprep.subr.mxu0 0.0
        %1654 = vmatpush2.msra.mxu0 0.0
        %1655 = vmatprep.subr.mxu0 0.0
        %1656 = vmatpush2.msra.mxu0 0.0
        %1657 = vmatprep.subr.mxu0 0.0
        %1658 = vmatpush2.msra.mxu0 0.0
        %1659 = vmatprep.subr.mxu0 0.0
        %1660 = vmatpush2.msra.mxu0 0.0
        %1661 = vmatprep.subr.mxu0 0.0
        %1662 = vmatpush2.msra.mxu0 0.0
        %1663 = vmatprep.subr.mxu0 0.0
        %1664 = vmatpush2.msra.mxu0 0.0
        %1665 = vmatprep.subr.mxu0 0.0
        %1666 = vmatpush2.msra.mxu0 0.0
        %1667 = vmatprep.subr.mxu0 0.0
        %1668 = vmatpush2.msra.mxu0 0.0
        %1669 = vmatprep.mubr.f32.mxu0 0.0
        %1670 = vmatmul.mubr.f32.gmra.mxu0 %v1599
        %v1671 = vpop.f32.mrf.mxu0
        %v1672 = vadd.f32 %v1592, %v1671
        %v1673 = vpop.f32.mrf.mxu0
        %v1674 = vadd.f32 %v1594, %v1673
        %1675 = vdwg.mxu0
        %v1676 = vld [vmem:[%s583] sm:$0xff]
        %v1679 = vcombine.high %v1495, %v1495
        %1680 = vrot.lane.b32.xlu0 %v1495, 126
        %v1681 = vpop.permute.xlu0 %1680
        %1682 = vrot.lane.b32.xlu0 %v1679, 126
        %v1683 = vpop.permute.xlu0 %1682
        %1684 = vrot.lane.b32.xlu0 %v1496, 126
        %v1685 = vpop.permute.xlu0 %1684
        %v1686 = vsel %vm594, %v1681, %v1683
        %v1687 = vsel %vm594, %v1683, %v1685
        %v1689 = vsel %vm423, %v1676, 0
        %v1691 = vsel %vm427, %v1686, 0
        %v1693 = vsel %vm427, %v1687, 0
        %1695 = vmatprep.subr.mxu0 0.0
        %1696 = vmatpush1.msra.mxu0 0.0
        %1697 = vmatprep.subr.mxu0 0.0
        %1698 = vmatpush1.msra.mxu0 0.0
        %1699 = vmatprep.subr.mxu0 0.0
        %1700 = vmatpush1.msra.mxu0 0.0
        %1701 = vmatprep.subr.mxu0 0.0
        %1702 = vmatpush1.msra.mxu0 0.0
        %1703 = vmatprep.subr.mxu0 0.0
        %1704 = vmatpush1.msra.mxu0 0.0
        %1705 = vmatprep.subr.mxu0 0.0
        %1706 = vmatpush1.msra.mxu0 0.0
        %1707 = vmatprep.subr.mxu0 0.0
        %1708 = vmatpush1.msra.mxu0 0.0
        %1709 = vmatprep.subr.mxu0 0.0
        %1710 = vmatpush1.msra.mxu0 0.0
        %1711 = vmatprep.subr.mxu0 0.0
        %1712 = vmatpush1.msra.mxu0 0.0
        %1713 = vmatprep.subr.mxu0 0.0
        %1714 = vmatpush1.msra.mxu0 0.0
        %1715 = vmatprep.subr.mxu0 0.0
        %1716 = vmatpush1.msra.mxu0 0.0
        %1717 = vmatprep.subr.mxu0 0.0
        %1718 = vmatpush1.msra.mxu0 0.0
        %1719 = vmatprep.subr.mxu0 0.0
        %1720 = vmatpush1.msra.mxu0 0.0
        %1721 = vmatprep.subr.mxu0 0.0
        %1722 = vmatpush1.msra.mxu0 0.0
        %1723 = vmatprep.subr.mxu0 0.0
        %1724 = vmatpush1.msra.mxu0 0.0
        %1725 = vmatprep.subr.mxu0 %v1693
        %1726 = vmatpush1.msra.mxu0 %v1691
        %1727 = vmatprep.subr.mxu0 0.0
        %1728 = vmatpush2.msra.mxu0 0.0
        %1729 = vmatprep.subr.mxu0 0.0
        %1730 = vmatpush2.msra.mxu0 0.0
        %1731 = vmatprep.subr.mxu0 0.0
        %1732 = vmatpush2.msra.mxu0 0.0
        %1733 = vmatprep.subr.mxu0 0.0
        %1734 = vmatpush2.msra.mxu0 0.0
        %1735 = vmatprep.subr.mxu0 0.0
        %1736 = vmatpush2.msra.mxu0 0.0
        %1737 = vmatprep.subr.mxu0 0.0
        %1738 = vmatpush2.msra.mxu0 0.0
        %1739 = vmatprep.subr.mxu0 0.0
        %1740 = vmatpush2.msra.mxu0 0.0
        %1741 = vmatprep.subr.mxu0 0.0
        %1742 = vmatpush2.msra.mxu0 0.0
        %1743 = vmatprep.subr.mxu0 0.0
        %1744 = vmatpush2.msra.mxu0 0.0
        %1745 = vmatprep.subr.mxu0 0.0
        %1746 = vmatpush2.msra.mxu0 0.0
        %1747 = vmatprep.subr.mxu0 0.0
        %1748 = vmatpush2.msra.mxu0 0.0
        %1749 = vmatprep.subr.mxu0 0.0
        %1750 = vmatpush2.msra.mxu0 0.0
        %1751 = vmatprep.subr.mxu0 0.0
        %1752 = vmatpush2.msra.mxu0 0.0
        %1753 = vmatprep.subr.mxu0 0.0
        %1754 = vmatpush2.msra.mxu0 0.0
        %1755 = vmatprep.subr.mxu0 0.0
        %1756 = vmatpush2.msra.mxu0 0.0
        %1757 = vmatprep.subr.mxu0 0.0
        %1758 = vmatpush2.msra.mxu0 0.0
        %1759 = vmatprep.mubr.f32.mxu0 0.0
        %1760 = vmatmul.mubr.f32.gmra.mxu0 %v1689
        %v1761 = vpop.f32.mrf.mxu0
        %v1762 = vadd.f32 0.0, %v1761
        %v1763 = vpop.f32.mrf.mxu0
        %v1764 = vadd.f32 0.0, %v1763
        %1765 = vdwg.mxu0
        %v1766 = vadd.f32 %v1672, %v1762
        %v1767 = vadd.f32 %v1674, %v1764
        %v1768 = vld [vmem:[%s677] sm:$0xff]
        %v1771 = vcombine.high %v1497, %v1497
        %1772 = vrot.lane.b32.xlu0 %v1497, 112
        %v1773 = vpop.permute.xlu0 %1772
        %1774 = vrot.lane.b32.xlu0 %v1771, 112
        %v1775 = vpop.permute.xlu0 %1774
        %1776 = vrot.lane.b32.xlu0 %v1498, 112
        %v1777 = vpop.permute.xlu0 %1776
        %v1778 = vsel %vm688, %v1773, %v1775
        %v1779 = vsel %vm688, %v1775, %v1777
        %v1781 = vsel %vm423, %v1768, 0
        %v1783 = vsel %vm427, %v1778, 0
        %v1785 = vsel %vm427, %v1779, 0
        %1787 = vmatprep.subr.mxu0 0.0
        %1788 = vmatpush1.msra.mxu0 0.0
        %1789 = vmatprep.subr.mxu0 0.0
        %1790 = vmatpush1.msra.mxu0 0.0
        %1791 = vmatprep.subr.mxu0 0.0
        %1792 = vmatpush1.msra.mxu0 0.0
        %1793 = vmatprep.subr.mxu0 0.0
        %1794 = vmatpush1.msra.mxu0 0.0
        %1795 = vmatprep.subr.mxu0 0.0
        %1796 = vmatpush1.msra.mxu0 0.0
        %1797 = vmatprep.subr.mxu0 0.0
        %1798 = vmatpush1.msra.mxu0 0.0
        %1799 = vmatprep.subr.mxu0 0.0
        %1800 = vmatpush1.msra.mxu0 0.0
        %1801 = vmatprep.subr.mxu0 0.0
        %1802 = vmatpush1.msra.mxu0 0.0
        %1803 = vmatprep.subr.mxu0 0.0
        %1804 = vmatpush1.msra.mxu0 0.0
        %1805 = vmatprep.subr.mxu0 0.0
        %1806 = vmatpush1.msra.mxu0 0.0
        %1807 = vmatprep.subr.mxu0 0.0
        %1808 = vmatpush1.msra.mxu0 0.0
        %1809 = vmatprep.subr.mxu0 0.0
        %1810 = vmatpush1.msra.mxu0 0.0
        %1811 = vmatprep.subr.mxu0 0.0
        %1812 = vmatpush1.msra.mxu0 0.0
        %1813 = vmatprep.subr.mxu0 0.0
        %1814 = vmatpush1.msra.mxu0 0.0
        %1815 = vmatprep.subr.mxu0 0.0
        %1816 = vmatpush1.msra.mxu0 0.0
        %1817 = vmatprep.subr.mxu0 %v1785
        %1818 = vmatpush1.msra.mxu0 %v1783
        %1819 = vmatprep.subr.mxu0 0.0
        %1820 = vmatpush2.msra.mxu0 0.0
        %1821 = vmatprep.subr.mxu0 0.0
        %1822 = vmatpush2.msra.mxu0 0.0
        %1823 = vmatprep.subr.mxu0 0.0
        %1824 = vmatpush2.msra.mxu0 0.0
        %1825 = vmatprep.subr.mxu0 0.0
        %1826 = vmatpush2.msra.mxu0 0.0
        %1827 = vmatprep.subr.mxu0 0.0
        %1828 = vmatpush2.msra.mxu0 0.0
        %1829 = vmatprep.subr.mxu0 0.0
        %1830 = vmatpush2.msra.mxu0 0.0
        %1831 = vmatprep.subr.mxu0 0.0
        %1832 = vmatpush2.msra.mxu0 0.0
        %1833 = vmatprep.subr.mxu0 0.0
        %1834 = vmatpush2.msra.mxu0 0.0
        %1835 = vmatprep.subr.mxu0 0.0
        %1836 = vmatpush2.msra.mxu0 0.0
        %1837 = vmatprep.subr.mxu0 0.0
        %1838 = vmatpush2.msra.mxu0 0.0
        %1839 = vmatprep.subr.mxu0 0.0
        %1840 = vmatpush2.msra.mxu0 0.0
        %1841 = vmatprep.subr.mxu0 0.0
        %1842 = vmatpush2.msra.mxu0 0.0
        %1843 = vmatprep.subr.mxu0 0.0
        %1844 = vmatpush2.msra.mxu0 0.0
        %1845 = vmatprep.subr.mxu0 0.0
        %1846 = vmatpush2.msra.mxu0 0.0
        %1847 = vmatprep.subr.mxu0 0.0
        %1848 = vmatpush2.msra.mxu0 0.0
        %1849 = vmatprep.subr.mxu0 0.0
        %1850 = vmatpush2.msra.mxu0 0.0
        %1851 = vmatprep.mubr.f32.mxu0 0.0
        %1852 = vmatmul.mubr.f32.gmra.mxu0 %v1781
        %v1853 = vpop.f32.mrf.mxu0
        %v1854 = vadd.f32 0.0, %v1853
        %v1855 = vpop.f32.mrf.mxu0
        %v1856 = vadd.f32 0.0, %v1855
        %1857 = vdwg.mxu0
        %v1858 = vadd.f32 %v1766, %v1854
        %v1859 = vadd.f32 %v1767, %v1856
        %v1860 = vld [vmem:[%s771] sm:$0xff]
        %1861 = vrot.lane.b32.xlu0 %v1492, 111
        %v1862 = vpop.permute.xlu0 %1861
        %1863 = vrot.lane.b32.xlu0 %v1509, 111
        %v1864 = vpop.permute.xlu0 %1863
        %1865 = vrot.lane.b32.xlu0 %v1493, 111
        %v1866 = vpop.permute.xlu0 %1865
        %v1867 = vsel %vm779, %v1862, %v1864
        %v1868 = vsel %vm779, %v1864, %v1866
        %v1870 = vsel %vm423, %v1860, 0
        %v1872 = vsel %vm427, %v1867, 0
        %v1874 = vsel %vm427, %v1868, 0
        %1876 = vmatprep.subr.mxu0 0.0
        %1877 = vmatpush1.msra.mxu0 0.0
        %1878 = vmatprep.subr.mxu0 0.0
        %1879 = vmatpush1.msra.mxu0 0.0
        %1880 = vmatprep.subr.mxu0 0.0
        %1881 = vmatpush1.msra.mxu0 0.0
        %1882 = vmatprep.subr.mxu0 0.0
        %1883 = vmatpush1.msra.mxu0 0.0
        %1884 = vmatprep.subr.mxu0 0.0
        %1885 = vmatpush1.msra.mxu0 0.0
        %1886 = vmatprep.subr.mxu0 0.0
        %1887 = vmatpush1.msra.mxu0 0.0
        %1888 = vmatprep.subr.mxu0 0.0
        %1889 = vmatpush1.msra.mxu0 0.0
        %1890 = vmatprep.subr.mxu0 0.0
        %1891 = vmatpush1.msra.mxu0 0.0
        %1892 = vmatprep.subr.mxu0 0.0
        %1893 = vmatpush1.msra.mxu0 0.0
        %1894 = vmatprep.subr.mxu0 0.0
        %1895 = vmatpush1.msra.mxu0 0.0
        %1896 = vmatprep.subr.mxu0 0.0
        %1897 = vmatpush1.msra.mxu0 0.0
        %1898 = vmatprep.subr.mxu0 0.0
        %1899 = vmatpush1.msra.mxu0 0.0
        %1900 = vmatprep.subr.mxu0 0.0
        %1901 = vmatpush1.msra.mxu0 0.0
        %1902 = vmatprep.subr.mxu0 0.0
        %1903 = vmatpush1.msra.mxu0 0.0
        %1904 = vmatprep.subr.mxu0 0.0
        %1905 = vmatpush1.msra.mxu0 0.0
        %1906 = vmatprep.subr.mxu0 %v1874
        %1907 = vmatpush1.msra.mxu0 %v1872
        %1908 = vmatprep.subr.mxu0 0.0
        %1909 = vmatpush2.msra.mxu0 0.0
        %1910 = vmatprep.subr.mxu0 0.0
        %1911 = vmatpush2.msra.mxu0 0.0
        %1912 = vmatprep.subr.mxu0 0.0
        %1913 = vmatpush2.msra.mxu0 0.0
        %1914 = vmatprep.subr.mxu0 0.0
        %1915 = vmatpush2.msra.mxu0 0.0
        %1916 = vmatprep.subr.mxu0 0.0
        %1917 = vmatpush2.msra.mxu0 0.0
        %1918 = vmatprep.subr.mxu0 0.0
        %1919 = vmatpush2.msra.mxu0 0.0
        %1920 = vmatprep.subr.mxu0 0.0
        %1921 = vmatpush2.msra.mxu0 0.0
        %1922 = vmatprep.subr.mxu0 0.0
        %1923 = vmatpush2.msra.mxu0 0.0
        %1924 = vmatprep.subr.mxu0 0.0
        %1925 = vmatpush2.msra.mxu0 0.0
        %1926 = vmatprep.subr.mxu0 0.0
        %1927 = vmatpush2.msra.mxu0 0.0
        %1928 = vmatprep.subr.mxu0 0.0
        %1929 = vmatpush2.msra.mxu0 0.0
        %1930 = vmatprep.subr.mxu0 0.0
        %1931 = vmatpush2.msra.mxu0 0.0
        %1932 = vmatprep.subr.mxu0 0.0
        %1933 = vmatpush2.msra.mxu0 0.0
        %1934 = vmatprep.subr.mxu0 0.0
        %1935 = vmatpush2.msra.mxu0 0.0
        %1936 = vmatprep.subr.mxu0 0.0
        %1937 = vmatpush2.msra.mxu0 0.0
        %1938 = vmatprep.subr.mxu0 0.0
        %1939 = vmatpush2.msra.mxu0 0.0
        %1940 = vmatprep.mubr.f32.mxu0 0.0
        %1941 = vmatmul.mubr.f32.gmra.mxu0 %v1870
        %v1942 = vpop.f32.mrf.mxu0
        %v1943 = vadd.f32 0.0, %v1942
        %v1944 = vpop.f32.mrf.mxu0
        %v1945 = vadd.f32 0.0, %v1944
        %1946 = vdwg.mxu0
        %v1947 = vadd.f32 %v1858, %v1943
        %v1948 = vadd.f32 %v1859, %v1945
        %v1949 = vld [vmem:[%s862] sm:$0xff]
        %v1952 = vcombine.high %v1499, %v1499
        %1953 = vrot.lane.b32.xlu0 %v1499, 110
        %v1954 = vpop.permute.xlu0 %1953
        %1955 = vrot.lane.b32.xlu0 %v1952, 110
        %v1956 = vpop.permute.xlu0 %1955
        %1957 = vrot.lane.b32.xlu0 %v1500, 110
        %v1958 = vpop.permute.xlu0 %1957
        %v1959 = vsel %vm873, %v1954, %v1956
        %v1960 = vsel %vm873, %v1956, %v1958
        %v1962 = vsel %vm423, %v1949, 0
        %v1964 = vsel %vm427, %v1959, 0
        %v1966 = vsel %vm427, %v1960, 0
        %1968 = vmatprep.subr.mxu0 0.0
        %1969 = vmatpush1.msra.mxu0 0.0
        %1970 = vmatprep.subr.mxu0 0.0
        %1971 = vmatpush1.msra.mxu0 0.0
        %1972 = vmatprep.subr.mxu0 0.0
        %1973 = vmatpush1.msra.mxu0 0.0
        %1974 = vmatprep.subr.mxu0 0.0
        %1975 = vmatpush1.msra.mxu0 0.0
        %1976 = vmatprep.subr.mxu0 0.0
        %1977 = vmatpush1.msra.mxu0 0.0
        %1978 = vmatprep.subr.mxu0 0.0
        %1979 = vmatpush1.msra.mxu0 0.0
        %1980 = vmatprep.subr.mxu0 0.0
        %1981 = vmatpush1.msra.mxu0 0.0
        %1982 = vmatprep.subr.mxu0 0.0
        %1983 = vmatpush1.msra.mxu0 0.0
        %1984 = vmatprep.subr.mxu0 0.0
        %1985 = vmatpush1.msra.mxu0 0.0
        %1986 = vmatprep.subr.mxu0 0.0
        %1987 = vmatpush1.msra.mxu0 0.0
        %1988 = vmatprep.subr.mxu0 0.0
        %1989 = vmatpush1.msra.mxu0 0.0
        %1990 = vmatprep.subr.mxu0 0.0
        %1991 = vmatpush1.msra.mxu0 0.0
        %1992 = vmatprep.subr.mxu0 0.0
        %1993 = vmatpush1.msra.mxu0 0.0
        %1994 = vmatprep.subr.mxu0 0.0
        %1995 = vmatpush1.msra.mxu0 0.0
        %1996 = vmatprep.subr.mxu0 0.0
        %1997 = vmatpush1.msra.mxu0 0.0
        %1998 = vmatprep.subr.mxu0 %v1966
        %1999 = vmatpush1.msra.mxu0 %v1964
        %2000 = vmatprep.subr.mxu0 0.0
        %2001 = vmatpush2.msra.mxu0 0.0
        %2002 = vmatprep.subr.mxu0 0.0
        %2003 = vmatpush2.msra.mxu0 0.0
        %2004 = vmatprep.subr.mxu0 0.0
        %2005 = vmatpush2.msra.mxu0 0.0
        %2006 = vmatprep.subr.mxu0 0.0
        %2007 = vmatpush2.msra.mxu0 0.0
        %2008 = vmatprep.subr.mxu0 0.0
        %2009 = vmatpush2.msra.mxu0 0.0
        %2010 = vmatprep.subr.mxu0 0.0
        %2011 = vmatpush2.msra.mxu0 0.0
        %2012 = vmatprep.subr.mxu0 0.0
        %2013 = vmatpush2.msra.mxu0 0.0
        %2014 = vmatprep.subr.mxu0 0.0
        %2015 = vmatpush2.msra.mxu0 0.0
        %2016 = vmatprep.subr.mxu0 0.0
        %2017 = vmatpush2.msra.mxu0 0.0
        %2018 = vmatprep.subr.mxu0 0.0
        %2019 = vmatpush2.msra.mxu0 0.0
        %2020 = vmatprep.subr.mxu0 0.0
        %2021 = vmatpush2.msra.mxu0 0.0
        %2022 = vmatprep.subr.mxu0 0.0
        %2023 = vmatpush2.msra.mxu0 0.0
        %2024 = vmatprep.subr.mxu0 0.0
        %2025 = vmatpush2.msra.mxu0 0.0
        %2026 = vmatprep.subr.mxu0 0.0
        %2027 = vmatpush2.msra.mxu0 0.0
        %2028 = vmatprep.subr.mxu0 0.0
        %2029 = vmatpush2.msra.mxu0 0.0
        %2030 = vmatprep.subr.mxu0 0.0
        %2031 = vmatpush2.msra.mxu0 0.0
        %2032 = vmatprep.mubr.f32.mxu0 0.0
        %2033 = vmatmul.mubr.f32.gmra.mxu0 %v1962
        %v2034 = vpop.f32.mrf.mxu0
        %v2035 = vadd.f32 0.0, %v2034
        %v2036 = vpop.f32.mrf.mxu0
        %v2037 = vadd.f32 0.0, %v2036
        %2038 = vdwg.mxu0
        %v2039 = vadd.f32 %v1947, %v2035
        %v2040 = vadd.f32 %v1948, %v2037
        %v2041 = vld [vmem:[%s956] sm:$0xff]
        %v2044 = vcombine.high %v1501, %v1501
        %2045 = vrot.lane.b32.xlu0 %v1501, 96
        %v2046 = vpop.permute.xlu0 %2045
        %2047 = vrot.lane.b32.xlu0 %v2044, 96
        %v2048 = vpop.permute.xlu0 %2047
        %2049 = vrot.lane.b32.xlu0 %v1502, 96
        %v2050 = vpop.permute.xlu0 %2049
        %v2051 = vsel %vm967, %v2046, %v2048
        %v2052 = vsel %vm967, %v2048, %v2050
        %v2054 = vsel %vm423, %v2041, 0
        %v2056 = vsel %vm427, %v2051, 0
        %v2058 = vsel %vm427, %v2052, 0
        %2060 = vmatprep.subr.mxu0 0.0
        %2061 = vmatpush1.msra.mxu0 0.0
        %2062 = vmatprep.subr.mxu0 0.0
        %2063 = vmatpush1.msra.mxu0 0.0
        %2064 = vmatprep.subr.mxu0 0.0
        %2065 = vmatpush1.msra.mxu0 0.0
        %2066 = vmatprep.subr.mxu0 0.0
        %2067 = vmatpush1.msra.mxu0 0.0
        %2068 = vmatprep.subr.mxu0 0.0
        %2069 = vmatpush1.msra.mxu0 0.0
        %2070 = vmatprep.subr.mxu0 0.0
        %2071 = vmatpush1.msra.mxu0 0.0
        %2072 = vmatprep.subr.mxu0 0.0
        %2073 = vmatpush1.msra.mxu0 0.0
        %2074 = vmatprep.subr.mxu0 0.0
        %2075 = vmatpush1.msra.mxu0 0.0
        %2076 = vmatprep.subr.mxu0 0.0
        %2077 = vmatpush1.msra.mxu0 0.0
        %2078 = vmatprep.subr.mxu0 0.0
        %2079 = vmatpush1.msra.mxu0 0.0
        %2080 = vmatprep.subr.mxu0 0.0
        %2081 = vmatpush1.msra.mxu0 0.0
        %2082 = vmatprep.subr.mxu0 0.0
        %2083 = vmatpush1.msra.mxu0 0.0
        %2084 = vmatprep.subr.mxu0 0.0
        %2085 = vmatpush1.msra.mxu0 0.0
        %2086 = vmatprep.subr.mxu0 0.0
        %2087 = vmatpush1.msra.mxu0 0.0
        %2088 = vmatprep.subr.mxu0 0.0
        %2089 = vmatpush1.msra.mxu0 0.0
        %2090 = vmatprep.subr.mxu0 %v2058
        %2091 = vmatpush1.msra.mxu0 %v2056
        %2092 = vmatprep.subr.mxu0 0.0
        %2093 = vmatpush2.msra.mxu0 0.0
        %2094 = vmatprep.subr.mxu0 0.0
        %2095 = vmatpush2.msra.mxu0 0.0
        %2096 = vmatprep.subr.mxu0 0.0
        %2097 = vmatpush2.msra.mxu0 0.0
        %2098 = vmatprep.subr.mxu0 0.0
        %2099 = vmatpush2.msra.mxu0 0.0
        %2100 = vmatprep.subr.mxu0 0.0
        %2101 = vmatpush2.msra.mxu0 0.0
        %2102 = vmatprep.subr.mxu0 0.0
        %2103 = vmatpush2.msra.mxu0 0.0
        %2104 = vmatprep.subr.mxu0 0.0
        %2105 = vmatpush2.msra.mxu0 0.0
        %2106 = vmatprep.subr.mxu0 0.0
        %2107 = vmatpush2.msra.mxu0 0.0
        %2108 = vmatprep.subr.mxu0 0.0
        %2109 = vmatpush2.msra.mxu0 0.0
        %2110 = vmatprep.subr.mxu0 0.0
        %2111 = vmatpush2.msra.mxu0 0.0
        %2112 = vmatprep.subr.mxu0 0.0
        %2113 = vmatpush2.msra.mxu0 0.0
        %2114 = vmatprep.subr.mxu0 0.0
        %2115 = vmatpush2.msra.mxu0 0.0
        %2116 = vmatprep.subr.mxu0 0.0
        %2117 = vmatpush2.msra.mxu0 0.0
        %2118 = vmatprep.subr.mxu0 0.0
        %2119 = vmatpush2.msra.mxu0 0.0
        %2120 = vmatprep.subr.mxu0 0.0
        %2121 = vmatpush2.msra.mxu0 0.0
        %2122 = vmatprep.subr.mxu0 0.0
        %2123 = vmatpush2.msra.mxu0 0.0
        %2124 = vmatprep.mubr.f32.mxu0 0.0
        %2125 = vmatmul.mubr.f32.gmra.mxu0 %v2054
        %v2126 = vpop.f32.mrf.mxu0
        %v2127 = vadd.f32 0.0, %v2126
        %v2128 = vpop.f32.mrf.mxu0
        %v2129 = vadd.f32 0.0, %v2128
        %2130 = vdwg.mxu0
        %v2131 = vadd.f32 %v2039, %v2127
        %v2132 = vadd.f32 %v2040, %v2129
        %v2133 = vld [vmem:[%s1050] sm:$0xff]
        %2134 = vrot.lane.b32.xlu0 %v1492, 95
        %v2135 = vpop.permute.xlu0 %2134
        %2136 = vrot.lane.b32.xlu0 %v1509, 95
        %v2137 = vpop.permute.xlu0 %2136
        %2138 = vrot.lane.b32.xlu0 %v1493, 95
        %v2139 = vpop.permute.xlu0 %2138
        %v2140 = vsel %vm1058, %v2135, %v2137
        %v2141 = vsel %vm1058, %v2137, %v2139
        %v2143 = vsel %vm423, %v2133, 0
        %v2145 = vsel %vm427, %v2140, 0
        %v2147 = vsel %vm427, %v2141, 0
        %2149 = vmatprep.subr.mxu0 0.0
        %2150 = vmatpush1.msra.mxu0 0.0
        %2151 = vmatprep.subr.mxu0 0.0
        %2152 = vmatpush1.msra.mxu0 0.0
        %2153 = vmatprep.subr.mxu0 0.0
        %2154 = vmatpush1.msra.mxu0 0.0
        %2155 = vmatprep.subr.mxu0 0.0
        %2156 = vmatpush1.msra.mxu0 0.0
        %2157 = vmatprep.subr.mxu0 0.0
        %2158 = vmatpush1.msra.mxu0 0.0
        %2159 = vmatprep.subr.mxu0 0.0
        %2160 = vmatpush1.msra.mxu0 0.0
        %2161 = vmatprep.subr.mxu0 0.0
        %2162 = vmatpush1.msra.mxu0 0.0
        %2163 = vmatprep.subr.mxu0 0.0
        %2164 = vmatpush1.msra.mxu0 0.0
        %2165 = vmatprep.subr.mxu0 0.0
        %2166 = vmatpush1.msra.mxu0 0.0
        %2167 = vmatprep.subr.mxu0 0.0
        %2168 = vmatpush1.msra.mxu0 0.0
        %2169 = vmatprep.subr.mxu0 0.0
        %2170 = vmatpush1.msra.mxu0 0.0
        %2171 = vmatprep.subr.mxu0 0.0
        %2172 = vmatpush1.msra.mxu0 0.0
        %2173 = vmatprep.subr.mxu0 0.0
        %2174 = vmatpush1.msra.mxu0 0.0
        %2175 = vmatprep.subr.mxu0 0.0
        %2176 = vmatpush1.msra.mxu0 0.0
        %2177 = vmatprep.subr.mxu0 0.0
        %2178 = vmatpush1.msra.mxu0 0.0
        %2179 = vmatprep.subr.mxu0 %v2147
        %2180 = vmatpush1.msra.mxu0 %v2145
        %2181 = vmatprep.subr.mxu0 0.0
        %2182 = vmatpush2.msra.mxu0 0.0
        %2183 = vmatprep.subr.mxu0 0.0
        %2184 = vmatpush2.msra.mxu0 0.0
        %2185 = vmatprep.subr.mxu0 0.0
        %2186 = vmatpush2.msra.mxu0 0.0
        %2187 = vmatprep.subr.mxu0 0.0
        %2188 = vmatpush2.msra.mxu0 0.0
        %2189 = vmatprep.subr.mxu0 0.0
        %2190 = vmatpush2.msra.mxu0 0.0
        %2191 = vmatprep.subr.mxu0 0.0
        %2192 = vmatpush2.msra.mxu0 0.0
        %2193 = vmatprep.subr.mxu0 0.0
        %2194 = vmatpush2.msra.mxu0 0.0
        %2195 = vmatprep.subr.mxu0 0.0
        %2196 = vmatpush2.msra.mxu0 0.0
        %2197 = vmatprep.subr.mxu0 0.0
        %2198 = vmatpush2.msra.mxu0 0.0
        %2199 = vmatprep.subr.mxu0 0.0
        %2200 = vmatpush2.msra.mxu0 0.0
        %2201 = vmatprep.subr.mxu0 0.0
        %2202 = vmatpush2.msra.mxu0 0.0
        %2203 = vmatprep.subr.mxu0 0.0
        %2204 = vmatpush2.msra.mxu0 0.0
        %2205 = vmatprep.subr.mxu0 0.0
        %2206 = vmatpush2.msra.mxu0 0.0
        %2207 = vmatprep.subr.mxu0 0.0
        %2208 = vmatpush2.msra.mxu0 0.0
        %2209 = vmatprep.subr.mxu0 0.0
        %2210 = vmatpush2.msra.mxu0 0.0
        %2211 = vmatprep.subr.mxu0 0.0
        %2212 = vmatpush2.msra.mxu0 0.0
        %2213 = vmatprep.mubr.f32.mxu0 0.0
        %2214 = vmatmul.mubr.f32.gmra.mxu0 %v2143
        %v2215 = vpop.f32.mrf.mxu0
        %v2216 = vadd.f32 0.0, %v2215
        %v2217 = vpop.f32.mrf.mxu0
        %v2218 = vadd.f32 0.0, %v2217
        %2219 = vdwg.mxu0
        %v2220 = vadd.f32 %v2131, %v2216
        %v2221 = vadd.f32 %v2132, %v2218
        %v2222 = vld [vmem:[%s1141] sm:$0xff]
        %v2225 = vcombine.high %v1503, %v1503
        %2226 = vrot.lane.b32.xlu0 %v1503, 94
        %v2227 = vpop.permute.xlu0 %2226
        %2228 = vrot.lane.b32.xlu0 %v2225, 94
        %v2229 = vpop.permute.xlu0 %2228
        %2230 = vrot.lane.b32.xlu0 %v1504, 94
        %v2231 = vpop.permute.xlu0 %2230
        %v2232 = vsel %vm1152, %v2227, %v2229
        %v2233 = vsel %vm1152, %v2229, %v2231
        %v2235 = vsel %vm423, %v2222, 0
        %v2237 = vsel %vm427, %v2232, 0
        %v2239 = vsel %vm427, %v2233, 0
        %2241 = vmatprep.subr.mxu0 0.0
        %2242 = vmatpush1.msra.mxu0 0.0
        %2243 = vmatprep.subr.mxu0 0.0
        %2244 = vmatpush1.msra.mxu0 0.0
        %2245 = vmatprep.subr.mxu0 0.0
        %2246 = vmatpush1.msra.mxu0 0.0
        %2247 = vmatprep.subr.mxu0 0.0
        %2248 = vmatpush1.msra.mxu0 0.0
        %2249 = vmatprep.subr.mxu0 0.0
        %2250 = vmatpush1.msra.mxu0 0.0
        %2251 = vmatprep.subr.mxu0 0.0
        %2252 = vmatpush1.msra.mxu0 0.0
        %2253 = vmatprep.subr.mxu0 0.0
        %2254 = vmatpush1.msra.mxu0 0.0
        %2255 = vmatprep.subr.mxu0 0.0
        %2256 = vmatpush1.msra.mxu0 0.0
        %2257 = vmatprep.subr.mxu0 0.0
        %2258 = vmatpush1.msra.mxu0 0.0
        %2259 = vmatprep.subr.mxu0 0.0
        %2260 = vmatpush1.msra.mxu0 0.0
        %2261 = vmatprep.subr.mxu0 0.0
        %2262 = vmatpush1.msra.mxu0 0.0
        %2263 = vmatprep.subr.mxu0 0.0
        %2264 = vmatpush1.msra.mxu0 0.0
        %2265 = vmatprep.subr.mxu0 0.0
        %2266 = vmatpush1.msra.mxu0 0.0
        %2267 = vmatprep.subr.mxu0 0.0
        %2268 = vmatpush1.msra.mxu0 0.0
        %2269 = vmatprep.subr.mxu0 0.0
        %2270 = vmatpush1.msra.mxu0 0.0
        %2271 = vmatprep.subr.mxu0 %v2239
        %2272 = vmatpush1.msra.mxu0 %v2237
        %2273 = vmatprep.subr.mxu0 0.0
        %2274 = vmatpush2.msra.mxu0 0.0
        %2275 = vmatprep.subr.mxu0 0.0
        %2276 = vmatpush2.msra.mxu0 0.0
        %2277 = vmatprep.subr.mxu0 0.0
        %2278 = vmatpush2.msra.mxu0 0.0
        %2279 = vmatprep.subr.mxu0 0.0
        %2280 = vmatpush2.msra.mxu0 0.0
        %2281 = vmatprep.subr.mxu0 0.0
        %2282 = vmatpush2.msra.mxu0 0.0
        %2283 = vmatprep.subr.mxu0 0.0
        %2284 = vmatpush2.msra.mxu0 0.0
        %2285 = vmatprep.subr.mxu0 0.0
        %2286 = vmatpush2.msra.mxu0 0.0
        %2287 = vmatprep.subr.mxu0 0.0
        %2288 = vmatpush2.msra.mxu0 0.0
        %2289 = vmatprep.subr.mxu0 0.0
        %2290 = vmatpush2.msra.mxu0 0.0
        %2291 = vmatprep.subr.mxu0 0.0
        %2292 = vmatpush2.msra.mxu0 0.0
        %2293 = vmatprep.subr.mxu0 0.0
        %2294 = vmatpush2.msra.mxu0 0.0
        %2295 = vmatprep.subr.mxu0 0.0
        %2296 = vmatpush2.msra.mxu0 0.0
        %2297 = vmatprep.subr.mxu0 0.0
        %2298 = vmatpush2.msra.mxu0 0.0
        %2299 = vmatprep.subr.mxu0 0.0
        %2300 = vmatpush2.msra.mxu0 0.0
        %2301 = vmatprep.subr.mxu0 0.0
        %2302 = vmatpush2.msra.mxu0 0.0
        %2303 = vmatprep.subr.mxu0 0.0
        %2304 = vmatpush2.msra.mxu0 0.0
        %2305 = vmatprep.mubr.f32.mxu0 0.0
        %2306 = vmatmul.mubr.f32.gmra.mxu0 %v2235
        %v2307 = vpop.f32.mrf.mxu0
        %v2308 = vadd.f32 0.0, %v2307
        %v2309 = vpop.f32.mrf.mxu0
        %v2310 = vadd.f32 0.0, %v2309
        %2311 = vdwg.mxu0
        %v2312 = vadd.f32 %v2220, %v2308
        %v2313 = vadd.f32 %v2221, %v2310
        %v2314 = vld [vmem:[%s4] sm:$0xff]
        %2316 = vset.pattern.permute.xlu0 0
        %2317 = vperm.xlu0 %2316, %v2314
        %v2318 = vpop.permute.xlu0 %2317
        %v2320 = vadd.f32 %v2312, %v2318
        %v2321 = vadd.f32 %v2313, %v2318
        %v2322 = vmax.f32 %v2320, 0.0
        %v2323 = vmax.f32 %v2321, 0.0
        %v2324 = vadd.f32 %v2322, %v2323
        %2325 = vadd.xlane.f32.xlu0 %v2324
        %v2326 = vpop.xlane.xlu0 %2325
        %v2327 = vmul.f32 %v2326, %v1248
        %v2329 = vrot.slane %v2327, 4
        %v2331 = vadd.f32 %v2327, %v2329
        %v2332 = vld [vmem:[%s5] sm:$0xff]
        %v2333 = vld [vmem:[%s5 + $0x8] sm:$0xff]
        %v2334 = vld [vmem:[%s5 + $0x10] sm:$0xff]
        %v2335 = vld [vmem:[%s5 + $0x18] sm:$0xff]
        %v2336 = vld [vmem:[%s6] sm:$0xff]
        %v2337 = vld [vmem:[%s6 + $0x8] sm:$0xff]
        %v2338 = vld [vmem:[%s6 + $0x10] sm:$0xff]
        %v2339 = vld [vmem:[%s6 + $0x18] sm:$0xff]
        %v2341 = vsel %vm423, %v2332, 0
        %v2344 = vsel %vm423, %v2333, 0
        %v2347 = vsel %vm423, %v2334, 0
        %v2350 = vsel %vm423, %v2335, 0
        %v2353 = vsel %vm427, %v2331, 0
        %2355 = vmatprep.subr.mxu0 0.0
        %2356 = vmatpush1.msra.mxu0 0.0
        %2357 = vmatprep.subr.mxu0 0.0
        %2358 = vmatpush1.msra.mxu0 0.0
        %2359 = vmatprep.subr.mxu0 0.0
        %2360 = vmatpush1.msra.mxu0 0.0
        %2361 = vmatprep.subr.mxu0 0.0
        %2362 = vmatpush1.msra.mxu0 0.0
        %2363 = vmatprep.subr.mxu0 0.0
        %2364 = vmatpush1.msra.mxu0 0.0
        %2365 = vmatprep.subr.mxu0 0.0
        %2366 = vmatpush1.msra.mxu0 0.0
        %2367 = vmatprep.subr.mxu0 0.0
        %2368 = vmatpush1.msra.mxu0 0.0
        %2369 = vmatprep.subr.mxu0 0.0
        %2370 = vmatpush1.msra.mxu0 0.0
        %2371 = vmatprep.subr.mxu0 0.0
        %2372 = vmatpush1.msra.mxu0 0.0
        %2373 = vmatprep.subr.mxu0 0.0
        %2374 = vmatpush1.msra.mxu0 0.0
        %2375 = vmatprep.subr.mxu0 0.0
        %2376 = vmatpush1.msra.mxu0 0.0
        %2377 = vmatprep.subr.mxu0 0.0
        %2378 = vmatpush1.msra.mxu0 0.0
        %2379 = vmatprep.subr.mxu0 0.0
        %2380 = vmatpush1.msra.mxu0 0.0
        %2381 = vmatprep.subr.mxu0 0.0
        %2382 = vmatpush1.msra.mxu0 0.0
        %2383 = vmatprep.subr.mxu0 0.0
        %2384 = vmatpush1.msra.mxu0 0.0
        %2385 = vmatprep.subr.mxu0 0.0
        %2386 = vmatpush1.msra.mxu0 %v2353
        %2387 = vmatprep.subr.mxu0 0.0
        %2388 = vmatpush2.msra.mxu0 0.0
        %2389 = vmatprep.subr.mxu0 0.0
        %2390 = vmatpush2.msra.mxu0 0.0
        %2391 = vmatprep.subr.mxu0 0.0
        %2392 = vmatpush2.msra.mxu0 0.0
        %2393 = vmatprep.subr.mxu0 0.0
        %2394 = vmatpush2.msra.mxu0 0.0
        %2395 = vmatprep.subr.mxu0 0.0
        %2396 = vmatpush2.msra.mxu0 0.0
        %2397 = vmatprep.subr.mxu0 0.0
        %2398 = vmatpush2.msra.mxu0 0.0
        %2399 = vmatprep.subr.mxu0 0.0
        %2400 = vmatpush2.msra.mxu0 0.0
        %2401 = vmatprep.subr.mxu0 0.0
        %2402 = vmatpush2.msra.mxu0 0.0
        %2403 = vmatprep.subr.mxu0 0.0
        %2404 = vmatpush2.msra.mxu0 0.0
        %2405 = vmatprep.subr.mxu0 0.0
        %2406 = vmatpush2.msra.mxu0 0.0
        %2407 = vmatprep.subr.mxu0 0.0
        %2408 = vmatpush2.msra.mxu0 0.0
        %2409 = vmatprep.subr.mxu0 0.0
        %2410 = vmatpush2.msra.mxu0 0.0
        %2411 = vmatprep.subr.mxu0 0.0
        %2412 = vmatpush2.msra.mxu0 0.0
        %2413 = vmatprep.subr.mxu0 0.0
        %2414 = vmatpush2.msra.mxu0 0.0
        %2415 = vmatprep.subr.mxu0 0.0
        %2416 = vmatpush2.msra.mxu0 0.0
        %2417 = vmatprep.subr.mxu0 0.0
        %2418 = vmatpush2.msra.mxu0 0.0
        %2419 = vmatprep.mubr.f32.mxu0 0.0
        %2420 = vmatmul.mubr.f32.gmra.mxu0 %v2341
        %v2421 = vpop.f32.mrf.mxu0
        %v2422 = vadd.f32 %v2336, %v2421
        %v2423 = vpop.f32.mrf.mxu0
        %2424 = vmatprep.mubr.f32.mxu0 0.0
        %2425 = vmatmul.mubr.f32.gmra.mxu0 %v2344
        %v2426 = vpop.f32.mrf.mxu0
        %v2427 = vadd.f32 %v2337, %v2426
        %v2428 = vpop.f32.mrf.mxu0
        %2429 = vmatprep.mubr.f32.mxu0 0.0
        %2430 = vmatmul.mubr.f32.gmra.mxu0 %v2347
        %v2431 = vpop.f32.mrf.mxu0
        %v2432 = vadd.f32 %v2338, %v2431
        %v2433 = vpop.f32.mrf.mxu0
        %2434 = vmatprep.mubr.f32.mxu0 0.0
        %2435 = vmatmul.mubr.f32.gmra.mxu0 %v2350
        %v2436 = vpop.f32.mrf.mxu0
        %v2437 = vadd.f32 %v2339, %v2436
        %v2438 = vpop.f32.mrf.mxu0
        %2439 = vdwg.mxu0
        %v2440 = vmax.f32 %v2422, 0.0
        %v2441 = vmax.f32 %v2427, 0.0
        %v2442 = vmax.f32 %v2432, 0.0
        %v2443 = vmax.f32 %v2437, 0.0
        %v2444 = vld [vmem:[%s7] sm:$0xff]
        %v2445 = vld [vmem:[%s8] sm:$0xff]
        %v2447 = vsel %vm393, %v2444, 0
        %2449 = vmatprep.subr.mxu0 0.0
        %2450 = vmatpush1.msra.mxu0 0.0
        %2451 = vmatprep.subr.mxu0 0.0
        %2452 = vmatpush1.msra.mxu0 0.0
        %2453 = vmatprep.subr.mxu0 0.0
        %2454 = vmatpush1.msra.mxu0 0.0
        %2455 = vmatprep.subr.mxu0 0.0
        %2456 = vmatpush1.msra.mxu0 0.0
        %2457 = vmatprep.subr.mxu0 0.0
        %2458 = vmatpush1.msra.mxu0 0.0
        %2459 = vmatprep.subr.mxu0 0.0
        %2460 = vmatpush1.msra.mxu0 0.0
        %2461 = vmatprep.subr.mxu0 0.0
        %2462 = vmatpush1.msra.mxu0 0.0
        %2463 = vmatprep.subr.mxu0 0.0
        %2464 = vmatpush1.msra.mxu0 0.0
        %2465 = vmatprep.subr.mxu0 0.0
        %2466 = vmatpush1.msra.mxu0 0.0
        %2467 = vmatprep.subr.mxu0 0.0
        %2468 = vmatpush1.msra.mxu0 0.0
        %2469 = vmatprep.subr.mxu0 0.0
        %2470 = vmatpush1.msra.mxu0 0.0
        %2471 = vmatprep.subr.mxu0 0.0
        %2472 = vmatpush1.msra.mxu0 0.0
        %2473 = vmatprep.subr.mxu0 0.0
        %2474 = vmatpush1.msra.mxu0 %v2443
        %2475 = vmatprep.subr.mxu0 0.0
        %2476 = vmatpush1.msra.mxu0 %v2442
        %2477 = vmatprep.subr.mxu0 0.0
        %2478 = vmatpush1.msra.mxu0 %v2441
        %2479 = vmatprep.subr.mxu0 0.0
        %2480 = vmatpush1.msra.mxu0 %v2440
        %2481 = vmatprep.subr.mxu0 0.0
        %2482 = vmatpush2.msra.mxu0 0.0
        %2483 = vmatprep.subr.mxu0 0.0
        %2484 = vmatpush2.msra.mxu0 0.0
        %2485 = vmatprep.subr.mxu0 0.0
        %2486 = vmatpush2.msra.mxu0 0.0
        %2487 = vmatprep.subr.mxu0 0.0
        %2488 = vmatpush2.msra.mxu0 0.0
        %2489 = vmatprep.subr.mxu0 0.0
        %2490 = vmatpush2.msra.mxu0 0.0
        %2491 = vmatprep.subr.mxu0 0.0
        %2492 = vmatpush2.msra.mxu0 0.0
        %2493 = vmatprep.subr.mxu0 0.0
        %2494 = vmatpush2.msra.mxu0 0.0
        %2495 = vmatprep.subr.mxu0 0.0
        %2496 = vmatpush2.msra.mxu0 0.0
        %2497 = vmatprep.subr.mxu0 0.0
        %2498 = vmatpush2.msra.mxu0 0.0
        %2499 = vmatprep.subr.mxu0 0.0
        %2500 = vmatpush2.msra.mxu0 0.0
        %2501 = vmatprep.subr.mxu0 0.0
        %2502 = vmatpush2.msra.mxu0 0.0
        %2503 = vmatprep.subr.mxu0 0.0
        %2504 = vmatpush2.msra.mxu0 0.0
        %2505 = vmatprep.subr.mxu0 0.0
        %2506 = vmatpush2.msra.mxu0 0.0
        %2507 = vmatprep.subr.mxu0 0.0
        %2508 = vmatpush2.msra.mxu0 0.0
        %2509 = vmatprep.subr.mxu0 0.0
        %2510 = vmatpush2.msra.mxu0 0.0
        %2511 = vmatprep.subr.mxu0 0.0
        %2512 = vmatpush2.msra.mxu0 0.0
        %2513 = vmatprep.mubr.f32.mxu0 0.0
        %2514 = vmatmul.mubr.f32.gmra.mxu0 %v2447
        %v2515 = vpop.f32.mrf.mxu0
        %v2516 = vadd.f32 %v2445, %v2515
        %v2517 = vpop.f32.mrf.mxu0
        %2518 = vdwg.mxu0
        %v2520 = vrot.slane %v2516, 4
        %v2522 = vmax.f32 %v2516, %v2520
        %v2523 = vsub.f32 %v2516, %v2522
        %v2524 = vmul.f32 %v2523, 1.442695
        %v2525 = vpow.pop %v2524
        %v2527 = vrot.slane %v2522, 4
        %v2529 = vsub.f32 %v2516, %v2527
        %v2530 = vmul.f32 %v2529, 1.442695
        %v2531 = vpow.pop %v2530
        %v2533 = vrot.slane %v2531, 4
        %v2535 = vadd.f32 %v2525, %v2533
        %v2536 = vrcp.pop %v2535
        %v2537 = vmul.f32 %v2525, %v2536
        %2539 = vset.pattern.permute.xlu0 0
        %2540 = vperm.xlu0 %2539, %v2537
        %v2541 = vpop.permute.xlu0 %2540
        %v2543 = vmul.f32 %v2541, %v2322
        %v2544 = vmul.f32 %v2541, %v2323
        %v2546 = vrot.slane %v2536, 4
        %v2548 = vmul.f32 %v2531, %v2546
        %2550 = vset.pattern.permute.xlu0 0
        %2551 = vperm.xlu0 %2550, %v2548
        %v2552 = vpop.permute.xlu0 %2551
        %v2554 = vmul.f32 %v2552, %v2322
        %v2555 = vmul.f32 %v2552, %v2323
        %v2558 = vrot.slane %v2554, 4
        %v2559 = vrot.slane %v2555, 4
        %v2562 = vadd.f32 %v2543, %v2558
        %v2563 = vadd.f32 %v2544, %v2559
        %v2566 = vcombine.low %v2562, %v2563
        %s2568 = scalar_lea.vmem %s328, 8 [#allocation2]
        %2569 = vst [vmem:[%s2568] sm:$0xff] %v2566
        %s2570 = sand.u32 %s225, 1
        %s2571 = scalar_lea.sflag [#allocation3], %s2570
        %s2572 = sand.u32 %s225, 1
        %s2573 = smul.addr %s2572, 16
        %s2574 = scalar_lea.vmem [#allocation2], %s2573
        // Predicated region
        $region57: #{tpu_custom_call.1} parent=55 // pred_check
          %p2575 = pneg %p235
        $region58: #{tpu_custom_call.1} parent=55 // pred_check_branch
          %2577 = sbr.rel (%p2575) target = $region60
        $region59: #{tpu_custom_call.1} parent=55 // pred_region
          %s2578 = smul.u32 2, %s23
          %s2580 = ssub.s32 256, 256
          %2581 = vsyncadd %s2571, %s2580
          %s2582 = smul.addr %s2578, 2
          %s2583 = smul.addr %s2582, 64
          %s2584 = scalar_lea.hbm %s9, %s2583
          %s2585 = sshll.u32 %s2574, 4
          %s2586 = int_to_ptr.vmem [resolvable:$true] %s2585
          %2591 = dma.vmem_to_hbm [thread:$0]  %s2586, 256, %s2584, %s2571, 128, 128, 8
        $region60: #{tpu_custom_call.1} parent=55 // pred_fallthru
          _
      $region56: #{tpu_custom_call.1} parent=5 // pred_fallthru
        _
      %p2592 = scmp.le.s32.totalorder 2, %s18
      // Predicated region
      $region61: #{tpu_custom_call.1} parent=5 // pred_check
        %p2593 = pneg %p2592
      $region62: #{tpu_custom_call.1} parent=5 // pred_check_branch
        %2595 = sbr.rel (%p2593) target = $region64
      $region63: #{tpu_custom_call.1} parent=5 // pred_region
        %s2596 = ssub.s32 %s18, 2
        // Predicated region
        $region65: #{tpu_custom_call.1} parent=63 // pred_check
          %p2597 = pneg %p241
        $region66: #{tpu_custom_call.1} parent=63 // pred_check_branch
          %2599 = sbr.rel (%p2597) target = $region68
        $region67: #{tpu_custom_call.1} parent=63 // pred_region
          %s2600 = sand.u32 %s226, 1
          %s2601 = scalar_lea.sflag [#allocation3], %s2600
          %s2602 = sand.u32 %s226, 1
          %s2603 = smul.addr %s2602, 16
          %s2604 = scalar_lea.vmem [#allocation2], %s2603
          %2605 = dma.done %s2601, 256
        $region68: #{tpu_custom_call.1} parent=63 // pred_fallthru
          _
      $region64: #{tpu_custom_call.1} parent=5 // pred_fallthru
        _
    $region6: #{tpu_custom_call.1} parent=1 // loop_footer
      %s22 = sadd.s32 1, %s18
    $region7: #{tpu_custom_call.1} parent=1 // loop_footer_branch
      %17 = sbr.rel target = $region3
    $region8: #{tpu_custom_call.1} parent=1 // loop_exit
      _
    %2606 = vsyncpa [#allocation3], 1
    %s2607 = scalar_lea.sflag [#allocation3], 1
    %2608 = vsyncpa %s2607, 1

</llo_original>
